<compile_context>
chip_gen: v7x
topology: tpu7x:2x2x1
jax: 0.10.0
libtpu: 0.0.40
codegen_flags: <defaults>
</compile_context>

<pallas_src>
import jax
import jax.numpy as jnp
from jax.experimental import pallas as pl
from jax.experimental.pallas import tpu as pltpu


# ---------------------------------------------------------------------------
# VMEM budgeting / tile-size selection
# ---------------------------------------------------------------------------
def _rup(x, m):
    return (x + m - 1) // m * m


def _vmem_info():
    """(budget_for_live_buffers, vmem_limit_bytes), generation-aware."""
    cap = 64 * 1024 * 1024                      # conservative fallback (v7x TC)
    try:
        cap = int(pltpu.get_tpu_info().vmem_capacity_bytes)
    except Exception:
        pass
    budget = int(cap * 0.55)                    # what the TH estimator may use
    limit = min(int(cap * 0.85), cap - (4 << 20))
    return budget, limit


def _pick_tile_rows(H, n_batch, bytes_of_th, *, even, budget):
    """Largest divisor of H whose estimated VMEM footprint fits `budget`.

    Prefers >= 2 row-strips per image when the batch is small so a 2-TC chip
    (v7x) has balanced work.  TH always divides H (no dropped rows)."""
    step = 2 if even else 1
    divs = [d for d in range(step, H + 1, step) if H % d == 0]
    assert divs, f"no valid tile height for H={H} (even={even})"
    fit = [d for d in divs if bytes_of_th(d) <= budget] or divs[:1]
    min_strips = 1 if n_batch >= 4 else 2
    pref = [d for d in fit if H // d >= min_strips]
    return max(pref) if pref else max(fit)


def _conv12_bytes(W):
    """Rough per-step VMEM bytes of the fused conv1+conv2+pool kernel."""
    W16, Wp16, Wh16 = _rup(W, 16), _rup(W + 2, 16), _rup(max(W // 2, 1), 16)

    def f(TH):
        R = TH + 2
        b = 0
        b += 2 * TH * W16 * 128 * 2          # input strip (C=3 -> 128 lanes), 2 bufs
        b += 8 * W16 * 128 * 2               # 2-row halos, 2 specs, 2 bufs
        b += (TH + 4) * W16 * 128 * 2        # xs scratch
        b += (TH + 4) * Wp16 * 128 * 2       # column-padded image value
        b += R * W16 * 128 * 2               # cols1 (27 -> 128 lanes)
        b += R * W16 * 128 * 4               # conv1 matmul out f32 (64 -> 128)
        b += R * W16 * 128 * 2               # ms scratch (64 -> 128 lanes)
        b += R * Wp16 * 128 * 2              # column-padded mid value
        b += R * W16 * 256 * 2               # cols2 (192 -> 256 lanes)
        b += R * W16 * 256 * 4               # N-fused matmul result q (f32)
        b += TH * W16 * 128 * 4              # conv2 pre-pool acc (f32)
        b += 2 * (TH // 2) * Wh16 * 128 * 2  # pooled output, 2 bufs
        return int(b * 1.4)                  # headroom for compiler temporaries

    return f


def _conv_bytes(W, Cin, Cout, out_dtype):
    """Rough per-step VMEM bytes of the plain conv3x3+ReLU kernel."""
    W16, Wp16 = _rup(W, 16), _rup(W + 2, 16)
    cin_l = _rup(Cin, 128)
    k_l = _rup(3 * Cin, 128)
    cout_l = _rup(Cout, 128)
    out_b = jnp.dtype(out_dtype).itemsize

    def f(TH):
        R = TH + 2
        b = 0
        b += 2 * TH * W16 * cin_l * 2        # input strip, 2 bufs
        b += 4 * W16 * cin_l * 2             # 1-row halos
        b += R * W16 * cin_l * 2             # xs scratch
        b += R * Wp16 * cin_l * 2            # column-padded value
        b += R * W16 * k_l * 2               # K-fused cols
        b += TH * W16 * cout_l * 4           # f32 accumulator
        b += 2 * TH * W16 * cout_l * out_b   # output, 2 bufs
        return int(b * 1.4)

    return f


# ---------------------------------------------------------------------------
# Fused conv1(3->64) + ReLU + conv2(64->64) + ReLU + 2x2 maxpool
# ---------------------------------------------------------------------------
def _make_conv12_kernel(W, TH):
    R = TH + 2  # conv1 output rows needed (strip + 1-row halo for conv2)

    def kernel(x_ref, top_ref, bot_ref, w1_ref, b1_ref, w2_ref, b2_ref,
               o_ref, xs_ref, ms_ref):
        t = pl.program_id(1)
        n_t = pl.num_programs(1)

        # ---- stage the row-extended normalized image into scratch ----------
        # xs_ref rows 0..TH+3  <->  image rows  t*TH-2 .. t*TH+TH+1
        xs_ref[2:TH + 2] = x_ref[0].astype(jnp.bfloat16)
        z2 = jnp.zeros((2, W, 3), jnp.bfloat16)

        @pl.when(t == 0)
        def _():
            xs_ref[0:2] = z2                       # SAME zero pad (top edge)

        @pl.when(t > 0)
        def _():
            xs_ref[0:2] = top_ref[0].astype(jnp.bfloat16)

        @pl.when(t == n_t - 1)
        def _():
            xs_ref[TH + 2:TH + 4] = z2             # SAME zero pad (bottom edge)

        @pl.when(t < n_t - 1)
        def _():
            xs_ref[TH + 2:TH + 4] = bot_ref[0].astype(jnp.bfloat16)

        # ---- conv1: single K=27 matmul over all 9 taps ----------------------
        s = xs_ref[...]                                         # (TH+4, W, 3)
        zc = jnp.zeros((TH + 4, 1, 3), jnp.bfloat16)
        sp = jnp.concatenate([zc, s, zc], axis=1)               # (TH+4, W+2, 3)
        cols1 = jnp.concatenate(
            [sp[ky:ky + R, kx:kx + W, :]
             for ky in range(3) for kx in range(3)], axis=-1)   # (R, W, 27)
        mid = jnp.dot(cols1.reshape(R * W, 27), w1_ref[...],
                      preferred_element_type=jnp.float32)
        mid = jnp.maximum(mid + b1_ref[0], 0.0).reshape(R, W, 64)
        ms_ref[...] = mid.astype(jnp.bfloat16)

        # conv1-output rows outside the image are conv2's zero padding rows.
        zr = jnp.zeros((1, W, 64), jnp.bfloat16)

        @pl.when(t == 0)
        def _():
            ms_ref[0:1] = zr

        @pl.when(t == n_t - 1)
        def _():
            ms_ref[R - 1:R] = zr

        # ---- conv2: N-fused single matmul (K=192, N=192) --------------------
        m = ms_ref[...]                                         # (R, W, 64)
        zc2 = jnp.zeros((R, 1, 64), jnp.bfloat16)
        mp = jnp.concatenate([zc2, m, zc2], axis=1)             # (R, W+2, 64)
        cols2 = jnp.concatenate(
            [mp[:, 0:W, :], mp[:, 1:W + 1, :], mp[:, 2:W + 2, :]],
            axis=-1)                                            # (R, W, 192)
        q = jnp.dot(cols2.reshape(R * W, 192), w2_ref[...],
                    preferred_element_type=jnp.float32).reshape(R, W, 192)
        # out[y] = q[y, :, 0:64] + q[y+1, :, 64:128] + q[y+2, :, 128:192]
        acc = (q[0:TH, :, 0:64] + q[1:TH + 1, :, 64:128]
               + q[2:TH + 2, :, 128:192])                       # (TH, W, 64)
        acc = jnp.maximum(acc + b2_ref[0], 0.0)

        # ---- fused 2x2 maxpool (stride 2) ------------------------------------
        y = acc.reshape(TH // 2, 2, W, 64)
        y = jnp.maximum(y[:, 0], y[:, 1])
        y = y.reshape(TH // 2, W // 2, 2, 64)
        y = jnp.maximum(y[:, :, 0], y[:, :, 1])
        o_ref[0] = y.astype(o_ref.dtype)

    return kernel


def conv12_pool(x, w1, b1, w2, b2, *, out_dtype=jnp.bfloat16):
    """Fused conv3x3(3->64)+ReLU -> conv3x3(64->64)+ReLU -> maxpool2x2(s=2).

    x: (N, H, W, 3) NHWC, already normalized & bf16 (so the SAME zero padding
    applies to the normalized tensor, as in the reference)."""
    N, H, W, _ = x.shape
    assert H % 2 == 0 and W % 2 == 0, "2x2 pooling requires even H and W"
    budget, limit = _vmem_info()
    TH = _pick_tile_rows(H, N, _conv12_bytes(W), even=True, budget=budget)
    assert H % TH == 0 and TH % 2 == 0
    T = H // TH
    THh = TH // 2

    w1k = jnp.asarray(w1, jnp.float32).reshape(27, 64).astype(jnp.bfloat16)
    # N-fused conv2 weights: column block ky holds W2[ky], rows ordered (kx, cin).
    w2n = jnp.concatenate(
        [jnp.asarray(w2, jnp.float32)[ky].reshape(3 * 64, 64) for ky in range(3)],
        axis=1).astype(jnp.bfloat16)                            # (192, 192)
    b1r = jnp.asarray(b1, jnp.float32).reshape(1, 64)
    b2r = jnp.asarray(b2, jnp.float32).reshape(1, 64)

    return pl.pallas_call(
        _make_conv12_kernel(W, TH),
        out_shape=jax.ShapeDtypeStruct((N, H // 2, W // 2, 64), out_dtype),
        grid=(N, T),
        in_specs=[
            pl.BlockSpec((1, TH, W, 3), lambda n, t: (n, t, 0, 0)),
            # 2-row halos above/below the strip (clamped; zeroed in-kernel at edges)
            pl.BlockSpec((1, 2, W, 3),
                         lambda n, t: (n, jnp.maximum(t * THh - 1, 0), 0, 0)),
            pl.BlockSpec((1, 2, W, 3),
                         lambda n, t: (n, jnp.minimum((t + 1) * THh, H // 2 - 1),
                                       0, 0)),
            pl.BlockSpec((27, 64), lambda n, t: (0, 0)),
            pl.BlockSpec((1, 64), lambda n, t: (0, 0)),
            pl.BlockSpec((192, 192), lambda n, t: (0, 0)),
            pl.BlockSpec((1, 64), lambda n, t: (0, 0)),
        ],
        out_specs=pl.BlockSpec((1, THh, W // 2, 64), lambda n, t: (n, t, 0, 0)),
        scratch_shapes=[pltpu.VMEM((TH + 4, W, 3), jnp.bfloat16),   # image slab
                        pltpu.VMEM((TH + 2, W, 64), jnp.bfloat16)], # conv1 out
        compiler_params=pltpu.CompilerParams(
            dimension_semantics=("parallel", "parallel"),
            vmem_limit_bytes=limit),
    )(x, x, x, w1k, b1r, w2n, b2r)


# ---------------------------------------------------------------------------
# Plain conv3x3 (SAME) + bias + ReLU  (conv3, conv4) — K-fused 3 matmuls
# ---------------------------------------------------------------------------
def _make_conv_kernel(W, TH, Cin, Cout):
    def kernel(x_ref, top_ref, bot_ref, w_ref, b_ref, o_ref, xs_ref):
        t = pl.program_id(1)
        n_t = pl.num_programs(1)

        # Row-extended input slab in scratch (rows t*TH-1 .. t*TH+TH).
        xs_ref[1:TH + 1] = x_ref[0].astype(jnp.bfloat16)
        z1 = jnp.zeros((1, W, Cin), jnp.bfloat16)

        @pl.when(t == 0)
        def _():
            xs_ref[0:1] = z1

        @pl.when(t > 0)
        def _():
            xs_ref[0:1] = top_ref[0].astype(jnp.bfloat16)

        @pl.when(t == n_t - 1)
        def _():
            xs_ref[TH + 1:TH + 2] = z1

        @pl.when(t < n_t - 1)
        def _():
            xs_ref[TH + 1:TH + 2] = bot_ref[0].astype(jnp.bfloat16)

        s = xs_ref[...]                                        # (TH+2, W, Cin)
        zc = jnp.zeros((TH + 2, 1, Cin), jnp.bfloat16)
        sp = jnp.concatenate([zc, s, zc], axis=1)              # (TH+2, W+2, Cin)
        # K-fuse the 3 kx taps (K = 3*Cin); on v5e this concat vs. 9 direct
        # K=Cin matmuls should be re-checked from a bundle dump.
        cols = jnp.concatenate(
            [sp[:, 0:W, :], sp[:, 1:W + 1, :], sp[:, 2:W + 2, :]],
            axis=-1)                                           # (TH+2, W, 3*Cin)

        acc = jnp.zeros((TH * W, Cout), jnp.float32)
        for ky in range(3):                                    # 3 matmuls, N=Cout
            acc += jnp.dot(cols[ky:ky + TH].reshape(TH * W, 3 * Cin),
                           w_ref[ky], preferred_element_type=jnp.float32)
        acc = jnp.maximum(acc + b_ref[0], 0.0)
        o_ref[0] = acc.reshape(TH, W, Cout).astype(o_ref.dtype)

    return kernel


def conv3x3_relu(x, w, b, *, out_dtype=jnp.bfloat16):
    """y = relu(conv3x3_SAME(x, w) + b).  x: (N,H,W,Cin) NHWC, w: HWIO."""
    N, H, W, Cin = x.shape
    Cout = w.shape[-1]
    budget, limit = _vmem_info()
    TH = _pick_tile_rows(H, N, _conv_bytes(W, Cin, Cout, out_dtype),
                         even=False, budget=budget)
    assert H % TH == 0
    T = H // TH

    w_k = jnp.asarray(w, jnp.float32).reshape(3, 3 * Cin, Cout).astype(jnp.bfloat16)
    b_r = jnp.asarray(b, jnp.float32).reshape(1, Cout)

    return pl.pallas_call(
        _make_conv_kernel(W, TH, Cin, Cout),
        out_shape=jax.ShapeDtypeStruct((N, H, W, Cout), out_dtype),
        grid=(N, T),
        in_specs=[
            pl.BlockSpec((1, TH, W, Cin), lambda n, t: (n, t, 0, 0)),
            pl.BlockSpec((1, 1, W, Cin),
                         lambda n, t: (n, jnp.maximum(t * TH - 1, 0), 0, 0)),
            pl.BlockSpec((1, 1, W, Cin),
                         lambda n, t: (n, jnp.minimum((t + 1) * TH, H - 1), 0, 0)),
            pl.BlockSpec((3, 3 * Cin, Cout), lambda n, t: (0, 0, 0)),
            pl.BlockSpec((1, Cout), lambda n, t: (0, 0)),
        ],
        out_specs=pl.BlockSpec((1, TH, W, Cout), lambda n, t: (n, t, 0, 0)),
        scratch_shapes=[pltpu.VMEM((TH + 2, W, Cin), jnp.bfloat16)],
        compiler_params=pltpu.CompilerParams(
            dimension_semantics=("parallel", "parallel"),
            vmem_limit_bytes=limit),
    )(x, x, x, w_k, b_r)


# ---------------------------------------------------------------------------
# Full GlobalFeatureExtractor forward (Pallas)
# ---------------------------------------------------------------------------
def global_feature_extractor(images_nchw, params):
    mean = jnp.array([0.485 - 0.5, 0.456 - 0.5, 0.406 - 0.5], jnp.float32)
    std = jnp.array([0.229, 0.224, 0.225], jnp.float32)
    # NCHW -> NHWC, normalize in f32, feed the kernels bf16 (halves conv1's HBM
    # read and removes the per-step affine from the kernel).  SAME zero padding
    # inside the kernels therefore pads the *normalized* tensor (as in torch).
    x = jnp.transpose(images_nchw, (0, 2, 3, 1)).astype(jnp.float32)
    x = ((x * 0.5 - mean) / std).astype(jnp.bfloat16)
    x = conv12_pool(x, params["w1"], params["b1"], params["w2"], params["b2"])
    x = conv3x3_relu(x, params["w3"], params["b3"])
    x = conv3x3_relu(x, params["w4"], params["b4"], out_dtype=jnp.float32)
    # TODO(synk): the final NHWC->NCHW f32 transpose stays in the XLA wrapper
    # to keep the PyTorch interface; it could be folded into the conv4 kernel
    # (or emitted in bf16) to save an HBM pass.
    return jnp.transpose(x, (0, 3, 1, 2))                      # NHWC -> NCHW


# ---------------------------------------------------------------------------
# Pure-JAX f32 reference (correctness check)
# ---------------------------------------------------------------------------
def _ref_forward(images_nchw, params):
    mean = jnp.array([0.485 - 0.5, 0.456 - 0.5, 0.406 - 0.5],
                     jnp.float32).reshape(1, 3, 1, 1)
    std = jnp.array([0.229, 0.224, 0.225], jnp.float32).reshape(1, 3, 1, 1)
    x = (images_nchw * 0.5 - mean) / std
    x = jnp.transpose(x, (0, 2, 3, 1))                         # NHWC

    def conv(x, w, b):
        y = jax.lax.conv_general_dilated(
            x, w, window_strides=(1, 1), padding="SAME",
            dimension_numbers=("NHWC", "HWIO", "NHWC"))
        return jax.nn.relu(y + b.reshape(1, 1, 1, -1))

    x = conv(x, params["w1"], params["b1"])
    x = conv(x, params["w2"], params["b2"])
    N, H, W, C = x.shape
    x = jnp.max(x.reshape(N, H // 2, 2, W // 2, 2, C), axis=(2, 4))
    x = conv(x, params["w3"], params["b3"])
    x = conv(x, params["w4"], params["b4"])
    return jnp.transpose(x, (0, 3, 1, 2))


# ---------------------------------------------------------------------------
def _init_params(key):
    # Deterministic synthetic weights (VGG16 conv1_1..conv2_2 shapes), HWIO.
    shapes = {
        "w1": (3, 3, 3, 64),    "b1": (64,),
        "w2": (3, 3, 64, 64),   "b2": (64,),
        "w3": (3, 3, 64, 128),  "b3": (128,),
        "w4": (3, 3, 128, 128), "b4": (128,),
    }
    params = {}
    keys = jax.random.split(key, len(shapes))
    for k, (name, shape) in zip(keys, sorted(shapes.items())):
        if name.startswith("w"):
            fan_in = shape[0] * shape[1] * shape[2]
            params[name] = (jax.random.normal(k, shape, jnp.float32)
                            * (1.0 / jnp.sqrt(fan_in)))
        else:
            params[name] = jax.random.normal(k, shape, jnp.float32) * 0.01
    return params


if __name__ == "__main__":
    key = jax.random.PRNGKey(0)
    k_img, k_par = jax.random.split(key)
    # VGG front-end requires 3 input channels; small 16x16 spatial, batch=2.
    images = jax.random.normal(k_img, (2, 3, 16, 16), jnp.float32)
    params = _init_params(k_par)

    out = jax.block_until_ready(jax.jit(global_feature_extractor)(images, params))
    assert out.shape == (2, 128, 8, 8), out.shape

    ref = jax.block_until_ready(jax.jit(_ref_forward)(images, params))
    # bf16 activations/weights with f32 accumulation vs an f32 reference.
    assert jnp.allclose(out, ref, rtol=5e-2, atol=5e-2), (
        float(jnp.max(jnp.abs(out - ref))))

    print("KERNEL_OK")
</pallas_src>

<mosaic_0001>
module attributes {stable_mosaic.version = 11 : i64} {
  func.func @kernel(%arg0: i32, %arg1: i32, %arg2: memref<1x8x16x3xbf16, #tpu.memory_space<vmem>>, %arg3: memref<1x2x16x3xbf16, #tpu.memory_space<vmem>>, %arg4: memref<1x2x16x3xbf16, #tpu.memory_space<vmem>>, %arg5: memref<27x64xbf16, #tpu.memory_space<vmem>>, %arg6: memref<1x64xf32, #tpu.memory_space<vmem>>, %arg7: memref<192x192xbf16, #tpu.memory_space<vmem>>, %arg8: memref<1x64xf32, #tpu.memory_space<vmem>>, %arg9: memref<1x4x8x64xbf16, #tpu.memory_space<vmem>>, %arg10: memref<12x16x3xbf16, #tpu.memory_space<vmem>>, %arg11: memref<10x16x64xbf16, #tpu.memory_space<vmem>>) attributes {dimension_semantics = [#tpu.dimension_semantics<parallel>, #tpu.dimension_semantics<parallel>], iteration_bounds = array<i64: 2, 2>, scalar_prefetch = 0 : i64, scratch_operands = 2 : i64, tpu.core_type = #tpu.core_type<tc>, window_params = [{transform_indices = @transform_0, window_bounds = array<i64: 1, 8, 16, 3>}, {transform_indices = @transform_1, window_bounds = array<i64: 1, 2, 16, 3>}, {transform_indices = @transform_2, window_bounds = array<i64: 1, 2, 16, 3>}, {pipeline_mode = #tpu.pipeline_mode<synchronous>, transform_indices = @transform_3, window_bounds = array<i64: 27, 64>}, {pipeline_mode = #tpu.pipeline_mode<synchronous>, transform_indices = @transform_4, window_bounds = array<i64: 1, 64>}, {pipeline_mode = #tpu.pipeline_mode<synchronous>, transform_indices = @transform_5, window_bounds = array<i64: 192, 192>}, {pipeline_mode = #tpu.pipeline_mode<synchronous>, transform_indices = @transform_6, window_bounds = array<i64: 1, 64>}, {transform_indices = @transform_7, window_bounds = array<i64: 1, 4, 8, 64>}]} {
    %c0 = arith.constant 0 : index
    %c0_0 = arith.constant 0 : index
    %c0_1 = arith.constant 0 : index
    %c0_2 = arith.constant 0 : index
    %0 = vector.load %arg2[%c0, %c0_0, %c0_1, %c0_2] : memref<1x8x16x3xbf16, #tpu.memory_space<vmem>>, vector<1x8x16x3xbf16>
    %1 = vector.shape_cast %0 : vector<1x8x16x3xbf16> to vector<8x16x3xbf16>
    %c2 = arith.constant 2 : index
    %c0_3 = arith.constant 0 : index
    %c0_4 = arith.constant 0 : index
    %2 = vector.load %arg10[%c2, %c0_3, %c0_4] : memref<12x16x3xbf16, #tpu.memory_space<vmem>>, vector<8x16x3xbf16>
    tpu.vector_store %arg10[%c2, %c0_3, %c0_4], %1 {strides = array<i32>} : memref<12x16x3xbf16, #tpu.memory_space<vmem>>, vector<8x16x3xbf16>,
    %cst = arith.constant 0.000000e+00 : bf16
    %3 = vector.broadcast %cst : bf16 to vector<2x16x3xbf16>
    %c0_i32 = arith.constant 0 : i32
    %4 = arith.cmpi eq, %arg1, %c0_i32 : i32
    %5 = arith.extui %4 : i1 to i32
    %c0_i32_5 = arith.constant 0 : i32
    %6 = arith.cmpi ne, %5, %c0_i32_5 : i32
    scf.if %6 {
      %c0_43 = arith.constant 0 : index
      %c0_44 = arith.constant 0 : index
      %c0_45 = arith.constant 0 : index
      %88 = vector.load %arg10[%c0_43, %c0_44, %c0_45] : memref<12x16x3xbf16, #tpu.memory_space<vmem>>, vector<2x16x3xbf16>
      tpu.vector_store %arg10[%c0_43, %c0_44, %c0_45], %3 {strides = array<i32>} : memref<12x16x3xbf16, #tpu.memory_space<vmem>>, vector<2x16x3xbf16>,
    } else {
    }
    %c0_i32_6 = arith.constant 0 : i32
    %7 = arith.cmpi sgt, %arg1, %c0_i32_6 : i32
    %8 = arith.extui %7 : i1 to i32
    %c0_i32_7 = arith.constant 0 : i32
    %9 = arith.cmpi ne, %8, %c0_i32_7 : i32
    scf.if %9 {
      %c0_43 = arith.constant 0 : index
      %c0_44 = arith.constant 0 : index
      %c0_45 = arith.constant 0 : index
      %c0_46 = arith.constant 0 : index
      %88 = vector.load %arg3[%c0_43, %c0_44, %c0_45, %c0_46] : memref<1x2x16x3xbf16, #tpu.memory_space<vmem>>, vector<1x2x16x3xbf16>
      %89 = vector.shape_cast %88 : vector<1x2x16x3xbf16> to vector<2x16x3xbf16>
      %c0_47 = arith.constant 0 : index
      %c0_48 = arith.constant 0 : index
      %c0_49 = arith.constant 0 : index
      %90 = vector.load %arg10[%c0_47, %c0_48, %c0_49] : memref<12x16x3xbf16, #tpu.memory_space<vmem>>, vector<2x16x3xbf16>
      tpu.vector_store %arg10[%c0_47, %c0_48, %c0_49], %89 {strides = array<i32>} : memref<12x16x3xbf16, #tpu.memory_space<vmem>>, vector<2x16x3xbf16>,
    } else {
    }
    %c1_i32 = arith.constant 1 : i32
    %10 = arith.cmpi eq, %arg1, %c1_i32 : i32
    %11 = arith.extui %10 : i1 to i32
    %c0_i32_8 = arith.constant 0 : i32
    %12 = arith.cmpi ne, %11, %c0_i32_8 : i32
    scf.if %12 {
      %c10 = arith.constant 10 : index
      %c0_43 = arith.constant 0 : index
      %c0_44 = arith.constant 0 : index
      %88 = vector.load %arg10[%c10, %c0_43, %c0_44] : memref<12x16x3xbf16, #tpu.memory_space<vmem>>, vector<2x16x3xbf16>
      tpu.vector_store %arg10[%c10, %c0_43, %c0_44], %3 {strides = array<i32>} : memref<12x16x3xbf16, #tpu.memory_space<vmem>>, vector<2x16x3xbf16>,
    } else {
    }
    %c1_i32_9 = arith.constant 1 : i32
    %13 = arith.cmpi slt, %arg1, %c1_i32_9 : i32
    %14 = arith.extui %13 : i1 to i32
    %c0_i32_10 = arith.constant 0 : i32
    %15 = arith.cmpi ne, %14, %c0_i32_10 : i32
    scf.if %15 {
      %c0_43 = arith.constant 0 : index
      %c0_44 = arith.constant 0 : index
      %c0_45 = arith.constant 0 : index
      %c0_46 = arith.constant 0 : index
      %88 = vector.load %arg4[%c0_43, %c0_44, %c0_45, %c0_46] : memref<1x2x16x3xbf16, #tpu.memory_space<vmem>>, vector<1x2x16x3xbf16>
      %89 = vector.shape_cast %88 : vector<1x2x16x3xbf16> to vector<2x16x3xbf16>
      %c10 = arith.constant 10 : index
      %c0_47 = arith.constant 0 : index
      %c0_48 = arith.constant 0 : index
      %90 = vector.load %arg10[%c10, %c0_47, %c0_48] : memref<12x16x3xbf16, #tpu.memory_space<vmem>>, vector<2x16x3xbf16>
      tpu.vector_store %arg10[%c10, %c0_47, %c0_48], %89 {strides = array<i32>} : memref<12x16x3xbf16, #tpu.memory_space<vmem>>, vector<2x16x3xbf16>,
    } else {
    }
    %c0_11 = arith.constant 0 : index
    %c0_12 = arith.constant 0 : index
    %c0_13 = arith.constant 0 : index
    %16 = vector.load %arg10[%c0_11, %c0_12, %c0_13] : memref<12x16x3xbf16, #tpu.memory_space<vmem>>, vector<12x16x3xbf16>
    %cst_14 = arith.constant 0.000000e+00 : bf16
    %17 = vector.broadcast %cst_14 : bf16 to vector<12x1x3xbf16>
    %18 = tpu.concatenate %17, %16, %17 in 1 : vector<12x1x3xbf16>, vector<12x16x3xbf16>, vector<12x1x3xbf16> -> vector<12x18x3xbf16>
    %19 = vector.extract_strided_slice %18 {offsets = [0, 0, 0], sizes = [10, 16, 3], strides = [1, 1, 1]} : vector<12x18x3xbf16> to vector<10x16x3xbf16>
    %20 = vector.extract_strided_slice %18 {offsets = [0, 1, 0], sizes = [10, 16, 3], strides = [1, 1, 1]} : vector<12x18x3xbf16> to vector<10x16x3xbf16>
    %21 = vector.extract_strided_slice %18 {offsets = [0, 2, 0], sizes = [10, 16, 3], strides = [1, 1, 1]} : vector<12x18x3xbf16> to vector<10x16x3xbf16>
    %22 = vector.extract_strided_slice %18 {offsets = [1, 0, 0], sizes = [10, 16, 3], strides = [1, 1, 1]} : vector<12x18x3xbf16> to vector<10x16x3xbf16>
    %23 = vector.extract_strided_slice %18 {offsets = [1, 1, 0], sizes = [10, 16, 3], strides = [1, 1, 1]} : vector<12x18x3xbf16> to vector<10x16x3xbf16>
    %24 = vector.extract_strided_slice %18 {offsets = [1, 2, 0], sizes = [10, 16, 3], strides = [1, 1, 1]} : vector<12x18x3xbf16> to vector<10x16x3xbf16>
    %25 = vector.extract_strided_slice %18 {offsets = [2, 0, 0], sizes = [10, 16, 3], strides = [1, 1, 1]} : vector<12x18x3xbf16> to vector<10x16x3xbf16>
    %26 = vector.extract_strided_slice %18 {offsets = [2, 1, 0], sizes = [10, 16, 3], strides = [1, 1, 1]} : vector<12x18x3xbf16> to vector<10x16x3xbf16>
    %27 = vector.extract_strided_slice %18 {offsets = [2, 2, 0], sizes = [10, 16, 3], strides = [1, 1, 1]} : vector<12x18x3xbf16> to vector<10x16x3xbf16>
    %28 = tpu.concatenate %19, %20, %21, %22, %23, %24, %25, %26, %27 in 2 : vector<10x16x3xbf16>, vector<10x16x3xbf16>, vector<10x16x3xbf16>, vector<10x16x3xbf16>, vector<10x16x3xbf16>, vector<10x16x3xbf16>, vector<10x16x3xbf16>, vector<10x16x3xbf16>, vector<10x16x3xbf16> -> vector<10x16x27xbf16>
    %29 = vector.shape_cast %28 : vector<10x16x27xbf16> to vector<160x27xbf16>
    %c0_15 = arith.constant 0 : index
    %c0_16 = arith.constant 0 : index
    %30 = vector.load %arg5[%c0_15, %c0_16] : memref<27x64xbf16, #tpu.memory_space<vmem>>, vector<27x64xbf16>
    %cst_17 = arith.constant dense<0.000000e+00> : vector<160x64xf32>
    %31 = tpu.matmul %29, %30, %cst_17 {dimension_numbers = #tpu.dot_dimension_numbers<[1], [0], [0], [1], [0, 0, 1, 1], [], []>} : vector<160x27xbf16>, vector<27x64xbf16>, vector<160x64xf32> -> vector<160x64xf32>
    %c0_18 = arith.constant 0 : index
    %c0_19 = arith.constant 0 : index
    %32 = vector.load %arg6[%c0_18, %c0_19] : memref<1x64xf32, #tpu.memory_space<vmem>>, vector<1x64xf32>
    %33 = vector.shape_cast %32 : vector<1x64xf32> to vector<64xf32>
    %34 = vector.shape_cast %33 : vector<64xf32> to vector<1x64xf32>
    %35 = vector.broadcast %34 : vector<1x64xf32> to vector<160x64xf32>
    %36 = arith.addf %31, %35 : vector<160x64xf32>
    %cst_20 = arith.constant 0.000000e+00 : f32
    %37 = vector.broadcast %cst_20 : f32 to vector<160x64xf32>
    %38 = arith.maximumf %36, %37 : vector<160x64xf32>
    %39 = vector.shape_cast %38 : vector<160x64xf32> to vector<10x16x64xf32>
    %40 = arith.truncf %39 : vector<10x16x64xf32> to vector<10x16x64xbf16>
    %c0_21 = arith.constant 0 : index
    %c0_22 = arith.constant 0 : index
    %c0_23 = arith.constant 0 : index
    %41 = vector.load %arg11[%c0_21, %c0_22, %c0_23] : memref<10x16x64xbf16, #tpu.memory_space<vmem>>, vector<10x16x64xbf16>
    tpu.vector_store %arg11[%c0_21, %c0_22, %c0_23], %40 {strides = array<i32>} : memref<10x16x64xbf16, #tpu.memory_space<vmem>>, vector<10x16x64xbf16>,
    %cst_24 = arith.constant 0.000000e+00 : bf16
    %42 = vector.broadcast %cst_24 : bf16 to vector<1x16x64xbf16>
    %c0_i32_25 = arith.constant 0 : i32
    %43 = arith.cmpi eq, %arg1, %c0_i32_25 : i32
    %44 = arith.extui %43 : i1 to i32
    %c0_i32_26 = arith.constant 0 : i32
    %45 = arith.cmpi ne, %44, %c0_i32_26 : i32
    scf.if %45 {
      %c0_43 = arith.constant 0 : index
      %c0_44 = arith.constant 0 : index
      %c0_45 = arith.constant 0 : index
      %88 = vector.load %arg11[%c0_43, %c0_44, %c0_45] : memref<10x16x64xbf16, #tpu.memory_space<vmem>>, vector<1x16x64xbf16>
      tpu.vector_store %arg11[%c0_43, %c0_44, %c0_45], %42 {strides = array<i32>} : memref<10x16x64xbf16, #tpu.memory_space<vmem>>, vector<1x16x64xbf16>,
    } else {
    }
    %c1_i32_27 = arith.constant 1 : i32
    %46 = arith.cmpi eq, %arg1, %c1_i32_27 : i32
    %47 = arith.extui %46 : i1 to i32
    %c0_i32_28 = arith.constant 0 : i32
    %48 = arith.cmpi ne, %47, %c0_i32_28 : i32
    scf.if %48 {
      %c9 = arith.constant 9 : index
      %c0_43 = arith.constant 0 : index
      %c0_44 = arith.constant 0 : index
      %88 = vector.load %arg11[%c9, %c0_43, %c0_44] : memref<10x16x64xbf16, #tpu.memory_space<vmem>>, vector<1x16x64xbf16>
      tpu.vector_store %arg11[%c9, %c0_43, %c0_44], %42 {strides = array<i32>} : memref<10x16x64xbf16, #tpu.memory_space<vmem>>, vector<1x16x64xbf16>,
    } else {
    }
    %c0_29 = arith.constant 0 : index
    %c0_30 = arith.constant 0 : index
    %c0_31 = arith.constant 0 : index
    %49 = vector.load %arg11[%c0_29, %c0_30, %c0_31] : memref<10x16x64xbf16, #tpu.memory_space<vmem>>, vector<10x16x64xbf16>
    %cst_32 = arith.constant 0.000000e+00 : bf16
    %50 = vector.broadcast %cst_32 : bf16 to vector<10x1x64xbf16>
    %51 = tpu.concatenate %50, %49, %50 in 1 : vector<10x1x64xbf16>, vector<10x16x64xbf16>, vector<10x1x64xbf16> -> vector<10x18x64xbf16>
    %52 = vector.extract_strided_slice %51 {offsets = [0, 0, 0], sizes = [10, 16, 64], strides = [1, 1, 1]} : vector<10x18x64xbf16> to vector<10x16x64xbf16>
    %53 = vector.extract_strided_slice %51 {offsets = [0, 1, 0], sizes = [10, 16, 64], strides = [1, 1, 1]} : vector<10x18x64xbf16> to vector<10x16x64xbf16>
    %54 = vector.extract_strided_slice %51 {offsets = [0, 2, 0], sizes = [10, 16, 64], strides = [1, 1, 1]} : vector<10x18x64xbf16> to vector<10x16x64xbf16>
    %55 = tpu.concatenate %52, %53, %54 in 2 : vector<10x16x64xbf16>, vector<10x16x64xbf16>, vector<10x16x64xbf16> -> vector<10x16x192xbf16>
    %56 = vector.shape_cast %55 : vector<10x16x192xbf16> to vector<160x192xbf16>
    %c0_33 = arith.constant 0 : index
    %c0_34 = arith.constant 0 : index
    %57 = vector.load %arg7[%c0_33, %c0_34] : memref<192x192xbf16, #tpu.memory_space<vmem>>, vector<192x192xbf16>
    %cst_35 = arith.constant dense<0.000000e+00> : vector<160x192xf32>
    %58 = tpu.matmul %56, %57, %cst_35 {dimension_numbers = #tpu.dot_dimension_numbers<[1], [0], [0], [1], [0, 0, 1, 1], [], []>} : vector<160x192xbf16>, vector<192x192xbf16>, vector<160x192xf32> -> vector<160x192xf32>
    %59 = vector.shape_cast %58 : vector<160x192xf32> to vector<10x16x192xf32>
    %60 = vector.extract_strided_slice %59 {offsets = [0, 0, 0], sizes = [8, 16, 64], strides = [1, 1, 1]} : vector<10x16x192xf32> to vector<8x16x64xf32>
    %61 = vector.extract_strided_slice %59 {offsets = [1, 0, 64], sizes = [8, 16, 64], strides = [1, 1, 1]} : vector<10x16x192xf32> to vector<8x16x64xf32>
    %62 = arith.addf %60, %61 : vector<8x16x64xf32>
    %63 = vector.extract_strided_slice %59 {offsets = [2, 0, 128], sizes = [8, 16, 64], strides = [1, 1, 1]} : vector<10x16x192xf32> to vector<8x16x64xf32>
    %64 = arith.addf %62, %63 : vector<8x16x64xf32>
    %c0_36 = arith.constant 0 : index
    %c0_37 = arith.constant 0 : index
    %65 = vector.load %arg8[%c0_36, %c0_37] : memref<1x64xf32, #tpu.memory_space<vmem>>, vector<1x64xf32>
    %66 = vector.shape_cast %65 : vector<1x64xf32> to vector<64xf32>
    %67 = vector.shape_cast %66 : vector<64xf32> to vector<1x1x64xf32>
    %68 = vector.broadcast %67 : vector<1x1x64xf32> to vector<8x16x64xf32>
    %69 = arith.addf %64, %68 : vector<8x16x64xf32>
    %cst_38 = arith.constant 0.000000e+00 : f32
    %70 = vector.broadcast %cst_38 : f32 to vector<8x16x64xf32>
    %71 = arith.maximumf %69, %70 : vector<8x16x64xf32>
    %72 = vector.shape_cast %71 : vector<8x16x64xf32> to vector<4x2x16x64xf32>
    %73 = vector.extract_strided_slice %72 {offsets = [0, 0, 0, 0], sizes = [4, 1, 16, 64], strides = [1, 1, 1, 1]} : vector<4x2x16x64xf32> to vector<4x1x16x64xf32>
    %74 = vector.shape_cast %73 : vector<4x1x16x64xf32> to vector<4x16x64xf32>
    %75 = vector.extract_strided_slice %72 {offsets = [0, 1, 0, 0], sizes = [4, 1, 16, 64], strides = [1, 1, 1, 1]} : vector<4x2x16x64xf32> to vector<4x1x16x64xf32>
    %76 = vector.shape_cast %75 : vector<4x1x16x64xf32> to vector<4x16x64xf32>
    %77 = arith.maximumf %74, %76 : vector<4x16x64xf32>
    %78 = vector.shape_cast %77 : vector<4x16x64xf32> to vector<4x8x2x64xf32>
    %79 = vector.extract_strided_slice %78 {offsets = [0, 0, 0, 0], sizes = [4, 8, 1, 64], strides = [1, 1, 1, 1]} : vector<4x8x2x64xf32> to vector<4x8x1x64xf32>
    %80 = vector.shape_cast %79 : vector<4x8x1x64xf32> to vector<4x8x64xf32>
    %81 = vector.extract_strided_slice %78 {offsets = [0, 0, 1, 0], sizes = [4, 8, 1, 64], strides = [1, 1, 1, 1]} : vector<4x8x2x64xf32> to vector<4x8x1x64xf32>
    %82 = vector.shape_cast %81 : vector<4x8x1x64xf32> to vector<4x8x64xf32>
    %83 = arith.maximumf %80, %82 : vector<4x8x64xf32>
    %84 = arith.truncf %83 : vector<4x8x64xf32> to vector<4x8x64xbf16>
    %c0_39 = arith.constant 0 : index
    %c0_40 = arith.constant 0 : index
    %c0_41 = arith.constant 0 : index
    %c0_42 = arith.constant 0 : index
    %85 = vector.load %arg9[%c0_39, %c0_40, %c0_41, %c0_42] : memref<1x4x8x64xbf16, #tpu.memory_space<vmem>>, vector<1x4x8x64xbf16>
    %86 = vector.shape_cast %85 : vector<1x4x8x64xbf16> to vector<4x8x64xbf16>
    %87 = vector.shape_cast %84 : vector<4x8x64xbf16> to vector<1x4x8x64xbf16>
    tpu.vector_store %arg9[%c0_39, %c0_40, %c0_41, %c0_42], %87 {strides = array<i32>} : memref<1x4x8x64xbf16, #tpu.memory_space<vmem>>, vector<1x4x8x64xbf16>,
    return
  }
  func.func @transform_0(%arg0: i32, %arg1: i32) -> (i32, i32, i32, i32) {
    %c0_i32 = arith.constant 0 : i32
    %c0_i32_0 = arith.constant 0 : i32
    %c0_i32_1 = arith.constant 0 : i32
    return %arg0, %arg1, %c0_i32, %c0_i32_0 : i32, i32, i32, i32
  }
  func.func @transform_1(%arg0: i32, %arg1: i32) -> (i32, i32, i32, i32) {
    %c4_i32 = arith.constant 4 : i32
    %0 = arith.muli %arg1, %c4_i32 : i32
    %c1_i32 = arith.constant 1 : i32
    %1 = arith.subi %0, %c1_i32 : i32
    %c0_i32 = arith.constant 0 : i32
    %2 = arith.maxsi %1, %c0_i32 : i32
    %c0_i32_0 = arith.constant 0 : i32
    %c0_i32_1 = arith.constant 0 : i32
    %c0_i32_2 = arith.constant 0 : i32
    return %arg0, %2, %c0_i32_0, %c0_i32_1 : i32, i32, i32, i32
  }
  func.func @transform_2(%arg0: i32, %arg1: i32) -> (i32, i32, i32, i32) {
    %c1_i32 = arith.constant 1 : i32
    %0 = arith.addi %arg1, %c1_i32 : i32
    %c4_i32 = arith.constant 4 : i32
    %1 = arith.muli %0, %c4_i32 : i32
    %c7_i32 = arith.constant 7 : i32
    %2 = arith.minsi %1, %c7_i32 : i32
    %c0_i32 = arith.constant 0 : i32
    %c0_i32_0 = arith.constant 0 : i32
    %c0_i32_1 = arith.constant 0 : i32
    return %arg0, %2, %c0_i32, %c0_i32_0 : i32, i32, i32, i32
  }
  func.func @transform_3(%arg0: i32, %arg1: i32) -> (i32, i32) {
    %c0_i32 = arith.constant 0 : i32
    %c0_i32_0 = arith.constant 0 : i32
    %c0_i32_1 = arith.constant 0 : i32
    return %c0_i32, %c0_i32_0 : i32, i32
  }
  func.func @transform_4(%arg0: i32, %arg1: i32) -> (i32, i32) {
    %c0_i32 = arith.constant 0 : i32
    %c0_i32_0 = arith.constant 0 : i32
    %c0_i32_1 = arith.constant 0 : i32
    return %c0_i32, %c0_i32_0 : i32, i32
  }
  func.func @transform_5(%arg0: i32, %arg1: i32) -> (i32, i32) {
    %c0_i32 = arith.constant 0 : i32
    %c0_i32_0 = arith.constant 0 : i32
    %c0_i32_1 = arith.constant 0 : i32
    return %c0_i32, %c0_i32_0 : i32, i32
  }
  func.func @transform_6(%arg0: i32, %arg1: i32) -> (i32, i32) {
    %c0_i32 = arith.constant 0 : i32
    %c0_i32_0 = arith.constant 0 : i32
    %c0_i32_1 = arith.constant 0 : i32
    return %c0_i32, %c0_i32_0 : i32, i32
  }
  func.func @transform_7(%arg0: i32, %arg1: i32) -> (i32, i32, i32, i32) {
    %c0_i32 = arith.constant 0 : i32
    %c0_i32_0 = arith.constant 0 : i32
    %c0_i32_1 = arith.constant 0 : i32
    return %arg0, %arg1, %c0_i32, %c0_i32_0 : i32, i32, i32, i32
  }
}

module attributes {stable_mosaic.version = 11 : i64} {
  func.func @kernel(%arg0: i32, %arg1: i32, %arg2: memref<1x4x8x128xbf16, #tpu.memory_space<vmem>>, %arg3: memref<1x1x8x128xbf16, #tpu.memory_space<vmem>>, %arg4: memref<1x1x8x128xbf16, #tpu.memory_space<vmem>>, %arg5: memref<3x384x128xbf16, #tpu.memory_space<vmem>>, %arg6: memref<1x128xf32, #tpu.memory_space<vmem>>, %arg7: memref<1x4x8x128xf32, #tpu.memory_space<vmem>>, %arg8: memref<6x8x128xbf16, #tpu.memory_space<vmem>>) attributes {dimension_semantics = [#tpu.dimension_semantics<parallel>, #tpu.dimension_semantics<parallel>], iteration_bounds = array<i64: 2, 2>, scalar_prefetch = 0 : i64, scratch_operands = 1 : i64, tpu.core_type = #tpu.core_type<tc>, window_params = [{transform_indices = @transform_0, window_bounds = array<i64: 1, 4, 8, 128>}, {transform_indices = @transform_1, window_bounds = array<i64: 1, 1, 8, 128>}, {transform_indices = @transform_2, window_bounds = array<i64: 1, 1, 8, 128>}, {pipeline_mode = #tpu.pipeline_mode<synchronous>, transform_indices = @transform_3, window_bounds = array<i64: 3, 384, 128>}, {pipeline_mode = #tpu.pipeline_mode<synchronous>, transform_indices = @transform_4, window_bounds = array<i64: 1, 128>}, {transform_indices = @transform_5, window_bounds = array<i64: 1, 4, 8, 128>}]} {
    %c0 = arith.constant 0 : index
    %c0_0 = arith.constant 0 : index
    %c0_1 = arith.constant 0 : index
    %c0_2 = arith.constant 0 : index
    %0 = vector.load %arg2[%c0, %c0_0, %c0_1, %c0_2] : memref<1x4x8x128xbf16, #tpu.memory_space<vmem>>, vector<1x4x8x128xbf16>
    %1 = vector.shape_cast %0 : vector<1x4x8x128xbf16> to vector<4x8x128xbf16>
    %c1 = arith.constant 1 : index
    %c0_3 = arith.constant 0 : index
    %c0_4 = arith.constant 0 : index
    %2 = vector.load %arg8[%c1, %c0_3, %c0_4] : memref<6x8x128xbf16, #tpu.memory_space<vmem>>, vector<4x8x128xbf16>
    tpu.vector_store %arg8[%c1, %c0_3, %c0_4], %1 {strides = array<i32>} : memref<6x8x128xbf16, #tpu.memory_space<vmem>>, vector<4x8x128xbf16>,
    %cst = arith.constant 0.000000e+00 : bf16
    %3 = vector.broadcast %cst : bf16 to vector<1x8x128xbf16>
    %c0_i32 = arith.constant 0 : i32
    %4 = arith.cmpi eq, %arg1, %c0_i32 : i32
    %5 = arith.extui %4 : i1 to i32
    %c0_i32_5 = arith.constant 0 : i32
    %6 = arith.cmpi ne, %5, %c0_i32_5 : i32
    scf.if %6 {
      %c0_34 = arith.constant 0 : index
      %c0_35 = arith.constant 0 : index
      %c0_36 = arith.constant 0 : index
      %53 = vector.load %arg8[%c0_34, %c0_35, %c0_36] : memref<6x8x128xbf16, #tpu.memory_space<vmem>>, vector<1x8x128xbf16>
      tpu.vector_store %arg8[%c0_34, %c0_35, %c0_36], %3 {strides = array<i32>} : memref<6x8x128xbf16, #tpu.memory_space<vmem>>, vector<1x8x128xbf16>,
    } else {
    }
    %c0_i32_6 = arith.constant 0 : i32
    %7 = arith.cmpi sgt, %arg1, %c0_i32_6 : i32
    %8 = arith.extui %7 : i1 to i32
    %c0_i32_7 = arith.constant 0 : i32
    %9 = arith.cmpi ne, %8, %c0_i32_7 : i32
    scf.if %9 {
      %c0_34 = arith.constant 0 : index
      %c0_35 = arith.constant 0 : index
      %c0_36 = arith.constant 0 : index
      %c0_37 = arith.constant 0 : index
      %53 = vector.load %arg3[%c0_34, %c0_35, %c0_36, %c0_37] : memref<1x1x8x128xbf16, #tpu.memory_space<vmem>>, vector<1x1x8x128xbf16>
      %54 = vector.shape_cast %53 : vector<1x1x8x128xbf16> to vector<1x8x128xbf16>
      %c0_38 = arith.constant 0 : index
      %c0_39 = arith.constant 0 : index
      %c0_40 = arith.constant 0 : index
      %55 = vector.load %arg8[%c0_38, %c0_39, %c0_40] : memref<6x8x128xbf16, #tpu.memory_space<vmem>>, vector<1x8x128xbf16>
      tpu.vector_store %arg8[%c0_38, %c0_39, %c0_40], %54 {strides = array<i32>} : memref<6x8x128xbf16, #tpu.memory_space<vmem>>, vector<1x8x128xbf16>,
    } else {
    }
    %c1_i32 = arith.constant 1 : i32
    %10 = arith.cmpi eq, %arg1, %c1_i32 : i32
    %11 = arith.extui %10 : i1 to i32
    %c0_i32_8 = arith.constant 0 : i32
    %12 = arith.cmpi ne, %11, %c0_i32_8 : i32
    scf.if %12 {
      %c5 = arith.constant 5 : index
      %c0_34 = arith.constant 0 : index
      %c0_35 = arith.constant 0 : index
      %53 = vector.load %arg8[%c5, %c0_34, %c0_35] : memref<6x8x128xbf16, #tpu.memory_space<vmem>>, vector<1x8x128xbf16>
      tpu.vector_store %arg8[%c5, %c0_34, %c0_35], %3 {strides = array<i32>} : memref<6x8x128xbf16, #tpu.memory_space<vmem>>, vector<1x8x128xbf16>,
    } else {
    }
    %c1_i32_9 = arith.constant 1 : i32
    %13 = arith.cmpi slt, %arg1, %c1_i32_9 : i32
    %14 = arith.extui %13 : i1 to i32
    %c0_i32_10 = arith.constant 0 : i32
    %15 = arith.cmpi ne, %14, %c0_i32_10 : i32
    scf.if %15 {
      %c0_34 = arith.constant 0 : index
      %c0_35 = arith.constant 0 : index
      %c0_36 = arith.constant 0 : index
      %c0_37 = arith.constant 0 : index
      %53 = vector.load %arg4[%c0_34, %c0_35, %c0_36, %c0_37] : memref<1x1x8x128xbf16, #tpu.memory_space<vmem>>, vector<1x1x8x128xbf16>
      %54 = vector.shape_cast %53 : vector<1x1x8x128xbf16> to vector<1x8x128xbf16>
      %c5 = arith.constant 5 : index
      %c0_38 = arith.constant 0 : index
      %c0_39 = arith.constant 0 : index
      %55 = vector.load %arg8[%c5, %c0_38, %c0_39] : memref<6x8x128xbf16, #tpu.memory_space<vmem>>, vector<1x8x128xbf16>
      tpu.vector_store %arg8[%c5, %c0_38, %c0_39], %54 {strides = array<i32>} : memref<6x8x128xbf16, #tpu.memory_space<vmem>>, vector<1x8x128xbf16>,
    } else {
    }
    %c0_11 = arith.constant 0 : index
    %c0_12 = arith.constant 0 : index
    %c0_13 = arith.constant 0 : index
    %16 = vector.load %arg8[%c0_11, %c0_12, %c0_13] : memref<6x8x128xbf16, #tpu.memory_space<vmem>>, vector<6x8x128xbf16>
    %cst_14 = arith.constant 0.000000e+00 : bf16
    %17 = vector.broadcast %cst_14 : bf16 to vector<6x1x128xbf16>
    %18 = tpu.concatenate %17, %16, %17 in 1 : vector<6x1x128xbf16>, vector<6x8x128xbf16>, vector<6x1x128xbf16> -> vector<6x10x128xbf16>
    %19 = vector.extract_strided_slice %18 {offsets = [0, 0, 0], sizes = [6, 8, 128], strides = [1, 1, 1]} : vector<6x10x128xbf16> to vector<6x8x128xbf16>
    %20 = vector.extract_strided_slice %18 {offsets = [0, 1, 0], sizes = [6, 8, 128], strides = [1, 1, 1]} : vector<6x10x128xbf16> to vector<6x8x128xbf16>
    %21 = vector.extract_strided_slice %18 {offsets = [0, 2, 0], sizes = [6, 8, 128], strides = [1, 1, 1]} : vector<6x10x128xbf16> to vector<6x8x128xbf16>
    %22 = tpu.concatenate %19, %20, %21 in 2 : vector<6x8x128xbf16>, vector<6x8x128xbf16>, vector<6x8x128xbf16> -> vector<6x8x384xbf16>
    %cst_15 = arith.constant 0.000000e+00 : f32
    %23 = vector.broadcast %cst_15 : f32 to vector<32x128xf32>
    %24 = vector.extract_strided_slice %22 {offsets = [0, 0, 0], sizes = [4, 8, 384], strides = [1, 1, 1]} : vector<6x8x384xbf16> to vector<4x8x384xbf16>
    %25 = vector.shape_cast %24 : vector<4x8x384xbf16> to vector<32x384xbf16>
    %c0_16 = arith.constant 0 : index
    %c0_17 = arith.constant 0 : index
    %c0_18 = arith.constant 0 : index
    %26 = vector.load %arg5[%c0_16, %c0_17, %c0_18] : memref<3x384x128xbf16, #tpu.memory_space<vmem>>, vector<1x384x128xbf16>
    %27 = vector.shape_cast %26 : vector<1x384x128xbf16> to vector<384x128xbf16>
    %cst_19 = arith.constant dense<0.000000e+00> : vector<32x128xf32>
    %28 = tpu.matmul %25, %27, %cst_19 {dimension_numbers = #tpu.dot_dimension_numbers<[1], [0], [0], [1], [0, 0, 1, 1], [], []>} : vector<32x384xbf16>, vector<384x128xbf16>, vector<32x128xf32> -> vector<32x128xf32>
    %29 = arith.addf %23, %28 : vector<32x128xf32>
    %30 = vector.extract_strided_slice %22 {offsets = [1, 0, 0], sizes = [4, 8, 384], strides = [1, 1, 1]} : vector<6x8x384xbf16> to vector<4x8x384xbf16>
    %31 = vector.shape_cast %30 : vector<4x8x384xbf16> to vector<32x384xbf16>
    %c1_20 = arith.constant 1 : index
    %c0_21 = arith.constant 0 : index
    %c0_22 = arith.constant 0 : index
    %32 = vector.load %arg5[%c1_20, %c0_21, %c0_22] : memref<3x384x128xbf16, #tpu.memory_space<vmem>>, vector<1x384x128xbf16>
    %33 = vector.shape_cast %32 : vector<1x384x128xbf16> to vector<384x128xbf16>
    %cst_23 = arith.constant dense<0.000000e+00> : vector<32x128xf32>
    %34 = tpu.matmul %31, %33, %cst_23 {dimension_numbers = #tpu.dot_dimension_numbers<[1], [0], [0], [1], [0, 0, 1, 1], [], []>} : vector<32x384xbf16>, vector<384x128xbf16>, vector<32x128xf32> -> vector<32x128xf32>
    %35 = arith.addf %29, %34 : vector<32x128xf32>
    %36 = vector.extract_strided_slice %22 {offsets = [2, 0, 0], sizes = [4, 8, 384], strides = [1, 1, 1]} : vector<6x8x384xbf16> to vector<4x8x384xbf16>
    %37 = vector.shape_cast %36 : vector<4x8x384xbf16> to vector<32x384xbf16>
    %c2 = arith.constant 2 : index
    %c0_24 = arith.constant 0 : index
    %c0_25 = arith.constant 0 : index
    %38 = vector.load %arg5[%c2, %c0_24, %c0_25] : memref<3x384x128xbf16, #tpu.memory_space<vmem>>, vector<1x384x128xbf16>
    %39 = vector.shape_cast %38 : vector<1x384x128xbf16> to vector<384x128xbf16>
    %cst_26 = arith.constant dense<0.000000e+00> : vector<32x128xf32>
    %40 = tpu.matmul %37, %39, %cst_26 {dimension_numbers = #tpu.dot_dimension_numbers<[1], [0], [0], [1], [0, 0, 1, 1], [], []>} : vector<32x384xbf16>, vector<384x128xbf16>, vector<32x128xf32> -> vector<32x128xf32>
    %41 = arith.addf %35, %40 : vector<32x128xf32>
    %c0_27 = arith.constant 0 : index
    %c0_28 = arith.constant 0 : index
    %42 = vector.load %arg6[%c0_27, %c0_28] : memref<1x128xf32, #tpu.memory_space<vmem>>, vector<1x128xf32>
    %43 = vector.shape_cast %42 : vector<1x128xf32> to vector<128xf32>
    %44 = vector.shape_cast %43 : vector<128xf32> to vector<1x128xf32>
    %45 = vector.broadcast %44 : vector<1x128xf32> to vector<32x128xf32>
    %46 = arith.addf %41, %45 : vector<32x128xf32>
    %cst_29 = arith.constant 0.000000e+00 : f32
    %47 = vector.broadcast %cst_29 : f32 to vector<32x128xf32>
    %48 = arith.maximumf %46, %47 : vector<32x128xf32>
    %49 = vector.shape_cast %48 : vector<32x128xf32> to vector<4x8x128xf32>
    %c0_30 = arith.constant 0 : index
    %c0_31 = arith.constant 0 : index
    %c0_32 = arith.constant 0 : index
    %c0_33 = arith.constant 0 : index
    %50 = vector.load %arg7[%c0_30, %c0_31, %c0_32, %c0_33] : memref<1x4x8x128xf32, #tpu.memory_space<vmem>>, vector<1x4x8x128xf32>
    %51 = vector.shape_cast %50 : vector<1x4x8x128xf32> to vector<4x8x128xf32>
    %52 = vector.shape_cast %49 : vector<4x8x128xf32> to vector<1x4x8x128xf32>
    tpu.vector_store %arg7[%c0_30, %c0_31, %c0_32, %c0_33], %52 {strides = array<i32>} : memref<1x4x8x128xf32, #tpu.memory_space<vmem>>, vector<1x4x8x128xf32>,
    return
  }
  func.func @transform_0(%arg0: i32, %arg1: i32) -> (i32, i32, i32, i32) {
    %c0_i32 = arith.constant 0 : i32
    %c0_i32_0 = arith.constant 0 : i32
    %c0_i32_1 = arith.constant 0 : i32
    return %arg0, %arg1, %c0_i32, %c0_i32_0 : i32, i32, i32, i32
  }
  func.func @transform_1(%arg0: i32, %arg1: i32) -> (i32, i32, i32, i32) {
    %c4_i32 = arith.constant 4 : i32
    %0 = arith.muli %arg1, %c4_i32 : i32
    %c1_i32 = arith.constant 1 : i32
    %1 = arith.subi %0, %c1_i32 : i32
    %c0_i32 = arith.constant 0 : i32
    %2 = arith.maxsi %1, %c0_i32 : i32
    %c0_i32_0 = arith.constant 0 : i32
    %c0_i32_1 = arith.constant 0 : i32
    %c0_i32_2 = arith.constant 0 : i32
    return %arg0, %2, %c0_i32_0, %c0_i32_1 : i32, i32, i32, i32
  }
  func.func @transform_2(%arg0: i32, %arg1: i32) -> (i32, i32, i32, i32) {
    %c1_i32 = arith.constant 1 : i32
    %0 = arith.addi %arg1, %c1_i32 : i32
    %c4_i32 = arith.constant 4 : i32
    %1 = arith.muli %0, %c4_i32 : i32
    %c7_i32 = arith.constant 7 : i32
    %2 = arith.minsi %1, %c7_i32 : i32
    %c0_i32 = arith.constant 0 : i32
    %c0_i32_0 = arith.constant 0 : i32
    %c0_i32_1 = arith.constant 0 : i32
    return %arg0, %2, %c0_i32, %c0_i32_0 : i32, i32, i32, i32
  }
  func.func @transform_3(%arg0: i32, %arg1: i32) -> (i32, i32, i32) {
    %c0_i32 = arith.constant 0 : i32
    %c0_i32_0 = arith.constant 0 : i32
    %c0_i32_1 = arith.constant 0 : i32
    %c0_i32_2 = arith.constant 0 : i32
    return %c0_i32, %c0_i32_0, %c0_i32_1 : i32, i32, i32
  }
  func.func @transform_4(%arg0: i32, %arg1: i32) -> (i32, i32) {
    %c0_i32 = arith.constant 0 : i32
    %c0_i32_0 = arith.constant 0 : i32
    %c0_i32_1 = arith.constant 0 : i32
    return %c0_i32, %c0_i32_0 : i32, i32
  }
  func.func @transform_5(%arg0: i32, %arg1: i32) -> (i32, i32, i32, i32) {
    %c0_i32 = arith.constant 0 : i32
    %c0_i32_0 = arith.constant 0 : i32
    %c0_i32_1 = arith.constant 0 : i32
    return %arg0, %arg1, %c0_i32, %c0_i32_0 : i32, i32, i32, i32
  }
}

module attributes {stable_mosaic.version = 11 : i64} {
  func.func @kernel(%arg0: i32, %arg1: i32, %arg2: memref<1x4x8x64xbf16, #tpu.memory_space<vmem>>, %arg3: memref<1x1x8x64xbf16, #tpu.memory_space<vmem>>, %arg4: memref<1x1x8x64xbf16, #tpu.memory_space<vmem>>, %arg5: memref<3x192x128xbf16, #tpu.memory_space<vmem>>, %arg6: memref<1x128xf32, #tpu.memory_space<vmem>>, %arg7: memref<1x4x8x128xbf16, #tpu.memory_space<vmem>>, %arg8: memref<6x8x64xbf16, #tpu.memory_space<vmem>>) attributes {dimension_semantics = [#tpu.dimension_semantics<parallel>, #tpu.dimension_semantics<parallel>], iteration_bounds = array<i64: 2, 2>, scalar_prefetch = 0 : i64, scratch_operands = 1 : i64, tpu.core_type = #tpu.core_type<tc>, window_params = [{transform_indices = @transform_0, window_bounds = array<i64: 1, 4, 8, 64>}, {transform_indices = @transform_1, window_bounds = array<i64: 1, 1, 8, 64>}, {transform_indices = @transform_2, window_bounds = array<i64: 1, 1, 8, 64>}, {pipeline_mode = #tpu.pipeline_mode<synchronous>, transform_indices = @transform_3, window_bounds = array<i64: 3, 192, 128>}, {pipeline_mode = #tpu.pipeline_mode<synchronous>, transform_indices = @transform_4, window_bounds = array<i64: 1, 128>}, {transform_indices = @transform_5, window_bounds = array<i64: 1, 4, 8, 128>}]} {
    %c0 = arith.constant 0 : index
    %c0_0 = arith.constant 0 : index
    %c0_1 = arith.constant 0 : index
    %c0_2 = arith.constant 0 : index
    %0 = vector.load %arg2[%c0, %c0_0, %c0_1, %c0_2] : memref<1x4x8x64xbf16, #tpu.memory_space<vmem>>, vector<1x4x8x64xbf16>
    %1 = vector.shape_cast %0 : vector<1x4x8x64xbf16> to vector<4x8x64xbf16>
    %c1 = arith.constant 1 : index
    %c0_3 = arith.constant 0 : index
    %c0_4 = arith.constant 0 : index
    %2 = vector.load %arg8[%c1, %c0_3, %c0_4] : memref<6x8x64xbf16, #tpu.memory_space<vmem>>, vector<4x8x64xbf16>
    tpu.vector_store %arg8[%c1, %c0_3, %c0_4], %1 {strides = array<i32>} : memref<6x8x64xbf16, #tpu.memory_space<vmem>>, vector<4x8x64xbf16>,
    %cst = arith.constant 0.000000e+00 : bf16
    %3 = vector.broadcast %cst : bf16 to vector<1x8x64xbf16>
    %c0_i32 = arith.constant 0 : i32
    %4 = arith.cmpi eq, %arg1, %c0_i32 : i32
    %5 = arith.extui %4 : i1 to i32
    %c0_i32_5 = arith.constant 0 : i32
    %6 = arith.cmpi ne, %5, %c0_i32_5 : i32
    scf.if %6 {
      %c0_34 = arith.constant 0 : index
      %c0_35 = arith.constant 0 : index
      %c0_36 = arith.constant 0 : index
      %54 = vector.load %arg8[%c0_34, %c0_35, %c0_36] : memref<6x8x64xbf16, #tpu.memory_space<vmem>>, vector<1x8x64xbf16>
      tpu.vector_store %arg8[%c0_34, %c0_35, %c0_36], %3 {strides = array<i32>} : memref<6x8x64xbf16, #tpu.memory_space<vmem>>, vector<1x8x64xbf16>,
    } else {
    }
    %c0_i32_6 = arith.constant 0 : i32
    %7 = arith.cmpi sgt, %arg1, %c0_i32_6 : i32
    %8 = arith.extui %7 : i1 to i32
    %c0_i32_7 = arith.constant 0 : i32
    %9 = arith.cmpi ne, %8, %c0_i32_7 : i32
    scf.if %9 {
      %c0_34 = arith.constant 0 : index
      %c0_35 = arith.constant 0 : index
      %c0_36 = arith.constant 0 : index
      %c0_37 = arith.constant 0 : index
      %54 = vector.load %arg3[%c0_34, %c0_35, %c0_36, %c0_37] : memref<1x1x8x64xbf16, #tpu.memory_space<vmem>>, vector<1x1x8x64xbf16>
      %55 = vector.shape_cast %54 : vector<1x1x8x64xbf16> to vector<1x8x64xbf16>
      %c0_38 = arith.constant 0 : index
      %c0_39 = arith.constant 0 : index
      %c0_40 = arith.constant 0 : index
      %56 = vector.load %arg8[%c0_38, %c0_39, %c0_40] : memref<6x8x64xbf16, #tpu.memory_space<vmem>>, vector<1x8x64xbf16>
      tpu.vector_store %arg8[%c0_38, %c0_39, %c0_40], %55 {strides = array<i32>} : memref<6x8x64xbf16, #tpu.memory_space<vmem>>, vector<1x8x64xbf16>,
    } else {
    }
    %c1_i32 = arith.constant 1 : i32
    %10 = arith.cmpi eq, %arg1, %c1_i32 : i32
    %11 = arith.extui %10 : i1 to i32
    %c0_i32_8 = arith.constant 0 : i32
    %12 = arith.cmpi ne, %11, %c0_i32_8 : i32
    scf.if %12 {
      %c5 = arith.constant 5 : index
      %c0_34 = arith.constant 0 : index
      %c0_35 = arith.constant 0 : index
      %54 = vector.load %arg8[%c5, %c0_34, %c0_35] : memref<6x8x64xbf16, #tpu.memory_space<vmem>>, vector<1x8x64xbf16>
      tpu.vector_store %arg8[%c5, %c0_34, %c0_35], %3 {strides = array<i32>} : memref<6x8x64xbf16, #tpu.memory_space<vmem>>, vector<1x8x64xbf16>,
    } else {
    }
    %c1_i32_9 = arith.constant 1 : i32
    %13 = arith.cmpi slt, %arg1, %c1_i32_9 : i32
    %14 = arith.extui %13 : i1 to i32
    %c0_i32_10 = arith.constant 0 : i32
    %15 = arith.cmpi ne, %14, %c0_i32_10 : i32
    scf.if %15 {
      %c0_34 = arith.constant 0 : index
      %c0_35 = arith.constant 0 : index
      %c0_36 = arith.constant 0 : index
      %c0_37 = arith.constant 0 : index
      %54 = vector.load %arg4[%c0_34, %c0_35, %c0_36, %c0_37] : memref<1x1x8x64xbf16, #tpu.memory_space<vmem>>, vector<1x1x8x64xbf16>
      %55 = vector.shape_cast %54 : vector<1x1x8x64xbf16> to vector<1x8x64xbf16>
      %c5 = arith.constant 5 : index
      %c0_38 = arith.constant 0 : index
      %c0_39 = arith.constant 0 : index
      %56 = vector.load %arg8[%c5, %c0_38, %c0_39] : memref<6x8x64xbf16, #tpu.memory_space<vmem>>, vector<1x8x64xbf16>
      tpu.vector_store %arg8[%c5, %c0_38, %c0_39], %55 {strides = array<i32>} : memref<6x8x64xbf16, #tpu.memory_space<vmem>>, vector<1x8x64xbf16>,
    } else {
    }
    %c0_11 = arith.constant 0 : index
    %c0_12 = arith.constant 0 : index
    %c0_13 = arith.constant 0 : index
    %16 = vector.load %arg8[%c0_11, %c0_12, %c0_13] : memref<6x8x64xbf16, #tpu.memory_space<vmem>>, vector<6x8x64xbf16>
    %cst_14 = arith.constant 0.000000e+00 : bf16
    %17 = vector.broadcast %cst_14 : bf16 to vector<6x1x64xbf16>
    %18 = tpu.concatenate %17, %16, %17 in 1 : vector<6x1x64xbf16>, vector<6x8x64xbf16>, vector<6x1x64xbf16> -> vector<6x10x64xbf16>
    %19 = vector.extract_strided_slice %18 {offsets = [0, 0, 0], sizes = [6, 8, 64], strides = [1, 1, 1]} : vector<6x10x64xbf16> to vector<6x8x64xbf16>
    %20 = vector.extract_strided_slice %18 {offsets = [0, 1, 0], sizes = [6, 8, 64], strides = [1, 1, 1]} : vector<6x10x64xbf16> to vector<6x8x64xbf16>
    %21 = vector.extract_strided_slice %18 {offsets = [0, 2, 0], sizes = [6, 8, 64], strides = [1, 1, 1]} : vector<6x10x64xbf16> to vector<6x8x64xbf16>
    %22 = tpu.concatenate %19, %20, %21 in 2 : vector<6x8x64xbf16>, vector<6x8x64xbf16>, vector<6x8x64xbf16> -> vector<6x8x192xbf16>
    %cst_15 = arith.constant 0.000000e+00 : f32
    %23 = vector.broadcast %cst_15 : f32 to vector<32x128xf32>
    %24 = vector.extract_strided_slice %22 {offsets = [0, 0, 0], sizes = [4, 8, 192], strides = [1, 1, 1]} : vector<6x8x192xbf16> to vector<4x8x192xbf16>
    %25 = vector.shape_cast %24 : vector<4x8x192xbf16> to vector<32x192xbf16>
    %c0_16 = arith.constant 0 : index
    %c0_17 = arith.constant 0 : index
    %c0_18 = arith.constant 0 : index
    %26 = vector.load %arg5[%c0_16, %c0_17, %c0_18] : memref<3x192x128xbf16, #tpu.memory_space<vmem>>, vector<1x192x128xbf16>
    %27 = vector.shape_cast %26 : vector<1x192x128xbf16> to vector<192x128xbf16>
    %cst_19 = arith.constant dense<0.000000e+00> : vector<32x128xf32>
    %28 = tpu.matmul %25, %27, %cst_19 {dimension_numbers = #tpu.dot_dimension_numbers<[1], [0], [0], [1], [0, 0, 1, 1], [], []>} : vector<32x192xbf16>, vector<192x128xbf16>, vector<32x128xf32> -> vector<32x128xf32>
    %29 = arith.addf %23, %28 : vector<32x128xf32>
    %30 = vector.extract_strided_slice %22 {offsets = [1, 0, 0], sizes = [4, 8, 192], strides = [1, 1, 1]} : vector<6x8x192xbf16> to vector<4x8x192xbf16>
    %31 = vector.shape_cast %30 : vector<4x8x192xbf16> to vector<32x192xbf16>
    %c1_20 = arith.constant 1 : index
    %c0_21 = arith.constant 0 : index
    %c0_22 = arith.constant 0 : index
    %32 = vector.load %arg5[%c1_20, %c0_21, %c0_22] : memref<3x192x128xbf16, #tpu.memory_space<vmem>>, vector<1x192x128xbf16>
    %33 = vector.shape_cast %32 : vector<1x192x128xbf16> to vector<192x128xbf16>
    %cst_23 = arith.constant dense<0.000000e+00> : vector<32x128xf32>
    %34 = tpu.matmul %31, %33, %cst_23 {dimension_numbers = #tpu.dot_dimension_numbers<[1], [0], [0], [1], [0, 0, 1, 1], [], []>} : vector<32x192xbf16>, vector<192x128xbf16>, vector<32x128xf32> -> vector<32x128xf32>
    %35 = arith.addf %29, %34 : vector<32x128xf32>
    %36 = vector.extract_strided_slice %22 {offsets = [2, 0, 0], sizes = [4, 8, 192], strides = [1, 1, 1]} : vector<6x8x192xbf16> to vector<4x8x192xbf16>
    %37 = vector.shape_cast %36 : vector<4x8x192xbf16> to vector<32x192xbf16>
    %c2 = arith.constant 2 : index
    %c0_24 = arith.constant 0 : index
    %c0_25 = arith.constant 0 : index
    %38 = vector.load %arg5[%c2, %c0_24, %c0_25] : memref<3x192x128xbf16, #tpu.memory_space<vmem>>, vector<1x192x128xbf16>
    %39 = vector.shape_cast %38 : vector<1x192x128xbf16> to vector<192x128xbf16>
    %cst_26 = arith.constant dense<0.000000e+00> : vector<32x128xf32>
    %40 = tpu.matmul %37, %39, %cst_26 {dimension_numbers = #tpu.dot_dimension_numbers<[1], [0], [0], [1], [0, 0, 1, 1], [], []>} : vector<32x192xbf16>, vector<192x128xbf16>, vector<32x128xf32> -> vector<32x128xf32>
    %41 = arith.addf %35, %40 : vector<32x128xf32>
    %c0_27 = arith.constant 0 : index
    %c0_28 = arith.constant 0 : index
    %42 = vector.load %arg6[%c0_27, %c0_28] : memref<1x128xf32, #tpu.memory_space<vmem>>, vector<1x128xf32>
    %43 = vector.shape_cast %42 : vector<1x128xf32> to vector<128xf32>
    %44 = vector.shape_cast %43 : vector<128xf32> to vector<1x128xf32>
    %45 = vector.broadcast %44 : vector<1x128xf32> to vector<32x128xf32>
    %46 = arith.addf %41, %45 : vector<32x128xf32>
    %cst_29 = arith.constant 0.000000e+00 : f32
    %47 = vector.broadcast %cst_29 : f32 to vector<32x128xf32>
    %48 = arith.maximumf %46, %47 : vector<32x128xf32>
    %49 = vector.shape_cast %48 : vector<32x128xf32> to vector<4x8x128xf32>
    %50 = arith.truncf %49 : vector<4x8x128xf32> to vector<4x8x128xbf16>
    %c0_30 = arith.constant 0 : index
    %c0_31 = arith.constant 0 : index
    %c0_32 = arith.constant 0 : index
    %c0_33 = arith.constant 0 : index
    %51 = vector.load %arg7[%c0_30, %c0_31, %c0_32, %c0_33] : memref<1x4x8x128xbf16, #tpu.memory_space<vmem>>, vector<1x4x8x128xbf16>
    %52 = vector.shape_cast %51 : vector<1x4x8x128xbf16> to vector<4x8x128xbf16>
    %53 = vector.shape_cast %50 : vector<4x8x128xbf16> to vector<1x4x8x128xbf16>
    tpu.vector_store %arg7[%c0_30, %c0_31, %c0_32, %c0_33], %53 {strides = array<i32>} : memref<1x4x8x128xbf16, #tpu.memory_space<vmem>>, vector<1x4x8x128xbf16>,
    return
  }
  func.func @transform_0(%arg0: i32, %arg1: i32) -> (i32, i32, i32, i32) {
    %c0_i32 = arith.constant 0 : i32
    %c0_i32_0 = arith.constant 0 : i32
    %c0_i32_1 = arith.constant 0 : i32
    return %arg0, %arg1, %c0_i32, %c0_i32_0 : i32, i32, i32, i32
  }
  func.func @transform_1(%arg0: i32, %arg1: i32) -> (i32, i32, i32, i32) {
    %c4_i32 = arith.constant 4 : i32
    %0 = arith.muli %arg1, %c4_i32 : i32
    %c1_i32 = arith.constant 1 : i32
    %1 = arith.subi %0, %c1_i32 : i32
    %c0_i32 = arith.constant 0 : i32
    %2 = arith.maxsi %1, %c0_i32 : i32
    %c0_i32_0 = arith.constant 0 : i32
    %c0_i32_1 = arith.constant 0 : i32
    %c0_i32_2 = arith.constant 0 : i32
    return %arg0, %2, %c0_i32_0, %c0_i32_1 : i32, i32, i32, i32
  }
  func.func @transform_2(%arg0: i32, %arg1: i32) -> (i32, i32, i32, i32) {
    %c1_i32 = arith.constant 1 : i32
    %0 = arith.addi %arg1, %c1_i32 : i32
    %c4_i32 = arith.constant 4 : i32
    %1 = arith.muli %0, %c4_i32 : i32
    %c7_i32 = arith.constant 7 : i32
    %2 = arith.minsi %1, %c7_i32 : i32
    %c0_i32 = arith.constant 0 : i32
    %c0_i32_0 = arith.constant 0 : i32
    %c0_i32_1 = arith.constant 0 : i32
    return %arg0, %2, %c0_i32, %c0_i32_0 : i32, i32, i32, i32
  }
  func.func @transform_3(%arg0: i32, %arg1: i32) -> (i32, i32, i32) {
    %c0_i32 = arith.constant 0 : i32
    %c0_i32_0 = arith.constant 0 : i32
    %c0_i32_1 = arith.constant 0 : i32
    %c0_i32_2 = arith.constant 0 : i32
    return %c0_i32, %c0_i32_0, %c0_i32_1 : i32, i32, i32
  }
  func.func @transform_4(%arg0: i32, %arg1: i32) -> (i32, i32) {
    %c0_i32 = arith.constant 0 : i32
    %c0_i32_0 = arith.constant 0 : i32
    %c0_i32_1 = arith.constant 0 : i32
    return %c0_i32, %c0_i32_0 : i32, i32
  }
  func.func @transform_5(%arg0: i32, %arg1: i32) -> (i32, i32, i32, i32) {
    %c0_i32 = arith.constant 0 : i32
    %c0_i32_0 = arith.constant 0 : i32
    %c0_i32_1 = arith.constant 0 : i32
    return %arg0, %arg1, %c0_i32, %c0_i32_0 : i32, i32, i32, i32
  }
}

</mosaic_0001>

<llo_original>
// kernel: global_feature_extractor.4
$region0: #{global_feature_extractor.4}
  #allocation0 [shape = 'u32[]', space=smem, size = 0x4, offset = 0x4, fixed_abs, tag = 'smem constant byte address 0x4 - core index']
  #allocation1 [shape = 'u32[144,128]{1,0:T(1,128)}', space=vmem, size = 0x12000, scoped, tag = 'internal scratch']
  #allocation2 [shape = 'bf16[6,8,64]{2,1,0:T(8,128)(2,1)}', space=vmem, size = 0x3000, scoped, tag = 'scratch operand']
  %s0 = inlined_call_operand.vmem [shape: bf16[2,8,8,64], index: 0, kind: input, shape index: {}, may-alias: {0,1,2}]
  %s1 = inlined_call_operand.vmem [shape: bf16[2,8,8,64], index: 1, kind: input, shape index: {}, may-alias: {0,1,2}]
  %s2 = inlined_call_operand.vmem [shape: bf16[2,8,8,64], index: 2, kind: input, shape index: {}, may-alias: {0,1,2}]
  %s3 = inlined_call_operand.vmem [shape: bf16[3,192,128], index: 3, kind: input, shape index: {}]
  %s4 = inlined_call_operand.vmem [shape: f32[1,128], index: 4, kind: input, shape index: {}]
  %s5 = inlined_call_operand.vmem [shape: bf16[2,8,8,128], index: 5, kind: output, shape index: {}]
  %s6 = sld [smem:[#allocation0]]
  $region69: #{global_feature_extractor.4} parent=0
    _
  %s8 = ssub.s32 1, %s6
  %s9 = scalar_select 0, %s8, %s6
  loop: start=0, step=1, limit=6
  $region2: #{global_feature_extractor.4} parent=0 // loop_pre_header
    _
  $region3: #{global_feature_extractor.4} parent=0 // loop_header
    %s11 = sphi 0, %s15
    %p12 = scmp.ge.s32.totalorder %s11, 6
    %s18 = sphi 0, %s30
    %s19 = sphi 0, %s26
    %s20 = sphi 0, %s18
    %s21 = sphi 0, %s19
    %s22 = sphi 0, %s20
    %s23 = sphi 0, %s21
    %s35 = sphi 0, %s37
    %s38 = sphi 0, %s35
    %s39 = sphi 0, %s38
    %s55 = sphi 0, %s39
    %s71 = sphi 0, %s73
    %s74 = sphi 0, %s71
    %s75 = sphi 0, %s74
    %s91 = sphi 0, %s75
    %s107 = sphi 0, %s109
    %s110 = sphi 0, %s107
    %s111 = sphi 0, %s110
    %s127 = sphi 0, %s111
    %s131 = sphi 0, %s131
    %s133 = sphi 0, %s131
    %s134 = sphi 0, %s133
    %s148 = sphi 0, %s134
    %s152 = sphi 0, %s152
    %s154 = sphi 0, %s152
    %s155 = sphi 0, %s154
    %s169 = sphi 0, %s155
    %s177 = sphi 0, %s179
    %s180 = sphi 0, %s177
    %s181 = sphi 0, %s180
    %s197 = sphi 0, %s181
  $region4: #{global_feature_extractor.4} parent=0 // loop_header_branch
    %14 = sbr.rel (%p12) target = $region8
  $region5: #{global_feature_extractor.4} parent=0 // loop_body
    %s16 = ssub.s32 %s11, 1
    %s17 = ssub.s32 %s11, 2
    %s24 = sadd.s32 1, %s19
    %p25 = scmp.ge.s32.totalorder %s24, 2
    %s26 = scalar_select %p25, 0, %s24
    %s27 = sadd.s32 1, %s18
    %s28 = scalar_select %p25, %s27, %s18
    %p29 = scmp.ge.s32.totalorder %s28, 2
    %s30 = scalar_select %p29, 0, %s28
    %s31 = ssub.s32 %s18, %s30
    %s32 = ssub.s32 %s19, %s26
    %s33 = sor.u32 %s31, %s32
    %p34 = scmp.eq.s32.totalorder %s33, 0
    %s36 = sadd.s32 %s35, 1
    %s37 = scalar_select %p34, %s35, %s36
    %p40 = pneg %p34
    %p41 = scmp.eq.s32.totalorder %s11, 3
    %p42 = por %p40, %p41
    %p43 = scmp.ne.s32.totalorder %s35, %s38
    %p44 = scmp.eq.s32.totalorder %s11, 0
    %p45 = por %p43, %p44
    %p46 = scmp.ne.s32.totalorder %s35, %s38
    %p47 = scmp.eq.s32.totalorder %s16, 3
    %p48 = por %p46, %p47
    %p49 = scmp.ne.s32.totalorder %s38, %s39
    %p50 = scmp.eq.s32.totalorder %s16, 0
    %p51 = por %p49, %p50
    %p52 = scmp.ne.s32.totalorder %s38, %s39
    %p53 = scmp.eq.s32.totalorder %s17, 3
    %p54 = por %p52, %p53
    %p56 = scmp.ne.s32.totalorder %s39, %s55
    %p57 = scmp.eq.s32.totalorder %s17, 0
    %p58 = por %p56, %p57
    %s59 = smul.u32 %s19, 4
    %s60 = ssub.s32 %s59, 1
    %p61 = scmp.gt.s32.totalorder %s60, 0
    %s62 = scalar_select %p61, %s60, 0
    %s63 = smul.u32 %s26, 4
    %s64 = ssub.s32 %s63, 1
    %p65 = scmp.gt.s32.totalorder %s64, 0
    %s66 = scalar_select %p65, %s64, 0
    %s67 = ssub.s32 %s18, %s30
    %s68 = ssub.s32 %s62, %s66
    %s69 = sor.u32 %s67, %s68
    %p70 = scmp.eq.s32.totalorder %s69, 0
    %s72 = sadd.s32 %s71, 1
    %s73 = scalar_select %p70, %s71, %s72
    %p76 = pneg %p70
    %p77 = scmp.eq.s32.totalorder %s11, 3
    %p78 = por %p76, %p77
    %p79 = scmp.ne.s32.totalorder %s71, %s74
    %p80 = scmp.eq.s32.totalorder %s11, 0
    %p81 = por %p79, %p80
    %p82 = scmp.ne.s32.totalorder %s71, %s74
    %p83 = scmp.eq.s32.totalorder %s16, 3
    %p84 = por %p82, %p83
    %p85 = scmp.ne.s32.totalorder %s74, %s75
    %p86 = scmp.eq.s32.totalorder %s16, 0
    %p87 = por %p85, %p86
    %p88 = scmp.ne.s32.totalorder %s74, %s75
    %p89 = scmp.eq.s32.totalorder %s17, 3
    %p90 = por %p88, %p89
    %p92 = scmp.ne.s32.totalorder %s75, %s91
    %p93 = scmp.eq.s32.totalorder %s17, 0
    %p94 = por %p92, %p93
    %s95 = sadd.s32 %s19, 1
    %s96 = smul.u32 %s95, 4
    %p97 = scmp.lt.s32.totalorder %s96, 7
    %s98 = scalar_select %p97, %s96, 7
    %s99 = sadd.s32 %s26, 1
    %s100 = smul.u32 %s99, 4
    %p101 = scmp.lt.s32.totalorder %s100, 7
    %s102 = scalar_select %p101, %s100, 7
    %s103 = ssub.s32 %s18, %s30
    %s104 = ssub.s32 %s98, %s102
    %s105 = sor.u32 %s103, %s104
    %p106 = scmp.eq.s32.totalorder %s105, 0
    %s108 = sadd.s32 %s107, 1
    %s109 = scalar_select %p106, %s107, %s108
    %p112 = pneg %p106
    %p113 = scmp.eq.s32.totalorder %s11, 3
    %p114 = por %p112, %p113
    %p115 = scmp.ne.s32.totalorder %s107, %s110
    %p116 = scmp.eq.s32.totalorder %s11, 0
    %p117 = por %p115, %p116
    %p118 = scmp.ne.s32.totalorder %s107, %s110
    %p119 = scmp.eq.s32.totalorder %s16, 3
    %p120 = por %p118, %p119
    %p121 = scmp.ne.s32.totalorder %s110, %s111
    %p122 = scmp.eq.s32.totalorder %s16, 0
    %p123 = por %p121, %p122
    %p124 = scmp.ne.s32.totalorder %s110, %s111
    %p125 = scmp.eq.s32.totalorder %s17, 3
    %p126 = por %p124, %p125
    %p128 = scmp.ne.s32.totalorder %s111, %s127
    %p129 = scmp.eq.s32.totalorder %s17, 0
    %p130 = por %p128, %p129
    %s132 = sadd.s32 %s131, 1
    %p135 = scmp.eq.s32.totalorder %s11, 3
    %p136 = scmp.ne.s32.totalorder %s131, %s133
    %p137 = scmp.eq.s32.totalorder %s11, 0
    %p138 = por %p136, %p137
    %p139 = scmp.ne.s32.totalorder %s131, %s133
    %p140 = scmp.eq.s32.totalorder %s16, 3
    %p141 = por %p139, %p140
    %p142 = scmp.ne.s32.totalorder %s133, %s134
    %p143 = scmp.eq.s32.totalorder %s16, 0
    %p144 = por %p142, %p143
    %p145 = scmp.ne.s32.totalorder %s133, %s134
    %p146 = scmp.eq.s32.totalorder %s17, 3
    %p147 = por %p145, %p146
    %p149 = scmp.ne.s32.totalorder %s134, %s148
    %p150 = scmp.eq.s32.totalorder %s17, 0
    %p151 = por %p149, %p150
    %s153 = sadd.s32 %s152, 1
    %p156 = scmp.eq.s32.totalorder %s11, 3
    %p157 = scmp.ne.s32.totalorder %s152, %s154
    %p158 = scmp.eq.s32.totalorder %s11, 0
    %p159 = por %p157, %p158
    %p160 = scmp.ne.s32.totalorder %s152, %s154
    %p161 = scmp.eq.s32.totalorder %s16, 3
    %p162 = por %p160, %p161
    %p163 = scmp.ne.s32.totalorder %s154, %s155
    %p164 = scmp.eq.s32.totalorder %s16, 0
    %p165 = por %p163, %p164
    %p166 = scmp.ne.s32.totalorder %s154, %s155
    %p167 = scmp.eq.s32.totalorder %s17, 3
    %p168 = por %p166, %p167
    %p170 = scmp.ne.s32.totalorder %s155, %s169
    %p171 = scmp.eq.s32.totalorder %s17, 0
    %p172 = por %p170, %p171
    %s173 = ssub.s32 %s18, %s30
    %s174 = ssub.s32 %s19, %s26
    %s175 = sor.u32 %s173, %s174
    %p176 = scmp.eq.s32.totalorder %s175, 0
    %s178 = sadd.s32 %s177, 1
    %s179 = scalar_select %p176, %s177, %s178
    %p182 = pneg %p176
    %p183 = scmp.eq.s32.totalorder %s11, 3
    %p184 = por %p182, %p183
    %p185 = scmp.ne.s32.totalorder %s177, %s180
    %p186 = scmp.eq.s32.totalorder %s11, 0
    %p187 = por %p185, %p186
    %p188 = scmp.ne.s32.totalorder %s177, %s180
    %p189 = scmp.eq.s32.totalorder %s16, 3
    %p190 = por %p188, %p189
    %p191 = scmp.ne.s32.totalorder %s180, %s181
    %p192 = scmp.eq.s32.totalorder %s16, 0
    %p193 = por %p191, %p192
    %p194 = scmp.ne.s32.totalorder %s180, %s181
    %p195 = scmp.eq.s32.totalorder %s17, 3
    %p196 = por %p194, %p195
    %p198 = scmp.ne.s32.totalorder %s181, %s197
    %p199 = scmp.eq.s32.totalorder %s17, 0
    %p200 = por %p198, %p199
    %p201 = scmp.le.s32.totalorder 1, %s11
    %p202 = scmp.lt.s32.totalorder %s11, 5
    %p203 = pnand %p201, %p202
    %p204 = pneg %p203
    // Predicated region
    $region9: #{global_feature_extractor.4} parent=5 // pred_check
      _
    $region10: #{global_feature_extractor.4} parent=5 // pred_check_branch
      %206 = sbr.rel (%p203) target = $region12
    $region11: #{global_feature_extractor.4} parent=5 // pred_region
      %s207 = ssub.s32 %s11, 1
      // Predicated region
      $region13: #{global_feature_extractor.4} parent=11 // pred_check
        %p208 = pneg %p144
      $region14: #{global_feature_extractor.4} parent=11 // pred_check_branch
        %210 = sbr.rel (%p208) target = $region16
      $region15: #{global_feature_extractor.4} parent=11 // pred_region
        _
      $region16: #{global_feature_extractor.4} parent=11 // pred_fallthru
        _
      // Predicated region
      $region17: #{global_feature_extractor.4} parent=11 // pred_check
        %p211 = pneg %p165
      $region18: #{global_feature_extractor.4} parent=11 // pred_check_branch
        %213 = sbr.rel (%p211) target = $region20
      $region19: #{global_feature_extractor.4} parent=11 // pred_region
        _
      $region20: #{global_feature_extractor.4} parent=11 // pred_fallthru
        _
    $region12: #{global_feature_extractor.4} parent=5 // pred_fallthru
      _
    %p214 = scmp.lt.s32.totalorder %s11, 4
    // Predicated region
    $region21: #{global_feature_extractor.4} parent=5 // pred_check
      %p215 = pneg %p214
    $region22: #{global_feature_extractor.4} parent=5 // pred_check_branch
      %217 = sbr.rel (%p215) target = $region24
    $region23: #{global_feature_extractor.4} parent=5 // pred_region
      // Predicated region
      $region25: #{global_feature_extractor.4} parent=23 // pred_check
        %p218 = pneg %p45
      $region26: #{global_feature_extractor.4} parent=23 // pred_check_branch
        %220 = sbr.rel (%p218) target = $region28
      $region27: #{global_feature_extractor.4} parent=23 // pred_region
        %s221 = smul.u32 4, %s19
        %p222 = scmp.lt.s32.totalorder %s18, 1
        %s223 = scalar_select %p222, %s18, 1
        %p224 = scmp.lt.s32.totalorder %s221, 7
        %s225 = scalar_select %p224, %s221, 7
        %s226 = smul.addr %s223, 8
        %s227 = sadd.s32 %s225, %s226
        %s228 = smul.addr %s227, 4
        %s229 = scalar_lea.vmem %s0, %s228
        %s230 = smul.u32 4, %s19
      $region28: #{global_feature_extractor.4} parent=23 // pred_fallthru
        _
      // Predicated region
      $region29: #{global_feature_extractor.4} parent=23 // pred_check
        %p231 = pneg %p81
      $region30: #{global_feature_extractor.4} parent=23 // pred_check_branch
        %233 = sbr.rel (%p231) target = $region32
      $region31: #{global_feature_extractor.4} parent=23 // pred_region
        %s234 = smul.u32 %s19, 4
        %s235 = ssub.s32 %s234, 1
        %p236 = scmp.gt.s32.totalorder %s235, 0
        %s237 = scalar_select %p236, %s235, 0
        %p238 = scmp.lt.s32.totalorder %s18, 1
        %s239 = scalar_select %p238, %s18, 1
        %p240 = scmp.lt.s32.totalorder %s237, 7
        %s241 = scalar_select %p240, %s237, 7
        %s242 = smul.addr %s239, 8
        %s243 = sadd.s32 %s241, %s242
        %s244 = smul.addr %s243, 4
        %s245 = scalar_lea.vmem %s1, %s244
        %s246 = smul.u32 %s19, 4
        %s247 = ssub.s32 %s246, 1
        %p248 = scmp.gt.s32.totalorder %s247, 0
        %s249 = scalar_select %p248, %s247, 0
      $region32: #{global_feature_extractor.4} parent=23 // pred_fallthru
        _
      // Predicated region
      $region33: #{global_feature_extractor.4} parent=23 // pred_check
        %p250 = pneg %p117
      $region34: #{global_feature_extractor.4} parent=23 // pred_check_branch
        %252 = sbr.rel (%p250) target = $region36
      $region35: #{global_feature_extractor.4} parent=23 // pred_region
        %s253 = sadd.s32 %s19, 1
        %s254 = smul.u32 %s253, 4
        %p255 = scmp.lt.s32.totalorder %s254, 7
        %s256 = scalar_select %p255, %s254, 7
        %p257 = scmp.lt.s32.totalorder %s18, 1
        %s258 = scalar_select %p257, %s18, 1
        %p259 = scmp.lt.s32.totalorder %s256, 7
        %s260 = scalar_select %p259, %s256, 7
        %s261 = smul.addr %s258, 8
        %s262 = sadd.s32 %s260, %s261
        %s263 = smul.addr %s262, 4
        %s264 = scalar_lea.vmem %s2, %s263
        %s265 = sadd.s32 %s19, 1
        %s266 = smul.u32 %s265, 4
        %p267 = scmp.lt.s32.totalorder %s266, 7
        %s268 = scalar_select %p267, %s266, 7
      $region36: #{global_feature_extractor.4} parent=23 // pred_fallthru
        _
    $region24: #{global_feature_extractor.4} parent=5 // pred_fallthru
      _
    %p269 = scmp.le.s32.totalorder 1, %s11
    %p270 = scmp.lt.s32.totalorder %s11, 5
    %p271 = pnand %p269, %p270
    %p272 = pneg %p271
    // Predicated region
    $region37: #{global_feature_extractor.4} parent=5 // pred_check
      _
    $region38: #{global_feature_extractor.4} parent=5 // pred_check_branch
      %274 = sbr.rel (%p271) target = $region40
    $region39: #{global_feature_extractor.4} parent=5 // pred_region
      %s275 = ssub.s32 %s11, 1
      %s276 = smul.u32 4, %s21
      %p277 = scmp.lt.s32.totalorder %s20, 1
      %s278 = scalar_select %p277, %s20, 1
      %p279 = scmp.lt.s32.totalorder %s276, 7
      %s280 = scalar_select %p279, %s276, 7
      %s281 = smul.addr %s278, 8
      %s282 = sadd.s32 %s280, %s281
      %s283 = smul.addr %s282, 4
      %s284 = scalar_lea.vmem %s0, %s283
      %p285 = pneg %p51
      %p286 = pneg %p48
      %s287 = smul.u32 %s21, 4
      %s288 = ssub.s32 %s287, 1
      %p289 = scmp.gt.s32.totalorder %s288, 0
      %s290 = scalar_select %p289, %s288, 0
      %p291 = scmp.lt.s32.totalorder %s20, 1
      %s292 = scalar_select %p291, %s20, 1
      %p293 = scmp.lt.s32.totalorder %s290, 7
      %s294 = scalar_select %p293, %s290, 7
      %s295 = smul.addr %s292, 8
      %s296 = sadd.s32 %s294, %s295
      %s297 = smul.addr %s296, 4
      %s298 = scalar_lea.vmem %s1, %s297
      %p299 = pneg %p87
      %p300 = pneg %p84
      %s301 = sadd.s32 %s21, 1
      %s302 = smul.u32 %s301, 4
      %p303 = scmp.lt.s32.totalorder %s302, 7
      %s304 = scalar_select %p303, %s302, 7
      %p305 = scmp.lt.s32.totalorder %s20, 1
      %s306 = scalar_select %p305, %s20, 1
      %p307 = scmp.lt.s32.totalorder %s304, 7
      %s308 = scalar_select %p307, %s304, 7
      %s309 = smul.addr %s306, 8
      %s310 = sadd.s32 %s308, %s309
      %s311 = smul.addr %s310, 4
      %s312 = scalar_lea.vmem %s2, %s311
      %p313 = pneg %p123
      %p314 = pneg %p120
      %p315 = pneg %p144
      %p316 = pneg %p141
      %p317 = pneg %p165
      %p318 = pneg %p162
      %p319 = pneg %p193
      %p320 = pneg %p190
      %s321 = smul.u32 4, %s21
      %p322 = scmp.lt.s32.totalorder %s20, 1
      %s323 = scalar_select %p322, %s20, 1
      %p324 = scmp.lt.s32.totalorder %s321, 7
      %s325 = scalar_select %p324, %s321, 7
      %s326 = smul.addr %s323, 8
      %s327 = sadd.s32 %s325, %s326
      %s328 = smul.addr %s327, 4
      %s329 = scalar_lea.vmem %s5, %s328
      %s330 = smul.u32 4, %s21
      %p331 = scmp.lt.s32.totalorder %s20, 1
      %s332 = scalar_select %p331, %s20, 1
      %p333 = scmp.lt.s32.totalorder %s330, 7
      %s334 = scalar_select %p333, %s330, 7
      %s335 = smul.addr %s332, 8
      %s336 = sadd.s32 %s334, %s335
      %s337 = smul.addr %s336, 4
      %s338 = scalar_lea.vmem %s0, %s337
      %s339 = smul.u32 4, %s21
      %s340 = smul.u32 %s21, 4
      %s341 = ssub.s32 %s340, 1
      %p342 = scmp.gt.s32.totalorder %s341, 0
      %s343 = scalar_select %p342, %s341, 0
      %p344 = scmp.lt.s32.totalorder %s20, 1
      %s345 = scalar_select %p344, %s20, 1
      %p346 = scmp.lt.s32.totalorder %s343, 7
      %s347 = scalar_select %p346, %s343, 7
      %s348 = smul.addr %s345, 8
      %s349 = sadd.s32 %s347, %s348
      %s350 = smul.addr %s349, 4
      %s351 = scalar_lea.vmem %s1, %s350
      %s352 = smul.u32 %s21, 4
      %s353 = ssub.s32 %s352, 1
      %p354 = scmp.gt.s32.totalorder %s353, 0
      %s355 = scalar_select %p354, %s353, 0
      %s356 = sadd.s32 %s21, 1
      %s357 = smul.u32 %s356, 4
      %p358 = scmp.lt.s32.totalorder %s357, 7
      %s359 = scalar_select %p358, %s357, 7
      %p360 = scmp.lt.s32.totalorder %s20, 1
      %s361 = scalar_select %p360, %s20, 1
      %p362 = scmp.lt.s32.totalorder %s359, 7
      %s363 = scalar_select %p362, %s359, 7
      %s364 = smul.addr %s361, 8
      %s365 = sadd.s32 %s363, %s364
      %s366 = smul.addr %s365, 4
      %s367 = scalar_lea.vmem %s2, %s366
      %s368 = sadd.s32 %s21, 1
      %s369 = smul.u32 %s368, 4
      %p370 = scmp.lt.s32.totalorder %s369, 7
      %s371 = scalar_select %p370, %s369, 7
      %s372 = smul.u32 4, %s21
      %p373 = scmp.lt.s32.totalorder %s20, 1
      %s374 = scalar_select %p373, %s20, 1
      %p375 = scmp.lt.s32.totalorder %s372, 7
      %s376 = scalar_select %p375, %s372, 7
      %s377 = smul.addr %s374, 8
      %s378 = sadd.s32 %s376, %s377
      %s379 = smul.addr %s378, 4
      %s380 = scalar_lea.vmem %s5, %s379
      %s381 = smul.u32 4, %s21
      %v383 = vld [vmem:[%s338] sm:$0xf]
      %v384 = vld [vmem:[%s338 + $0x4] sm:$0xf]
      %v385 = vld [vmem:[%s338 + $0x8] sm:$0xf]
      %v386 = vld [vmem:[%s338 + $0xc] sm:$0xf]
      %s387 = scalar_lea.vmem [#allocation2], 4
      %vm388 = vcmask 519168
      %389 = vst.msk [vmem:[%s387] sm:$0xf] %vm388, %v383
      %390 = vst.msk [vmem:[%s387 + $0x4] sm:$0xf] %vm388, %v384
      %391 = vst.msk [vmem:[%s387 + $0x8] sm:$0xf] %vm388, %v385
      %392 = vst.msk [vmem:[%s387 + $0xc] sm:$0xf] %vm388, %v386
      %p393 = scmp.eq.s32.totalorder %s21, 0
      // Predicated region
      $region41: #{global_feature_extractor.4} parent=39 // pred_check
        %p394 = pneg %p393
      $region42: #{global_feature_extractor.4} parent=39 // pred_check_branch
        %396 = sbr.rel (%p394) target = $region44
      $region43: #{global_feature_extractor.4} parent=39 // pred_region
        %397 = vst.msk [vmem:[#allocation2] sm:$0xf] %vm388, 0
      $region44: #{global_feature_extractor.4} parent=39 // pred_fallthru
        _
      %p398 = scmp.gt.s32.totalorder %s21, 0
      // Predicated region
      $region45: #{global_feature_extractor.4} parent=39 // pred_check
        %p399 = pneg %p398
      $region46: #{global_feature_extractor.4} parent=39 // pred_check_branch
        %401 = sbr.rel (%p399) target = $region48
      $region47: #{global_feature_extractor.4} parent=39 // pred_region
        %v402 = vld [vmem:[%s351] sm:$0xf]
        %403 = vst.msk [vmem:[#allocation2] sm:$0xf] %vm388, %v402
      $region48: #{global_feature_extractor.4} parent=39 // pred_fallthru
        _
      %p404 = scmp.eq.s32.totalorder %s21, 1
      // Predicated region
      $region49: #{global_feature_extractor.4} parent=39 // pred_check
        %p405 = pneg %p404
      $region50: #{global_feature_extractor.4} parent=39 // pred_check_branch
        %407 = sbr.rel (%p405) target = $region52
      $region51: #{global_feature_extractor.4} parent=39 // pred_region
        %s408 = scalar_lea.vmem [#allocation2], 20
        %409 = vst.msk [vmem:[%s408] sm:$0xf] %vm388, 0
      $region52: #{global_feature_extractor.4} parent=39 // pred_fallthru
        _
      %p410 = scmp.lt.s32.totalorder %s21, 1
      // Predicated region
      $region53: #{global_feature_extractor.4} parent=39 // pred_check
        %p411 = pneg %p410
      $region54: #{global_feature_extractor.4} parent=39 // pred_check_branch
        %413 = sbr.rel (%p411) target = $region56
      $region55: #{global_feature_extractor.4} parent=39 // pred_region
        %v414 = vld [vmem:[%s367] sm:$0xf]
        %s415 = scalar_lea.vmem [#allocation2], 20
        %416 = vst.msk [vmem:[%s415] sm:$0xf] %vm388, %v414
      $region56: #{global_feature_extractor.4} parent=39 // pred_fallthru
        _
      %v417 = vld [vmem:[#allocation2] sm:$0xf]
      %v418 = vld [vmem:[#allocation2 + $0x4] sm:$0xf]
      %v419 = vld [vmem:[#allocation2 + $0x8] sm:$0xf]
      %v420 = vld [vmem:[#allocation2 + $0xc] sm:$0xf]
      %v421 = vld [vmem:[#allocation2 + $0x10] sm:$0xf]
      %v422 = vld [vmem:[#allocation2 + $0x14] sm:$0xf]
      %v429 = vunpack.c.l.b16 %v417
      %v430 = vunpack.c.l.b16 %v418
      %v431 = vunpack.c.l.b16 %v419
      %v432 = vunpack.c.l.b16 %v420
      %v433 = vunpack.c.l.b16 %v421
      %v434 = vunpack.c.l.b16 %v422
      %v435 = vpack.c.b16 %v429, %v429
      %v436 = vpack.c.b16 %v430, %v430
      %v437 = vpack.c.b16 %v431, %v431
      %v438 = vpack.c.b16 %v432, %v432
      %v439 = vpack.c.b16 %v433, %v433
      %v440 = vpack.c.b16 %v434, %v434
      %v442 = vshrl.u32 %v435, 16
      %v444 = vrot.slane %v442, 7
      %v445 = vshll.u32 %v435, 16
      %v447 = vor.u32 %v444, %v445
      %v449 = vshrl.u32 %v436, 16
      %v451 = vrot.slane %v449, 7
      %v452 = vshll.u32 %v436, 16
      %v454 = vor.u32 %v451, %v452
      %v456 = vshrl.u32 %v437, 16
      %v458 = vrot.slane %v456, 7
      %v459 = vshll.u32 %v437, 16
      %v461 = vor.u32 %v458, %v459
      %v463 = vshrl.u32 %v438, 16
      %v465 = vrot.slane %v463, 7
      %v466 = vshll.u32 %v438, 16
      %v468 = vor.u32 %v465, %v466
      %v470 = vshrl.u32 %v439, 16
      %v472 = vrot.slane %v470, 7
      %v473 = vshll.u32 %v439, 16
      %v475 = vor.u32 %v472, %v473
      %v477 = vshrl.u32 %v440, 16
      %v479 = vrot.slane %v477, 7
      %v480 = vshll.u32 %v440, 16
      %v482 = vor.u32 %v479, %v480
      %vm489 = vcmask 1040384
      %vm490 = vsmask.f32 256
      %vm491 = vmand %vm489, %vm490
      %v492 = vsel %vm491, 0, %v447
      %v493 = vsel %vm491, 0, %v454
      %v494 = vsel %vm491, 0, %v461
      %v495 = vsel %vm491, 0, %v468
      %v496 = vsel %vm491, 0, %v475
      %v497 = vsel %vm491, 0, %v482
      %vm498 = vcmask 1044480
      %vm499 = vsmask.f32 4352
      %vm500 = vmand %vm498, %vm499
      %v501 = vsel %vm500, %v492, 0
      %v502 = vsel %vm500, %v493, 0
      %v503 = vsel %vm500, %v494, 0
      %v504 = vsel %vm500, %v495, 0
      %v505 = vsel %vm500, %v496, 0
      %v506 = vsel %vm500, %v497, 0
      %v508 = vshrl.u32 %v501, 16
      %v510 = vshll.u32 %v501, 16
      %v512 = vrot.slane %v510, 1
      %v513 = vor.u32 %v508, %v512
      %v515 = vshrl.u32 %v502, 16
      %v517 = vshll.u32 %v502, 16
      %v519 = vrot.slane %v517, 1
      %v520 = vor.u32 %v515, %v519
      %v522 = vshrl.u32 %v503, 16
      %v524 = vshll.u32 %v503, 16
      %v526 = vrot.slane %v524, 1
      %v527 = vor.u32 %v522, %v526
      %v529 = vshrl.u32 %v504, 16
      %v531 = vshll.u32 %v504, 16
      %v533 = vrot.slane %v531, 1
      %v534 = vor.u32 %v529, %v533
      %v536 = vshrl.u32 %v505, 16
      %v538 = vshll.u32 %v505, 16
      %v540 = vrot.slane %v538, 1
      %v541 = vor.u32 %v536, %v540
      %v543 = vshrl.u32 %v506, 16
      %v545 = vshll.u32 %v506, 16
      %v547 = vrot.slane %v545, 1
      %v548 = vor.u32 %v543, %v547
      %549 = vrot.lane.b32.xlu0 %v513, 64
      %v550 = vpop.permute.xlu0 %549
      %551 = vrot.lane.b32.xlu0 %v520, 64
      %v552 = vpop.permute.xlu0 %551
      %553 = vrot.lane.b32.xlu0 %v527, 64
      %v554 = vpop.permute.xlu0 %553
      %555 = vrot.lane.b32.xlu0 %v534, 64
      %v556 = vpop.permute.xlu0 %555
      %557 = vrot.lane.b32.xlu0 %v541, 64
      %v558 = vpop.permute.xlu0 %557
      %559 = vrot.lane.b32.xlu0 %v548, 64
      %v560 = vpop.permute.xlu0 %559
      %v567 = vrot.slane %v501, 1
      %v568 = vrot.slane %v502, 1
      %v569 = vrot.slane %v503, 1
      %v570 = vrot.slane %v504, 1
      %v571 = vrot.slane %v505, 1
      %v572 = vrot.slane %v506, 1
      %vm573 = vcmask 523264
      %v575 = vsel %vm573, %v501, %v550
      %v577 = vsel %vm573, %v502, %v552
      %v579 = vsel %vm573, %v503, %v554
      %v581 = vsel %vm573, %v504, %v556
      %v583 = vsel %vm573, %v505, %v558
      %v585 = vsel %vm573, %v506, %v560
      %v590 = vunpack.c.l.b16 %v575
      %v591 = vunpack.c.l.b16 %v567
      %v592 = vunpack.c.l.b16 %v577
      %v593 = vunpack.c.l.b16 %v568
      %v594 = vunpack.c.l.b16 %v579
      %v595 = vunpack.c.l.b16 %v569
      %v596 = vunpack.c.l.b16 %v581
      %v597 = vunpack.c.l.b16 %v570
      %v598 = vld [vmem:[%s3] sm:$0xf]
      %v599 = vld [vmem:[%s3 + $0x4] sm:$0xf]
      %v600 = vld [vmem:[%s3 + $0x8] sm:$0xf]
      %v601 = vld [vmem:[%s3 + $0xc] sm:$0xf]
      %v602 = vld [vmem:[%s3 + $0x10] sm:$0xf]
      %v603 = vld [vmem:[%s3 + $0x14] sm:$0xf]
      %v604 = vld [vmem:[%s3 + $0x18] sm:$0xf]
      %v605 = vld [vmem:[%s3 + $0x1c] sm:$0xf]
      %v606 = vld [vmem:[%s3 + $0x20] sm:$0xf]
      %v607 = vld [vmem:[%s3 + $0x24] sm:$0xf]
      %v608 = vld [vmem:[%s3 + $0x28] sm:$0xf]
      %v609 = vld [vmem:[%s3 + $0x2c] sm:$0xf]
      %v610 = vld [vmem:[%s3 + $0x30] sm:$0xf]
      %v611 = vld [vmem:[%s3 + $0x34] sm:$0xf]
      %v612 = vld [vmem:[%s3 + $0x38] sm:$0xf]
      %v613 = vld [vmem:[%s3 + $0x3c] sm:$0xf]
      %v614 = vld [vmem:[%s3 + $0x40] sm:$0xf]
      %v615 = vld [vmem:[%s3 + $0x44] sm:$0xf]
      %v616 = vld [vmem:[%s3 + $0x48] sm:$0xf]
      %v617 = vld [vmem:[%s3 + $0x4c] sm:$0xf]
      %v618 = vld [vmem:[%s3 + $0x50] sm:$0xf]
      %v619 = vld [vmem:[%s3 + $0x54] sm:$0xf]
      %v620 = vld [vmem:[%s3 + $0x58] sm:$0xf]
      %v621 = vld [vmem:[%s3 + $0x5c] sm:$0xf]
      %v623 = vunpack.c.l.b16 %v583
      %v624 = vunpack.c.l.b16 %v571
      %s625 = scalar_lea.vmem %s3, 96
      %v626 = vld [vmem:[%s625] sm:$0xf]
      %v627 = vld [vmem:[%s625 + $0x4] sm:$0xf]
      %v628 = vld [vmem:[%s625 + $0x8] sm:$0xf]
      %v629 = vld [vmem:[%s625 + $0xc] sm:$0xf]
      %v630 = vld [vmem:[%s625 + $0x10] sm:$0xf]
      %v631 = vld [vmem:[%s625 + $0x14] sm:$0xf]
      %v632 = vld [vmem:[%s625 + $0x18] sm:$0xf]
      %v633 = vld [vmem:[%s625 + $0x1c] sm:$0xf]
      %v634 = vld [vmem:[%s625 + $0x20] sm:$0xf]
      %v635 = vld [vmem:[%s625 + $0x24] sm:$0xf]
      %v636 = vld [vmem:[%s625 + $0x28] sm:$0xf]
      %v637 = vld [vmem:[%s625 + $0x2c] sm:$0xf]
      %v638 = vld [vmem:[%s625 + $0x30] sm:$0xf]
      %v639 = vld [vmem:[%s625 + $0x34] sm:$0xf]
      %v640 = vld [vmem:[%s625 + $0x38] sm:$0xf]
      %v641 = vld [vmem:[%s625 + $0x3c] sm:$0xf]
      %v642 = vld [vmem:[%s625 + $0x40] sm:$0xf]
      %v643 = vld [vmem:[%s625 + $0x44] sm:$0xf]
      %v644 = vld [vmem:[%s625 + $0x48] sm:$0xf]
      %v645 = vld [vmem:[%s625 + $0x4c] sm:$0xf]
      %v646 = vld [vmem:[%s625 + $0x50] sm:$0xf]
      %v647 = vld [vmem:[%s625 + $0x54] sm:$0xf]
      %v648 = vld [vmem:[%s625 + $0x58] sm:$0xf]
      %v649 = vld [vmem:[%s625 + $0x5c] sm:$0xf]
      %v650 = vpack.c.b16 %v594, %v592
      %v651 = vpack.c.b16 %v595, %v593
      %v652 = vpack.c.b16 %v623, %v596
      %v653 = vpack.c.b16 %v624, %v597
      %v680 = vunpack.c.l.b16 %v626
      %v681 = vunpack.c.l.b16 %v627
      %v682 = vunpack.c.l.b16 %v628
      %v683 = vunpack.c.l.b16 %v629
      %v684 = vunpack.c.l.b16 %v630
      %v685 = vunpack.c.l.b16 %v631
      %v686 = vunpack.c.l.b16 %v632
      %v687 = vunpack.c.l.b16 %v633
      %v688 = vunpack.c.l.b16 %v634
      %v689 = vunpack.c.l.b16 %v635
      %v690 = vunpack.c.l.b16 %v636
      %v691 = vunpack.c.l.b16 %v637
      %v692 = vunpack.c.l.b16 %v638
      %v693 = vunpack.c.l.b16 %v639
      %v694 = vunpack.c.l.b16 %v640
      %v695 = vunpack.c.l.b16 %v641
      %v696 = vunpack.c.l.b16 %v642
      %v697 = vunpack.c.l.b16 %v643
      %v698 = vunpack.c.l.b16 %v644
      %v699 = vunpack.c.l.b16 %v645
      %v700 = vunpack.c.l.b16 %v646
      %v701 = vunpack.c.l.b16 %v647
      %v702 = vunpack.c.l.b16 %v648
      %v703 = vunpack.c.l.b16 %v649
      %v704 = vpack.c.b16 %v681, %v680
      %v705 = vpack.c.b16 %v683, %v682
      %v706 = vpack.c.b16 %v685, %v684
      %v707 = vpack.c.b16 %v687, %v686
      %v708 = vpack.c.b16 %v689, %v688
      %v709 = vpack.c.b16 %v691, %v690
      %v710 = vpack.c.b16 %v693, %v692
      %v711 = vpack.c.b16 %v695, %v694
      %v712 = vpack.c.b16 %v697, %v696
      %v713 = vpack.c.b16 %v699, %v698
      %v714 = vpack.c.b16 %v701, %v700
      %v715 = vpack.c.b16 %v703, %v702
      %v729 = vsel %vm573, %v651, 0
      %v732 = vsel %vm573, %v653, 0
      %734 = vmatprep.subr.bf16.mxu0 0
      %735 = vmatpush1.bf16.msra.mxu0 %v704
      %736 = vmatprep.subr.bf16.mxu0 0
      %737 = vmatpush1.bf16.msra.mxu0 %v705
      %738 = vmatprep.subr.bf16.mxu0 0
      %739 = vmatpush1.bf16.msra.mxu0 %v706
      %740 = vmatprep.subr.bf16.mxu0 0
      %741 = vmatpush1.bf16.msra.mxu0 %v707
      %742 = vmatprep.subr.bf16.mxu0 0
      %743 = vmatpush1.bf16.msra.mxu0 %v708
      %744 = vmatprep.subr.bf16.mxu0 0
      %745 = vmatpush1.bf16.msra.mxu0 %v709
      %746 = vmatprep.subr.bf16.mxu0 0
      %747 = vmatpush1.bf16.msra.mxu0 %v710
      %748 = vmatprep.subr.bf16.mxu0 0
      %749 = vmatpush1.bf16.msra.mxu0 %v711
      %750 = vmatprep.subr.bf16.mxu0 0
      %751 = vmatpush1.bf16.msra.mxu0 %v712
      %752 = vmatprep.subr.bf16.mxu0 0
      %753 = vmatpush1.bf16.msra.mxu0 %v713
      %754 = vmatprep.subr.bf16.mxu0 0
      %755 = vmatpush1.bf16.msra.mxu0 %v714
      %756 = vmatprep.subr.bf16.mxu0 0
      %757 = vmatpush1.bf16.msra.mxu0 %v715
      %758 = vmatprep.subr.bf16.mxu0 0
      %759 = vmatpush1.bf16.msra.mxu0 0
      %760 = vmatprep.subr.bf16.mxu0 0
      %761 = vmatpush1.bf16.msra.mxu0 0
      %762 = vmatprep.subr.bf16.mxu0 0
      %763 = vmatpush1.bf16.msra.mxu0 0
      %764 = vmatprep.subr.bf16.mxu0 0
      %765 = vmatpush1.bf16.msra.mxu0 0
      %766 = vmatprep.mubr.bf16.mxu0 %v729
      %767 = vmatmul.mubr.bf16.gmra.mrb[0].mxu0 %v650
      %v768 = vpop.f32.mrb[0].mxu0
      %v769 = vadd.f32 0.0, %v768
      %v770 = vpop.f32.mrb[0].mxu0
      %v771 = vpop.f32.mrb[0].mxu0
      %v772 = vadd.f32 0.0, %v771
      %v773 = vpop.f32.mrb[0].mxu0
      %774 = vmatprep.mubr.bf16.mxu0 %v732
      %775 = vmatmul.mubr.bf16.gmra.mrb[0].mxu0 %v652
      %v776 = vpop.f32.mrb[0].mxu0
      %v777 = vadd.f32 0.0, %v776
      %v778 = vpop.f32.mrb[0].mxu0
      %v779 = vpop.f32.mrb[0].mxu0
      %v780 = vadd.f32 0.0, %v779
      %v781 = vpop.f32.mrb[0].mxu0
      %782 = vdwg.mxu0
      %v783 = vpack.c.b16 %v592, %v590
      %v784 = vpack.c.b16 %v593, %v591
      %v785 = vpack.c.b16 %v596, %v594
      %v786 = vpack.c.b16 %v597, %v595
      %v813 = vunpack.c.l.b16 %v598
      %v814 = vunpack.c.l.b16 %v599
      %v815 = vunpack.c.l.b16 %v600
      %v816 = vunpack.c.l.b16 %v601
      %v817 = vunpack.c.l.b16 %v602
      %v818 = vunpack.c.l.b16 %v603
      %v819 = vunpack.c.l.b16 %v604
      %v820 = vunpack.c.l.b16 %v605
      %v821 = vunpack.c.l.b16 %v606
      %v822 = vunpack.c.l.b16 %v607
      %v823 = vunpack.c.l.b16 %v608
      %v824 = vunpack.c.l.b16 %v609
      %v825 = vunpack.c.l.b16 %v610
      %v826 = vunpack.c.l.b16 %v611
      %v827 = vunpack.c.l.b16 %v612
      %v828 = vunpack.c.l.b16 %v613
      %v829 = vunpack.c.l.b16 %v614
      %v830 = vunpack.c.l.b16 %v615
      %v831 = vunpack.c.l.b16 %v616
      %v832 = vunpack.c.l.b16 %v617
      %v833 = vunpack.c.l.b16 %v618
      %v834 = vunpack.c.l.b16 %v619
      %v835 = vunpack.c.l.b16 %v620
      %v836 = vunpack.c.l.b16 %v621
      %v837 = vpack.c.b16 %v814, %v813
      %v838 = vpack.c.b16 %v816, %v815
      %v839 = vpack.c.b16 %v818, %v817
      %v840 = vpack.c.b16 %v820, %v819
      %v841 = vpack.c.b16 %v822, %v821
      %v842 = vpack.c.b16 %v824, %v823
      %v843 = vpack.c.b16 %v826, %v825
      %v844 = vpack.c.b16 %v828, %v827
      %v845 = vpack.c.b16 %v830, %v829
      %v846 = vpack.c.b16 %v832, %v831
      %v847 = vpack.c.b16 %v834, %v833
      %v848 = vpack.c.b16 %v836, %v835
      %v862 = vsel %vm573, %v784, 0
      %v865 = vsel %vm573, %v786, 0
      %867 = vmatprep.subr.bf16.mxu0 0
      %868 = vmatpush1.bf16.msra.mxu0 %v837
      %869 = vmatprep.subr.bf16.mxu0 0
      %870 = vmatpush1.bf16.msra.mxu0 %v838
      %871 = vmatprep.subr.bf16.mxu0 0
      %872 = vmatpush1.bf16.msra.mxu0 %v839
      %873 = vmatprep.subr.bf16.mxu0 0
      %874 = vmatpush1.bf16.msra.mxu0 %v840
      %875 = vmatprep.subr.bf16.mxu0 0
      %876 = vmatpush1.bf16.msra.mxu0 %v841
      %877 = vmatprep.subr.bf16.mxu0 0
      %878 = vmatpush1.bf16.msra.mxu0 %v842
      %879 = vmatprep.subr.bf16.mxu0 0
      %880 = vmatpush1.bf16.msra.mxu0 %v843
      %881 = vmatprep.subr.bf16.mxu0 0
      %882 = vmatpush1.bf16.msra.mxu0 %v844
      %883 = vmatprep.subr.bf16.mxu0 0
      %884 = vmatpush1.bf16.msra.mxu0 %v845
      %885 = vmatprep.subr.bf16.mxu0 0
      %886 = vmatpush1.bf16.msra.mxu0 %v846
      %887 = vmatprep.subr.bf16.mxu0 0
      %888 = vmatpush1.bf16.msra.mxu0 %v847
      %889 = vmatprep.subr.bf16.mxu0 0
      %890 = vmatpush1.bf16.msra.mxu0 %v848
      %891 = vmatprep.subr.bf16.mxu0 0
      %892 = vmatpush1.bf16.msra.mxu0 0
      %893 = vmatprep.subr.bf16.mxu0 0
      %894 = vmatpush1.bf16.msra.mxu0 0
      %895 = vmatprep.subr.bf16.mxu0 0
      %896 = vmatpush1.bf16.msra.mxu0 0
      %897 = vmatprep.subr.bf16.mxu0 0
      %898 = vmatpush1.bf16.msra.mxu0 0
      %899 = vmatprep.mubr.bf16.mxu0 %v862
      %900 = vmatmul.mubr.bf16.gmra.mrb[0].mxu0 %v783
      %v901 = vpop.f32.mrb[0].mxu0
      %v902 = vadd.f32 %v769, %v901
      %v903 = vpop.f32.mrb[0].mxu0
      %v904 = vpop.f32.mrb[0].mxu0
      %v905 = vadd.f32 %v772, %v904
      %v906 = vpop.f32.mrb[0].mxu0
      %907 = vmatprep.mubr.bf16.mxu0 %v865
      %908 = vmatmul.mubr.bf16.gmra.mrb[0].mxu0 %v785
      %v909 = vpop.f32.mrb[0].mxu0
      %v910 = vadd.f32 %v777, %v909
      %v911 = vpop.f32.mrb[0].mxu0
      %v912 = vpop.f32.mrb[0].mxu0
      %v913 = vadd.f32 %v780, %v912
      %v914 = vpop.f32.mrb[0].mxu0
      %915 = vdwg.mxu0
      %v917 = vunpack.c.l.b16 %v585
      %v918 = vunpack.c.l.b16 %v572
      %s919 = scalar_lea.vmem %s3, 192
      %v920 = vld [vmem:[%s919] sm:$0xf]
      %v921 = vld [vmem:[%s919 + $0x4] sm:$0xf]
      %v922 = vld [vmem:[%s919 + $0x8] sm:$0xf]
      %v923 = vld [vmem:[%s919 + $0xc] sm:$0xf]
      %v924 = vld [vmem:[%s919 + $0x10] sm:$0xf]
      %v925 = vld [vmem:[%s919 + $0x14] sm:$0xf]
      %v926 = vld [vmem:[%s919 + $0x18] sm:$0xf]
      %v927 = vld [vmem:[%s919 + $0x1c] sm:$0xf]
      %v928 = vld [vmem:[%s919 + $0x20] sm:$0xf]
      %v929 = vld [vmem:[%s919 + $0x24] sm:$0xf]
      %v930 = vld [vmem:[%s919 + $0x28] sm:$0xf]
      %v931 = vld [vmem:[%s919 + $0x2c] sm:$0xf]
      %v932 = vld [vmem:[%s919 + $0x30] sm:$0xf]
      %v933 = vld [vmem:[%s919 + $0x34] sm:$0xf]
      %v934 = vld [vmem:[%s919 + $0x38] sm:$0xf]
      %v935 = vld [vmem:[%s919 + $0x3c] sm:$0xf]
      %v936 = vld [vmem:[%s919 + $0x40] sm:$0xf]
      %v937 = vld [vmem:[%s919 + $0x44] sm:$0xf]
      %v938 = vld [vmem:[%s919 + $0x48] sm:$0xf]
      %v939 = vld [vmem:[%s919 + $0x4c] sm:$0xf]
      %v940 = vld [vmem:[%s919 + $0x50] sm:$0xf]
      %v941 = vld [vmem:[%s919 + $0x54] sm:$0xf]
      %v942 = vld [vmem:[%s919 + $0x58] sm:$0xf]
      %v943 = vld [vmem:[%s919 + $0x5c] sm:$0xf]
      %v944 = vpack.c.b16 %v917, %v623
      %v945 = vpack.c.b16 %v918, %v624
      %v971 = vunpack.c.l.b16 %v920
      %v972 = vunpack.c.l.b16 %v921
      %v973 = vunpack.c.l.b16 %v922
      %v974 = vunpack.c.l.b16 %v923
      %v975 = vunpack.c.l.b16 %v924
      %v976 = vunpack.c.l.b16 %v925
      %v977 = vunpack.c.l.b16 %v926
      %v978 = vunpack.c.l.b16 %v927
      %v979 = vunpack.c.l.b16 %v928
      %v980 = vunpack.c.l.b16 %v929
      %v981 = vunpack.c.l.b16 %v930
      %v982 = vunpack.c.l.b16 %v931
      %v983 = vunpack.c.l.b16 %v932
      %v984 = vunpack.c.l.b16 %v933
      %v985 = vunpack.c.l.b16 %v934
      %v986 = vunpack.c.l.b16 %v935
      %v987 = vunpack.c.l.b16 %v936
      %v988 = vunpack.c.l.b16 %v937
      %v989 = vunpack.c.l.b16 %v938
      %v990 = vunpack.c.l.b16 %v939
      %v991 = vunpack.c.l.b16 %v940
      %v992 = vunpack.c.l.b16 %v941
      %v993 = vunpack.c.l.b16 %v942
      %v994 = vunpack.c.l.b16 %v943
      %v995 = vpack.c.b16 %v972, %v971
      %v996 = vpack.c.b16 %v974, %v973
      %v997 = vpack.c.b16 %v976, %v975
      %v998 = vpack.c.b16 %v978, %v977
      %v999 = vpack.c.b16 %v980, %v979
      %v1000 = vpack.c.b16 %v982, %v981
      %v1001 = vpack.c.b16 %v984, %v983
      %v1002 = vpack.c.b16 %v986, %v985
      %v1003 = vpack.c.b16 %v988, %v987
      %v1004 = vpack.c.b16 %v990, %v989
      %v1005 = vpack.c.b16 %v992, %v991
      %v1006 = vpack.c.b16 %v994, %v993
      %v1020 = vsel %vm573, %v945, 0
      %1022 = vmatprep.subr.bf16.mxu0 0
      %1023 = vmatpush1.bf16.msra.mxu0 %v995
      %1024 = vmatprep.subr.bf16.mxu0 0
      %1025 = vmatpush1.bf16.msra.mxu0 %v996
      %1026 = vmatprep.subr.bf16.mxu0 0
      %1027 = vmatpush1.bf16.msra.mxu0 %v997
      %1028 = vmatprep.subr.bf16.mxu0 0
      %1029 = vmatpush1.bf16.msra.mxu0 %v998
      %1030 = vmatprep.subr.bf16.mxu0 0
      %1031 = vmatpush1.bf16.msra.mxu0 %v999
      %1032 = vmatprep.subr.bf16.mxu0 0
      %1033 = vmatpush1.bf16.msra.mxu0 %v1000
      %1034 = vmatprep.subr.bf16.mxu0 0
      %1035 = vmatpush1.bf16.msra.mxu0 %v1001
      %1036 = vmatprep.subr.bf16.mxu0 0
      %1037 = vmatpush1.bf16.msra.mxu0 %v1002
      %1038 = vmatprep.subr.bf16.mxu0 0
      %1039 = vmatpush1.bf16.msra.mxu0 %v1003
      %1040 = vmatprep.subr.bf16.mxu0 0
      %1041 = vmatpush1.bf16.msra.mxu0 %v1004
      %1042 = vmatprep.subr.bf16.mxu0 0
      %1043 = vmatpush1.bf16.msra.mxu0 %v1005
      %1044 = vmatprep.subr.bf16.mxu0 0
      %1045 = vmatpush1.bf16.msra.mxu0 %v1006
      %1046 = vmatprep.subr.bf16.mxu0 0
      %1047 = vmatpush1.bf16.msra.mxu0 0
      %1048 = vmatprep.subr.bf16.mxu0 0
      %1049 = vmatpush1.bf16.msra.mxu0 0
      %1050 = vmatprep.subr.bf16.mxu0 0
      %1051 = vmatpush1.bf16.msra.mxu0 0
      %1052 = vmatprep.subr.bf16.mxu0 0
      %1053 = vmatpush1.bf16.msra.mxu0 0
      %1054 = vmatprep.mubr.bf16.mxu0 %v865
      %1055 = vmatmul.mubr.bf16.gmra.mrb[0].mxu0 %v785
      %v1056 = vpop.f32.mrb[0].mxu0
      %v1057 = vadd.f32 0.0, %v1056
      %v1058 = vpop.f32.mrb[0].mxu0
      %v1059 = vpop.f32.mrb[0].mxu0
      %v1060 = vadd.f32 0.0, %v1059
      %v1061 = vpop.f32.mrb[0].mxu0
      %1062 = vmatprep.mubr.bf16.mxu0 %v1020
      %1063 = vmatmul.mubr.bf16.gmra.mrb[0].mxu0 %v944
      %v1064 = vpop.f32.mrb[0].mxu0
      %v1065 = vadd.f32 0.0, %v1064
      %v1066 = vpop.f32.mrb[0].mxu0
      %v1067 = vpop.f32.mrb[0].mxu0
      %v1068 = vadd.f32 0.0, %v1067
      %v1069 = vpop.f32.mrb[0].mxu0
      %1070 = vdwg.mxu0
      %v1071 = vadd.f32 %v902, %v1057
      %v1072 = vadd.f32 %v905, %v1060
      %v1073 = vadd.f32 %v910, %v1065
      %v1074 = vadd.f32 %v913, %v1068
      %v1075 = vld [vmem:[%s4] sm:$0x1]
      %v1077 = vlaneseq
      %v1078 = vshrl.u32 %v1077, 7
      %v1079 = vsub.s32 0, %v1078
      %v1080 = vrot.slane %v1075, %v1079
      %v1082 = vadd.f32 %v1071, %v1080
      %v1083 = vadd.f32 %v1072, %v1080
      %v1084 = vadd.f32 %v1073, %v1080
      %v1085 = vadd.f32 %v1074, %v1080
      %v1086 = vmax.f32 %v1082, 0.0
      %v1087 = vmax.f32 %v1083, 0.0
      %v1088 = vmax.f32 %v1084, 0.0
      %v1089 = vmax.f32 %v1085, 0.0
      %v1090 = vpack.c.bf16 %v1086, %v1086
      %v1091 = vpack.c.bf16 %v1087, %v1087
      %v1092 = vpack.c.bf16 %v1088, %v1088
      %v1093 = vpack.c.bf16 %v1089, %v1089
      %1094 = vst [vmem:[%s380] sm:$0xf] %v1090
      %1095 = vst [vmem:[%s380 + $0x4] sm:$0xf] %v1091
      %1096 = vst [vmem:[%s380 + $0x8] sm:$0xf] %v1092
      %1097 = vst [vmem:[%s380 + $0xc] sm:$0xf] %v1093
      %s1098 = smul.u32 4, %s21
      %p1099 = scmp.lt.s32.totalorder %s20, 1
      %s1100 = scalar_select %p1099, %s20, 1
      %p1101 = scmp.lt.s32.totalorder %s1098, 7
      %s1102 = scalar_select %p1101, %s1098, 7
      %s1103 = smul.addr %s1100, 8
      %s1104 = sadd.s32 %s1102, %s1103
      %s1105 = smul.addr %s1104, 4
      %s1106 = scalar_lea.vmem %s5, %s1105
      // Predicated region
      $region57: #{global_feature_extractor.4} parent=39 // pred_check
        %p1107 = pneg %p190
      $region58: #{global_feature_extractor.4} parent=39 // pred_check_branch
        %1109 = sbr.rel (%p1107) target = $region60
      $region59: #{global_feature_extractor.4} parent=39 // pred_region
        %s1110 = smul.u32 4, %s21
      $region60: #{global_feature_extractor.4} parent=39 // pred_fallthru
        _
    $region40: #{global_feature_extractor.4} parent=5 // pred_fallthru
      _
    %p1111 = scmp.le.s32.totalorder 2, %s11
    // Predicated region
    $region61: #{global_feature_extractor.4} parent=5 // pred_check
      %p1112 = pneg %p1111
    $region62: #{global_feature_extractor.4} parent=5 // pred_check_branch
      %1114 = sbr.rel (%p1112) target = $region64
    $region63: #{global_feature_extractor.4} parent=5 // pred_region
      %s1115 = ssub.s32 %s11, 2
      // Predicated region
      $region65: #{global_feature_extractor.4} parent=63 // pred_check
        %p1116 = pneg %p196
      $region66: #{global_feature_extractor.4} parent=63 // pred_check_branch
        %1118 = sbr.rel (%p1116) target = $region68
      $region67: #{global_feature_extractor.4} parent=63 // pred_region
        %s1119 = smul.u32 4, %s23
        %p1120 = scmp.lt.s32.totalorder %s22, 1
        %s1121 = scalar_select %p1120, %s22, 1
        %p1122 = scmp.lt.s32.totalorder %s1119, 7
        %s1123 = scalar_select %p1122, %s1119, 7
        %s1124 = smul.addr %s1121, 8
        %s1125 = sadd.s32 %s1123, %s1124
        %s1126 = smul.addr %s1125, 4
        %s1127 = scalar_lea.vmem %s5, %s1126
      $region68: #{global_feature_extractor.4} parent=63 // pred_fallthru
        _
    $region64: #{global_feature_extractor.4} parent=5 // pred_fallthru
      _
  $region6: #{global_feature_extractor.4} parent=0 // loop_footer
    %s15 = sadd.s32 1, %s11
  $region7: #{global_feature_extractor.4} parent=0 // loop_footer_branch
    %10 = sbr.rel target = $region3
  $region8: #{global_feature_extractor.4} parent=0 // loop_exit
    _

// kernel: global_feature_extractor.5
$region0: #{global_feature_extractor.5}
  #allocation0 [shape = 'u32[]', space=smem, size = 0x4, offset = 0x4, fixed_abs, tag = 'smem constant byte address 0x4 - core index']
  #allocation1 [shape = 'u32[144,128]{1,0:T(1,128)}', space=vmem, size = 0x12000, scoped, tag = 'internal scratch']
  #allocation2 [shape = 'bf16[6,8,128]{2,1,0:T(8,128)(2,1)}', space=vmem, size = 0x3000, scoped, tag = 'scratch operand']
  %s0 = inlined_call_operand.vmem [shape: bf16[2,8,8,128], index: 0, kind: input, shape index: {}, may-alias: {0,1,2}]
  %s1 = inlined_call_operand.vmem [shape: bf16[2,8,8,128], index: 1, kind: input, shape index: {}, may-alias: {0,1,2}]
  %s2 = inlined_call_operand.vmem [shape: bf16[2,8,8,128], index: 2, kind: input, shape index: {}, may-alias: {0,1,2}]
  %s3 = inlined_call_operand.vmem [shape: bf16[3,384,128], index: 3, kind: input, shape index: {}]
  %s4 = inlined_call_operand.vmem [shape: f32[1,128], index: 4, kind: input, shape index: {}]
  %s5 = inlined_call_operand.hbm [shape: f32[2,8,8,128], index: 5, kind: output, shape index: {}]
  %s6 = sld [smem:[#allocation0]]
  $region69: #{global_feature_extractor.5} parent=0
    _
  %s8 = ssub.s32 1, %s6
  %s9 = scalar_select 0, %s8, %s6
  $region1: #{global_feature_extractor.5} parent=0
    #allocation3 [shape = 'u8[32768]{0}', space=vmem, size = 0x8000, scoped, tag = 'output window, operand 0']
    #allocation4 [shape = 's32[2]{0}', space=sflag, size = 0x8, scoped, tag = 'scoped memory for global_feature_extractor.5']
    %10 = vsyncpa [#allocation4], 0
    %s11 = scalar_lea.sflag [#allocation4], 1
    %12 = vsyncpa %s11, 0
    loop: start=0, step=1, limit=6
    $region2: #{global_feature_extractor.5} parent=1 // loop_pre_header
      _
    $region3: #{global_feature_extractor.5} parent=1 // loop_header
      %s14 = sphi 0, %s18
      %p15 = scmp.ge.s32.totalorder %s14, 6
      %s21 = sphi 0, %s33
      %s22 = sphi 0, %s29
      %s23 = sphi 0, %s21
      %s24 = sphi 0, %s22
      %s25 = sphi 0, %s23
      %s26 = sphi 0, %s24
      %s38 = sphi 0, %s40
      %s41 = sphi 0, %s38
      %s42 = sphi 0, %s41
      %s58 = sphi 0, %s42
      %s74 = sphi 0, %s76
      %s77 = sphi 0, %s74
      %s78 = sphi 0, %s77
      %s94 = sphi 0, %s78
      %s110 = sphi 0, %s112
      %s113 = sphi 0, %s110
      %s114 = sphi 0, %s113
      %s130 = sphi 0, %s114
      %s134 = sphi 0, %s134
      %s136 = sphi 0, %s134
      %s137 = sphi 0, %s136
      %s151 = sphi 0, %s137
      %s155 = sphi 0, %s155
      %s157 = sphi 0, %s155
      %s158 = sphi 0, %s157
      %s172 = sphi 0, %s158
      %s180 = sphi 0, %s182
      %s183 = sphi 0, %s180
      %s184 = sphi 0, %s183
      %s200 = sphi 0, %s184
    $region4: #{global_feature_extractor.5} parent=1 // loop_header_branch
      %17 = sbr.rel (%p15) target = $region8
    $region5: #{global_feature_extractor.5} parent=1 // loop_body
      %s19 = ssub.s32 %s14, 1
      %s20 = ssub.s32 %s14, 2
      %s27 = sadd.s32 1, %s22
      %p28 = scmp.ge.s32.totalorder %s27, 2
      %s29 = scalar_select %p28, 0, %s27
      %s30 = sadd.s32 1, %s21
      %s31 = scalar_select %p28, %s30, %s21
      %p32 = scmp.ge.s32.totalorder %s31, 2
      %s33 = scalar_select %p32, 0, %s31
      %s34 = ssub.s32 %s21, %s33
      %s35 = ssub.s32 %s22, %s29
      %s36 = sor.u32 %s34, %s35
      %p37 = scmp.eq.s32.totalorder %s36, 0
      %s39 = sadd.s32 %s38, 1
      %s40 = scalar_select %p37, %s38, %s39
      %p43 = pneg %p37
      %p44 = scmp.eq.s32.totalorder %s14, 3
      %p45 = por %p43, %p44
      %p46 = scmp.ne.s32.totalorder %s38, %s41
      %p47 = scmp.eq.s32.totalorder %s14, 0
      %p48 = por %p46, %p47
      %p49 = scmp.ne.s32.totalorder %s38, %s41
      %p50 = scmp.eq.s32.totalorder %s19, 3
      %p51 = por %p49, %p50
      %p52 = scmp.ne.s32.totalorder %s41, %s42
      %p53 = scmp.eq.s32.totalorder %s19, 0
      %p54 = por %p52, %p53
      %p55 = scmp.ne.s32.totalorder %s41, %s42
      %p56 = scmp.eq.s32.totalorder %s20, 3
      %p57 = por %p55, %p56
      %p59 = scmp.ne.s32.totalorder %s42, %s58
      %p60 = scmp.eq.s32.totalorder %s20, 0
      %p61 = por %p59, %p60
      %s62 = smul.u32 %s22, 4
      %s63 = ssub.s32 %s62, 1
      %p64 = scmp.gt.s32.totalorder %s63, 0
      %s65 = scalar_select %p64, %s63, 0
      %s66 = smul.u32 %s29, 4
      %s67 = ssub.s32 %s66, 1
      %p68 = scmp.gt.s32.totalorder %s67, 0
      %s69 = scalar_select %p68, %s67, 0
      %s70 = ssub.s32 %s21, %s33
      %s71 = ssub.s32 %s65, %s69
      %s72 = sor.u32 %s70, %s71
      %p73 = scmp.eq.s32.totalorder %s72, 0
      %s75 = sadd.s32 %s74, 1
      %s76 = scalar_select %p73, %s74, %s75
      %p79 = pneg %p73
      %p80 = scmp.eq.s32.totalorder %s14, 3
      %p81 = por %p79, %p80
      %p82 = scmp.ne.s32.totalorder %s74, %s77
      %p83 = scmp.eq.s32.totalorder %s14, 0
      %p84 = por %p82, %p83
      %p85 = scmp.ne.s32.totalorder %s74, %s77
      %p86 = scmp.eq.s32.totalorder %s19, 3
      %p87 = por %p85, %p86
      %p88 = scmp.ne.s32.totalorder %s77, %s78
      %p89 = scmp.eq.s32.totalorder %s19, 0
      %p90 = por %p88, %p89
      %p91 = scmp.ne.s32.totalorder %s77, %s78
      %p92 = scmp.eq.s32.totalorder %s20, 3
      %p93 = por %p91, %p92
      %p95 = scmp.ne.s32.totalorder %s78, %s94
      %p96 = scmp.eq.s32.totalorder %s20, 0
      %p97 = por %p95, %p96
      %s98 = sadd.s32 %s22, 1
      %s99 = smul.u32 %s98, 4
      %p100 = scmp.lt.s32.totalorder %s99, 7
      %s101 = scalar_select %p100, %s99, 7
      %s102 = sadd.s32 %s29, 1
      %s103 = smul.u32 %s102, 4
      %p104 = scmp.lt.s32.totalorder %s103, 7
      %s105 = scalar_select %p104, %s103, 7
      %s106 = ssub.s32 %s21, %s33
      %s107 = ssub.s32 %s101, %s105
      %s108 = sor.u32 %s106, %s107
      %p109 = scmp.eq.s32.totalorder %s108, 0
      %s111 = sadd.s32 %s110, 1
      %s112 = scalar_select %p109, %s110, %s111
      %p115 = pneg %p109
      %p116 = scmp.eq.s32.totalorder %s14, 3
      %p117 = por %p115, %p116
      %p118 = scmp.ne.s32.totalorder %s110, %s113
      %p119 = scmp.eq.s32.totalorder %s14, 0
      %p120 = por %p118, %p119
      %p121 = scmp.ne.s32.totalorder %s110, %s113
      %p122 = scmp.eq.s32.totalorder %s19, 3
      %p123 = por %p121, %p122
      %p124 = scmp.ne.s32.totalorder %s113, %s114
      %p125 = scmp.eq.s32.totalorder %s19, 0
      %p126 = por %p124, %p125
      %p127 = scmp.ne.s32.totalorder %s113, %s114
      %p128 = scmp.eq.s32.totalorder %s20, 3
      %p129 = por %p127, %p128
      %p131 = scmp.ne.s32.totalorder %s114, %s130
      %p132 = scmp.eq.s32.totalorder %s20, 0
      %p133 = por %p131, %p132
      %s135 = sadd.s32 %s134, 1
      %p138 = scmp.eq.s32.totalorder %s14, 3
      %p139 = scmp.ne.s32.totalorder %s134, %s136
      %p140 = scmp.eq.s32.totalorder %s14, 0
      %p141 = por %p139, %p140
      %p142 = scmp.ne.s32.totalorder %s134, %s136
      %p143 = scmp.eq.s32.totalorder %s19, 3
      %p144 = por %p142, %p143
      %p145 = scmp.ne.s32.totalorder %s136, %s137
      %p146 = scmp.eq.s32.totalorder %s19, 0
      %p147 = por %p145, %p146
      %p148 = scmp.ne.s32.totalorder %s136, %s137
      %p149 = scmp.eq.s32.totalorder %s20, 3
      %p150 = por %p148, %p149
      %p152 = scmp.ne.s32.totalorder %s137, %s151
      %p153 = scmp.eq.s32.totalorder %s20, 0
      %p154 = por %p152, %p153
      %s156 = sadd.s32 %s155, 1
      %p159 = scmp.eq.s32.totalorder %s14, 3
      %p160 = scmp.ne.s32.totalorder %s155, %s157
      %p161 = scmp.eq.s32.totalorder %s14, 0
      %p162 = por %p160, %p161
      %p163 = scmp.ne.s32.totalorder %s155, %s157
      %p164 = scmp.eq.s32.totalorder %s19, 3
      %p165 = por %p163, %p164
      %p166 = scmp.ne.s32.totalorder %s157, %s158
      %p167 = scmp.eq.s32.totalorder %s19, 0
      %p168 = por %p166, %p167
      %p169 = scmp.ne.s32.totalorder %s157, %s158
      %p170 = scmp.eq.s32.totalorder %s20, 3
      %p171 = por %p169, %p170
      %p173 = scmp.ne.s32.totalorder %s158, %s172
      %p174 = scmp.eq.s32.totalorder %s20, 0
      %p175 = por %p173, %p174
      %s176 = ssub.s32 %s21, %s33
      %s177 = ssub.s32 %s22, %s29
      %s178 = sor.u32 %s176, %s177
      %p179 = scmp.eq.s32.totalorder %s178, 0
      %s181 = sadd.s32 %s180, 1
      %s182 = scalar_select %p179, %s180, %s181
      %p185 = pneg %p179
      %p186 = scmp.eq.s32.totalorder %s14, 3
      %p187 = por %p185, %p186
      %p188 = scmp.ne.s32.totalorder %s180, %s183
      %p189 = scmp.eq.s32.totalorder %s14, 0
      %p190 = por %p188, %p189
      %p191 = scmp.ne.s32.totalorder %s180, %s183
      %p192 = scmp.eq.s32.totalorder %s19, 3
      %p193 = por %p191, %p192
      %p194 = scmp.ne.s32.totalorder %s183, %s184
      %p195 = scmp.eq.s32.totalorder %s19, 0
      %p196 = por %p194, %p195
      %p197 = scmp.ne.s32.totalorder %s183, %s184
      %p198 = scmp.eq.s32.totalorder %s20, 3
      %p199 = por %p197, %p198
      %p201 = scmp.ne.s32.totalorder %s184, %s200
      %p202 = scmp.eq.s32.totalorder %s20, 0
      %p203 = por %p201, %p202
      %p204 = scmp.le.s32.totalorder 1, %s14
      %p205 = scmp.lt.s32.totalorder %s14, 5
      %p206 = pnand %p204, %p205
      %p207 = pneg %p206
      // Predicated region
      $region9: #{global_feature_extractor.5} parent=5 // pred_check
        _
      $region10: #{global_feature_extractor.5} parent=5 // pred_check_branch
        %209 = sbr.rel (%p206) target = $region12
      $region11: #{global_feature_extractor.5} parent=5 // pred_region
        %s210 = ssub.s32 %s14, 1
        // Predicated region
        $region13: #{global_feature_extractor.5} parent=11 // pred_check
          %p211 = pneg %p147
        $region14: #{global_feature_extractor.5} parent=11 // pred_check_branch
          %213 = sbr.rel (%p211) target = $region16
        $region15: #{global_feature_extractor.5} parent=11 // pred_region
          _
        $region16: #{global_feature_extractor.5} parent=11 // pred_fallthru
          _
        // Predicated region
        $region17: #{global_feature_extractor.5} parent=11 // pred_check
          %p214 = pneg %p168
        $region18: #{global_feature_extractor.5} parent=11 // pred_check_branch
          %216 = sbr.rel (%p214) target = $region20
        $region19: #{global_feature_extractor.5} parent=11 // pred_region
          _
        $region20: #{global_feature_extractor.5} parent=11 // pred_fallthru
          _
      $region12: #{global_feature_extractor.5} parent=5 // pred_fallthru
        _
      %p217 = scmp.lt.s32.totalorder %s14, 4
      // Predicated region
      $region21: #{global_feature_extractor.5} parent=5 // pred_check
        %p218 = pneg %p217
      $region22: #{global_feature_extractor.5} parent=5 // pred_check_branch
        %220 = sbr.rel (%p218) target = $region24
      $region23: #{global_feature_extractor.5} parent=5 // pred_region
        // Predicated region
        $region25: #{global_feature_extractor.5} parent=23 // pred_check
          %p221 = pneg %p48
        $region26: #{global_feature_extractor.5} parent=23 // pred_check_branch
          %223 = sbr.rel (%p221) target = $region28
        $region27: #{global_feature_extractor.5} parent=23 // pred_region
          %s224 = smul.u32 4, %s22
          %p225 = scmp.lt.s32.totalorder %s21, 1
          %s226 = scalar_select %p225, %s21, 1
          %p227 = scmp.lt.s32.totalorder %s224, 7
          %s228 = scalar_select %p227, %s224, 7
          %s229 = smul.addr %s226, 8
          %s230 = sadd.s32 %s228, %s229
          %s231 = smul.addr %s230, 4
          %s232 = scalar_lea.vmem %s0, %s231
          %s233 = smul.u32 4, %s22
        $region28: #{global_feature_extractor.5} parent=23 // pred_fallthru
          _
        // Predicated region
        $region29: #{global_feature_extractor.5} parent=23 // pred_check
          %p234 = pneg %p84
        $region30: #{global_feature_extractor.5} parent=23 // pred_check_branch
          %236 = sbr.rel (%p234) target = $region32
        $region31: #{global_feature_extractor.5} parent=23 // pred_region
          %s237 = smul.u32 %s22, 4
          %s238 = ssub.s32 %s237, 1
          %p239 = scmp.gt.s32.totalorder %s238, 0
          %s240 = scalar_select %p239, %s238, 0
          %p241 = scmp.lt.s32.totalorder %s21, 1
          %s242 = scalar_select %p241, %s21, 1
          %p243 = scmp.lt.s32.totalorder %s240, 7
          %s244 = scalar_select %p243, %s240, 7
          %s245 = smul.addr %s242, 8
          %s246 = sadd.s32 %s244, %s245
          %s247 = smul.addr %s246, 4
          %s248 = scalar_lea.vmem %s1, %s247
          %s249 = smul.u32 %s22, 4
          %s250 = ssub.s32 %s249, 1
          %p251 = scmp.gt.s32.totalorder %s250, 0
          %s252 = scalar_select %p251, %s250, 0
        $region32: #{global_feature_extractor.5} parent=23 // pred_fallthru
          _
        // Predicated region
        $region33: #{global_feature_extractor.5} parent=23 // pred_check
          %p253 = pneg %p120
        $region34: #{global_feature_extractor.5} parent=23 // pred_check_branch
          %255 = sbr.rel (%p253) target = $region36
        $region35: #{global_feature_extractor.5} parent=23 // pred_region
          %s256 = sadd.s32 %s22, 1
          %s257 = smul.u32 %s256, 4
          %p258 = scmp.lt.s32.totalorder %s257, 7
          %s259 = scalar_select %p258, %s257, 7
          %p260 = scmp.lt.s32.totalorder %s21, 1
          %s261 = scalar_select %p260, %s21, 1
          %p262 = scmp.lt.s32.totalorder %s259, 7
          %s263 = scalar_select %p262, %s259, 7
          %s264 = smul.addr %s261, 8
          %s265 = sadd.s32 %s263, %s264
          %s266 = smul.addr %s265, 4
          %s267 = scalar_lea.vmem %s2, %s266
          %s268 = sadd.s32 %s22, 1
          %s269 = smul.u32 %s268, 4
          %p270 = scmp.lt.s32.totalorder %s269, 7
          %s271 = scalar_select %p270, %s269, 7
        $region36: #{global_feature_extractor.5} parent=23 // pred_fallthru
          _
      $region24: #{global_feature_extractor.5} parent=5 // pred_fallthru
        _
      %p272 = scmp.le.s32.totalorder 1, %s14
      %p273 = scmp.lt.s32.totalorder %s14, 5
      %p274 = pnand %p272, %p273
      %p275 = pneg %p274
      // Predicated region
      $region37: #{global_feature_extractor.5} parent=5 // pred_check
        _
      $region38: #{global_feature_extractor.5} parent=5 // pred_check_branch
        %277 = sbr.rel (%p274) target = $region40
      $region39: #{global_feature_extractor.5} parent=5 // pred_region
        %s278 = ssub.s32 %s14, 1
        %s279 = smul.u32 4, %s24
        %p280 = scmp.lt.s32.totalorder %s23, 1
        %s281 = scalar_select %p280, %s23, 1
        %p282 = scmp.lt.s32.totalorder %s279, 7
        %s283 = scalar_select %p282, %s279, 7
        %s284 = smul.addr %s281, 8
        %s285 = sadd.s32 %s283, %s284
        %s286 = smul.addr %s285, 4
        %s287 = scalar_lea.vmem %s0, %s286
        %p288 = pneg %p54
        %p289 = pneg %p51
        %s290 = smul.u32 %s24, 4
        %s291 = ssub.s32 %s290, 1
        %p292 = scmp.gt.s32.totalorder %s291, 0
        %s293 = scalar_select %p292, %s291, 0
        %p294 = scmp.lt.s32.totalorder %s23, 1
        %s295 = scalar_select %p294, %s23, 1
        %p296 = scmp.lt.s32.totalorder %s293, 7
        %s297 = scalar_select %p296, %s293, 7
        %s298 = smul.addr %s295, 8
        %s299 = sadd.s32 %s297, %s298
        %s300 = smul.addr %s299, 4
        %s301 = scalar_lea.vmem %s1, %s300
        %p302 = pneg %p90
        %p303 = pneg %p87
        %s304 = sadd.s32 %s24, 1
        %s305 = smul.u32 %s304, 4
        %p306 = scmp.lt.s32.totalorder %s305, 7
        %s307 = scalar_select %p306, %s305, 7
        %p308 = scmp.lt.s32.totalorder %s23, 1
        %s309 = scalar_select %p308, %s23, 1
        %p310 = scmp.lt.s32.totalorder %s307, 7
        %s311 = scalar_select %p310, %s307, 7
        %s312 = smul.addr %s309, 8
        %s313 = sadd.s32 %s311, %s312
        %s314 = smul.addr %s313, 4
        %s315 = scalar_lea.vmem %s2, %s314
        %p316 = pneg %p126
        %p317 = pneg %p123
        %p318 = pneg %p147
        %p319 = pneg %p144
        %p320 = pneg %p168
        %p321 = pneg %p165
        %p322 = pneg %p196
        %p323 = pneg %p193
        %s324 = sand.u32 %s183, 1
        %s325 = scalar_lea.sflag [#allocation4], %s324
        %s326 = sand.u32 %s183, 1
        %s327 = smul.addr %s326, 32
        %s328 = scalar_lea.vmem [#allocation3], %s327
        %s329 = smul.u32 4, %s24
        %p330 = scmp.lt.s32.totalorder %s23, 1
        %s331 = scalar_select %p330, %s23, 1
        %p332 = scmp.lt.s32.totalorder %s329, 7
        %s333 = scalar_select %p332, %s329, 7
        %s334 = smul.addr %s331, 8
        %s335 = sadd.s32 %s333, %s334
        %s336 = smul.addr %s335, 4
        %s337 = scalar_lea.vmem %s0, %s336
        %s338 = smul.u32 4, %s24
        %s339 = smul.u32 %s24, 4
        %s340 = ssub.s32 %s339, 1
        %p341 = scmp.gt.s32.totalorder %s340, 0
        %s342 = scalar_select %p341, %s340, 0
        %p343 = scmp.lt.s32.totalorder %s23, 1
        %s344 = scalar_select %p343, %s23, 1
        %p345 = scmp.lt.s32.totalorder %s342, 7
        %s346 = scalar_select %p345, %s342, 7
        %s347 = smul.addr %s344, 8
        %s348 = sadd.s32 %s346, %s347
        %s349 = smul.addr %s348, 4
        %s350 = scalar_lea.vmem %s1, %s349
        %s351 = smul.u32 %s24, 4
        %s352 = ssub.s32 %s351, 1
        %p353 = scmp.gt.s32.totalorder %s352, 0
        %s354 = scalar_select %p353, %s352, 0
        %s355 = sadd.s32 %s24, 1
        %s356 = smul.u32 %s355, 4
        %p357 = scmp.lt.s32.totalorder %s356, 7
        %s358 = scalar_select %p357, %s356, 7
        %p359 = scmp.lt.s32.totalorder %s23, 1
        %s360 = scalar_select %p359, %s23, 1
        %p361 = scmp.lt.s32.totalorder %s358, 7
        %s362 = scalar_select %p361, %s358, 7
        %s363 = smul.addr %s360, 8
        %s364 = sadd.s32 %s362, %s363
        %s365 = smul.addr %s364, 4
        %s366 = scalar_lea.vmem %s2, %s365
        %s367 = sadd.s32 %s24, 1
        %s368 = smul.u32 %s367, 4
        %p369 = scmp.lt.s32.totalorder %s368, 7
        %s370 = scalar_select %p369, %s368, 7
        %s371 = smul.u32 4, %s24
        %v373 = vld [vmem:[%s337] sm:$0xf]
        %v374 = vld [vmem:[%s337 + $0x4] sm:$0xf]
        %v375 = vld [vmem:[%s337 + $0x8] sm:$0xf]
        %v376 = vld [vmem:[%s337 + $0xc] sm:$0xf]
        %s377 = scalar_lea.vmem [#allocation2], 4
        %378 = vst [vmem:[%s377] sm:$0xf] %v373
        %379 = vst [vmem:[%s377 + $0x4] sm:$0xf] %v374
        %380 = vst [vmem:[%s377 + $0x8] sm:$0xf] %v375
        %381 = vst [vmem:[%s377 + $0xc] sm:$0xf] %v376
        %p382 = scmp.eq.s32.totalorder %s24, 0
        // Predicated region
        $region41: #{global_feature_extractor.5} parent=39 // pred_check
          %p383 = pneg %p382
        $region42: #{global_feature_extractor.5} parent=39 // pred_check_branch
          %385 = sbr.rel (%p383) target = $region44
        $region43: #{global_feature_extractor.5} parent=39 // pred_region
          %386 = vst [vmem:[#allocation2] sm:$0xf] 0
        $region44: #{global_feature_extractor.5} parent=39 // pred_fallthru
          _
        %p387 = scmp.gt.s32.totalorder %s24, 0
        // Predicated region
        $region45: #{global_feature_extractor.5} parent=39 // pred_check
          %p388 = pneg %p387
        $region46: #{global_feature_extractor.5} parent=39 // pred_check_branch
          %390 = sbr.rel (%p388) target = $region48
        $region47: #{global_feature_extractor.5} parent=39 // pred_region
          %v391 = vld [vmem:[%s350] sm:$0xf]
          %392 = vst [vmem:[#allocation2] sm:$0xf] %v391
        $region48: #{global_feature_extractor.5} parent=39 // pred_fallthru
          _
        %p393 = scmp.eq.s32.totalorder %s24, 1
        // Predicated region
        $region49: #{global_feature_extractor.5} parent=39 // pred_check
          %p394 = pneg %p393
        $region50: #{global_feature_extractor.5} parent=39 // pred_check_branch
          %396 = sbr.rel (%p394) target = $region52
        $region51: #{global_feature_extractor.5} parent=39 // pred_region
          %s397 = scalar_lea.vmem [#allocation2], 20
          %398 = vst [vmem:[%s397] sm:$0xf] 0
        $region52: #{global_feature_extractor.5} parent=39 // pred_fallthru
          _
        %p399 = scmp.lt.s32.totalorder %s24, 1
        // Predicated region
        $region53: #{global_feature_extractor.5} parent=39 // pred_check
          %p400 = pneg %p399
        $region54: #{global_feature_extractor.5} parent=39 // pred_check_branch
          %402 = sbr.rel (%p400) target = $region56
        $region55: #{global_feature_extractor.5} parent=39 // pred_region
          %v403 = vld [vmem:[%s366] sm:$0xf]
          %s404 = scalar_lea.vmem [#allocation2], 20
          %405 = vst [vmem:[%s404] sm:$0xf] %v403
        $region56: #{global_feature_extractor.5} parent=39 // pred_fallthru
          _
        %v406 = vld [vmem:[#allocation2] sm:$0xf]
        %v407 = vld [vmem:[#allocation2 + $0x4] sm:$0xf]
        %v408 = vld [vmem:[#allocation2 + $0x8] sm:$0xf]
        %v409 = vld [vmem:[#allocation2 + $0xc] sm:$0xf]
        %v410 = vld [vmem:[#allocation2 + $0x10] sm:$0xf]
        %v411 = vld [vmem:[#allocation2 + $0x14] sm:$0xf]
        %v418 = vunpack.c.l.b16 %v406
        %v419 = vunpack.c.l.b16 %v407
        %v420 = vunpack.c.l.b16 %v408
        %v421 = vunpack.c.l.b16 %v409
        %v422 = vunpack.c.l.b16 %v410
        %v423 = vunpack.c.l.b16 %v411
        %v424 = vpack.c.b16 %v418, %v418
        %v425 = vpack.c.b16 %v419, %v419
        %v426 = vpack.c.b16 %v420, %v420
        %v427 = vpack.c.b16 %v421, %v421
        %v428 = vpack.c.b16 %v422, %v422
        %v429 = vpack.c.b16 %v423, %v423
        %v431 = vshrl.u32 %v424, 16
        %v433 = vrot.slane %v431, 7
        %v434 = vshll.u32 %v424, 16
        %v436 = vor.u32 %v433, %v434
        %v438 = vshrl.u32 %v425, 16
        %v440 = vrot.slane %v438, 7
        %v441 = vshll.u32 %v425, 16
        %v443 = vor.u32 %v440, %v441
        %v445 = vshrl.u32 %v426, 16
        %v447 = vrot.slane %v445, 7
        %v448 = vshll.u32 %v426, 16
        %v450 = vor.u32 %v447, %v448
        %v452 = vshrl.u32 %v427, 16
        %v454 = vrot.slane %v452, 7
        %v455 = vshll.u32 %v427, 16
        %v457 = vor.u32 %v454, %v455
        %v459 = vshrl.u32 %v428, 16
        %v461 = vrot.slane %v459, 7
        %v462 = vshll.u32 %v428, 16
        %v464 = vor.u32 %v461, %v462
        %v466 = vshrl.u32 %v429, 16
        %v468 = vrot.slane %v466, 7
        %v469 = vshll.u32 %v429, 16
        %v471 = vor.u32 %v468, %v469
        %vm478 = vcmask 1040384
        %vm479 = vsmask.f32 256
        %vm480 = vmand %vm478, %vm479
        %v481 = vsel %vm480, 0, %v436
        %v482 = vsel %vm480, 0, %v443
        %v483 = vsel %vm480, 0, %v450
        %v484 = vsel %vm480, 0, %v457
        %v485 = vsel %vm480, 0, %v464
        %v486 = vsel %vm480, 0, %v471
        %vm487 = vcmask 1044480
        %vm488 = vsmask.f32 4352
        %vm489 = vmand %vm487, %vm488
        %v490 = vsel %vm489, %v481, 0
        %v491 = vsel %vm489, %v482, 0
        %v492 = vsel %vm489, %v483, 0
        %v493 = vsel %vm489, %v484, 0
        %v494 = vsel %vm489, %v485, 0
        %v495 = vsel %vm489, %v486, 0
        %v497 = vshrl.u32 %v490, 16
        %v499 = vshll.u32 %v490, 16
        %v501 = vrot.slane %v499, 1
        %v502 = vor.u32 %v497, %v501
        %v504 = vshrl.u32 %v491, 16
        %v506 = vshll.u32 %v491, 16
        %v508 = vrot.slane %v506, 1
        %v509 = vor.u32 %v504, %v508
        %v511 = vshrl.u32 %v492, 16
        %v513 = vshll.u32 %v492, 16
        %v515 = vrot.slane %v513, 1
        %v516 = vor.u32 %v511, %v515
        %v518 = vshrl.u32 %v493, 16
        %v520 = vshll.u32 %v493, 16
        %v522 = vrot.slane %v520, 1
        %v523 = vor.u32 %v518, %v522
        %v525 = vshrl.u32 %v494, 16
        %v527 = vshll.u32 %v494, 16
        %v529 = vrot.slane %v527, 1
        %v530 = vor.u32 %v525, %v529
        %v532 = vshrl.u32 %v495, 16
        %v534 = vshll.u32 %v495, 16
        %v536 = vrot.slane %v534, 1
        %v537 = vor.u32 %v532, %v536
        %v544 = vrot.slane %v490, 1
        %v545 = vrot.slane %v491, 1
        %v546 = vrot.slane %v492, 1
        %v547 = vrot.slane %v493, 1
        %v548 = vrot.slane %v494, 1
        %v549 = vrot.slane %v495, 1
        %v550 = vunpack.c.l.b16 %v490
        %v551 = vunpack.c.l.b16 %v502
        %v552 = vunpack.c.l.b16 %v544
        %v553 = vunpack.c.l.b16 %v491
        %v554 = vunpack.c.l.b16 %v509
        %v555 = vunpack.c.l.b16 %v545
        %v556 = vunpack.c.l.b16 %v492
        %v557 = vunpack.c.l.b16 %v516
        %v558 = vunpack.c.l.b16 %v546
        %v559 = vunpack.c.l.b16 %v493
        %v560 = vunpack.c.l.b16 %v523
        %v561 = vunpack.c.l.b16 %v547
        %v562 = vld [vmem:[%s3] sm:$0xf]
        %v563 = vld [vmem:[%s3 + $0x4] sm:$0xf]
        %v564 = vld [vmem:[%s3 + $0x8] sm:$0xf]
        %v565 = vld [vmem:[%s3 + $0xc] sm:$0xf]
        %v566 = vld [vmem:[%s3 + $0x10] sm:$0xf]
        %v567 = vld [vmem:[%s3 + $0x14] sm:$0xf]
        %v568 = vld [vmem:[%s3 + $0x18] sm:$0xf]
        %v569 = vld [vmem:[%s3 + $0x1c] sm:$0xf]
        %v570 = vld [vmem:[%s3 + $0x20] sm:$0xf]
        %v571 = vld [vmem:[%s3 + $0x24] sm:$0xf]
        %v572 = vld [vmem:[%s3 + $0x28] sm:$0xf]
        %v573 = vld [vmem:[%s3 + $0x2c] sm:$0xf]
        %v574 = vld [vmem:[%s3 + $0x30] sm:$0xf]
        %v575 = vld [vmem:[%s3 + $0x34] sm:$0xf]
        %v576 = vld [vmem:[%s3 + $0x38] sm:$0xf]
        %v577 = vld [vmem:[%s3 + $0x3c] sm:$0xf]
        %v578 = vld [vmem:[%s3 + $0x40] sm:$0xf]
        %v579 = vld [vmem:[%s3 + $0x44] sm:$0xf]
        %v580 = vld [vmem:[%s3 + $0x48] sm:$0xf]
        %v581 = vld [vmem:[%s3 + $0x4c] sm:$0xf]
        %v582 = vld [vmem:[%s3 + $0x50] sm:$0xf]
        %v583 = vld [vmem:[%s3 + $0x54] sm:$0xf]
        %v584 = vld [vmem:[%s3 + $0x58] sm:$0xf]
        %v585 = vld [vmem:[%s3 + $0x5c] sm:$0xf]
        %v586 = vld [vmem:[%s3 + $0x60] sm:$0xf]
        %v587 = vld [vmem:[%s3 + $0x64] sm:$0xf]
        %v588 = vld [vmem:[%s3 + $0x68] sm:$0xf]
        %v589 = vld [vmem:[%s3 + $0x6c] sm:$0xf]
        %v590 = vld [vmem:[%s3 + $0x70] sm:$0xf]
        %v591 = vld [vmem:[%s3 + $0x74] sm:$0xf]
        %v592 = vld [vmem:[%s3 + $0x78] sm:$0xf]
        %v593 = vld [vmem:[%s3 + $0x7c] sm:$0xf]
        %v594 = vld [vmem:[%s3 + $0x80] sm:$0xf]
        %v595 = vld [vmem:[%s3 + $0x84] sm:$0xf]
        %v596 = vld [vmem:[%s3 + $0x88] sm:$0xf]
        %v597 = vld [vmem:[%s3 + $0x8c] sm:$0xf]
        %v598 = vld [vmem:[%s3 + $0x90] sm:$0xf]
        %v599 = vld [vmem:[%s3 + $0x94] sm:$0xf]
        %v600 = vld [vmem:[%s3 + $0x98] sm:$0xf]
        %v601 = vld [vmem:[%s3 + $0x9c] sm:$0xf]
        %v602 = vld [vmem:[%s3 + $0xa0] sm:$0xf]
        %v603 = vld [vmem:[%s3 + $0xa4] sm:$0xf]
        %v604 = vld [vmem:[%s3 + $0xa8] sm:$0xf]
        %v605 = vld [vmem:[%s3 + $0xac] sm:$0xf]
        %v606 = vld [vmem:[%s3 + $0xb0] sm:$0xf]
        %v607 = vld [vmem:[%s3 + $0xb4] sm:$0xf]
        %v608 = vld [vmem:[%s3 + $0xb8] sm:$0xf]
        %v609 = vld [vmem:[%s3 + $0xbc] sm:$0xf]
        %v610 = vunpack.c.l.b16 %v494
        %v611 = vunpack.c.l.b16 %v530
        %v612 = vunpack.c.l.b16 %v548
        %s613 = scalar_lea.vmem %s3, 192
        %v614 = vld [vmem:[%s613] sm:$0xf]
        %v615 = vld [vmem:[%s613 + $0x4] sm:$0xf]
        %v616 = vld [vmem:[%s613 + $0x8] sm:$0xf]
        %v617 = vld [vmem:[%s613 + $0xc] sm:$0xf]
        %v618 = vld [vmem:[%s613 + $0x10] sm:$0xf]
        %v619 = vld [vmem:[%s613 + $0x14] sm:$0xf]
        %v620 = vld [vmem:[%s613 + $0x18] sm:$0xf]
        %v621 = vld [vmem:[%s613 + $0x1c] sm:$0xf]
        %v622 = vld [vmem:[%s613 + $0x20] sm:$0xf]
        %v623 = vld [vmem:[%s613 + $0x24] sm:$0xf]
        %v624 = vld [vmem:[%s613 + $0x28] sm:$0xf]
        %v625 = vld [vmem:[%s613 + $0x2c] sm:$0xf]
        %v626 = vld [vmem:[%s613 + $0x30] sm:$0xf]
        %v627 = vld [vmem:[%s613 + $0x34] sm:$0xf]
        %v628 = vld [vmem:[%s613 + $0x38] sm:$0xf]
        %v629 = vld [vmem:[%s613 + $0x3c] sm:$0xf]
        %v630 = vld [vmem:[%s613 + $0x40] sm:$0xf]
        %v631 = vld [vmem:[%s613 + $0x44] sm:$0xf]
        %v632 = vld [vmem:[%s613 + $0x48] sm:$0xf]
        %v633 = vld [vmem:[%s613 + $0x4c] sm:$0xf]
        %v634 = vld [vmem:[%s613 + $0x50] sm:$0xf]
        %v635 = vld [vmem:[%s613 + $0x54] sm:$0xf]
        %v636 = vld [vmem:[%s613 + $0x58] sm:$0xf]
        %v637 = vld [vmem:[%s613 + $0x5c] sm:$0xf]
        %v638 = vld [vmem:[%s613 + $0x60] sm:$0xf]
        %v639 = vld [vmem:[%s613 + $0x64] sm:$0xf]
        %v640 = vld [vmem:[%s613 + $0x68] sm:$0xf]
        %v641 = vld [vmem:[%s613 + $0x6c] sm:$0xf]
        %v642 = vld [vmem:[%s613 + $0x70] sm:$0xf]
        %v643 = vld [vmem:[%s613 + $0x74] sm:$0xf]
        %v644 = vld [vmem:[%s613 + $0x78] sm:$0xf]
        %v645 = vld [vmem:[%s613 + $0x7c] sm:$0xf]
        %v646 = vld [vmem:[%s613 + $0x80] sm:$0xf]
        %v647 = vld [vmem:[%s613 + $0x84] sm:$0xf]
        %v648 = vld [vmem:[%s613 + $0x88] sm:$0xf]
        %v649 = vld [vmem:[%s613 + $0x8c] sm:$0xf]
        %v650 = vld [vmem:[%s613 + $0x90] sm:$0xf]
        %v651 = vld [vmem:[%s613 + $0x94] sm:$0xf]
        %v652 = vld [vmem:[%s613 + $0x98] sm:$0xf]
        %v653 = vld [vmem:[%s613 + $0x9c] sm:$0xf]
        %v654 = vld [vmem:[%s613 + $0xa0] sm:$0xf]
        %v655 = vld [vmem:[%s613 + $0xa4] sm:$0xf]
        %v656 = vld [vmem:[%s613 + $0xa8] sm:$0xf]
        %v657 = vld [vmem:[%s613 + $0xac] sm:$0xf]
        %v658 = vld [vmem:[%s613 + $0xb0] sm:$0xf]
        %v659 = vld [vmem:[%s613 + $0xb4] sm:$0xf]
        %v660 = vld [vmem:[%s613 + $0xb8] sm:$0xf]
        %v661 = vld [vmem:[%s613 + $0xbc] sm:$0xf]
        %v662 = vpack.c.b16 %v556, %v553
        %v663 = vpack.c.b16 %v557, %v554
        %v664 = vpack.c.b16 %v558, %v555
        %v665 = vpack.c.b16 %v610, %v559
        %v666 = vpack.c.b16 %v611, %v560
        %v667 = vpack.c.b16 %v612, %v561
        %v722 = vunpack.c.l.b16 %v614
        %v723 = vunpack.c.l.b16 %v615
        %v724 = vunpack.c.l.b16 %v616
        %v725 = vunpack.c.l.b16 %v617
        %v726 = vunpack.c.l.b16 %v618
        %v727 = vunpack.c.l.b16 %v619
        %v728 = vunpack.c.l.b16 %v620
        %v729 = vunpack.c.l.b16 %v621
        %v730 = vunpack.c.l.b16 %v622
        %v731 = vunpack.c.l.b16 %v623
        %v732 = vunpack.c.l.b16 %v624
        %v733 = vunpack.c.l.b16 %v625
        %v734 = vunpack.c.l.b16 %v626
        %v735 = vunpack.c.l.b16 %v627
        %v736 = vunpack.c.l.b16 %v628
        %v737 = vunpack.c.l.b16 %v629
        %v738 = vunpack.c.l.b16 %v630
        %v739 = vunpack.c.l.b16 %v631
        %v740 = vunpack.c.l.b16 %v632
        %v741 = vunpack.c.l.b16 %v633
        %v742 = vunpack.c.l.b16 %v634
        %v743 = vunpack.c.l.b16 %v635
        %v744 = vunpack.c.l.b16 %v636
        %v745 = vunpack.c.l.b16 %v637
        %v746 = vunpack.c.l.b16 %v638
        %v747 = vunpack.c.l.b16 %v639
        %v748 = vunpack.c.l.b16 %v640
        %v749 = vunpack.c.l.b16 %v641
        %v750 = vunpack.c.l.b16 %v642
        %v751 = vunpack.c.l.b16 %v643
        %v752 = vunpack.c.l.b16 %v644
        %v753 = vunpack.c.l.b16 %v645
        %v754 = vunpack.c.l.b16 %v646
        %v755 = vunpack.c.l.b16 %v647
        %v756 = vunpack.c.l.b16 %v648
        %v757 = vunpack.c.l.b16 %v649
        %v758 = vunpack.c.l.b16 %v650
        %v759 = vunpack.c.l.b16 %v651
        %v760 = vunpack.c.l.b16 %v652
        %v761 = vunpack.c.l.b16 %v653
        %v762 = vunpack.c.l.b16 %v654
        %v763 = vunpack.c.l.b16 %v655
        %v764 = vunpack.c.l.b16 %v656
        %v765 = vunpack.c.l.b16 %v657
        %v766 = vunpack.c.l.b16 %v658
        %v767 = vunpack.c.l.b16 %v659
        %v768 = vunpack.c.l.b16 %v660
        %v769 = vunpack.c.l.b16 %v661
        %v770 = vpack.c.b16 %v723, %v722
        %v771 = vpack.c.b16 %v725, %v724
        %v772 = vpack.c.b16 %v727, %v726
        %v773 = vpack.c.b16 %v729, %v728
        %v774 = vpack.c.b16 %v731, %v730
        %v775 = vpack.c.b16 %v733, %v732
        %v776 = vpack.c.b16 %v735, %v734
        %v777 = vpack.c.b16 %v737, %v736
        %v778 = vpack.c.b16 %v739, %v738
        %v779 = vpack.c.b16 %v741, %v740
        %v780 = vpack.c.b16 %v743, %v742
        %v781 = vpack.c.b16 %v745, %v744
        %v782 = vpack.c.b16 %v747, %v746
        %v783 = vpack.c.b16 %v749, %v748
        %v784 = vpack.c.b16 %v751, %v750
        %v785 = vpack.c.b16 %v753, %v752
        %v786 = vpack.c.b16 %v755, %v754
        %v787 = vpack.c.b16 %v757, %v756
        %v788 = vpack.c.b16 %v759, %v758
        %v789 = vpack.c.b16 %v761, %v760
        %v790 = vpack.c.b16 %v763, %v762
        %v791 = vpack.c.b16 %v765, %v764
        %v792 = vpack.c.b16 %v767, %v766
        %v793 = vpack.c.b16 %v769, %v768
        %818 = vmatprep.subr.bf16.mxu0 0
        %819 = vmatpush1.bf16.msra.mxu0 %v770
        %820 = vmatprep.subr.bf16.mxu0 0
        %821 = vmatpush1.bf16.msra.mxu0 %v771
        %822 = vmatprep.subr.bf16.mxu0 0
        %823 = vmatpush1.bf16.msra.mxu0 %v772
        %824 = vmatprep.subr.bf16.mxu0 0
        %825 = vmatpush1.bf16.msra.mxu0 %v773
        %826 = vmatprep.subr.bf16.mxu0 0
        %827 = vmatpush1.bf16.msra.mxu0 %v774
        %828 = vmatprep.subr.bf16.mxu0 0
        %829 = vmatpush1.bf16.msra.mxu0 %v775
        %830 = vmatprep.subr.bf16.mxu0 0
        %831 = vmatpush1.bf16.msra.mxu0 %v776
        %832 = vmatprep.subr.bf16.mxu0 0
        %833 = vmatpush1.bf16.msra.mxu0 %v777
        %834 = vmatprep.subr.bf16.mxu0 0
        %835 = vmatpush1.bf16.msra.mxu0 %v778
        %836 = vmatprep.subr.bf16.mxu0 0
        %837 = vmatpush1.bf16.msra.mxu0 %v779
        %838 = vmatprep.subr.bf16.mxu0 0
        %839 = vmatpush1.bf16.msra.mxu0 %v780
        %840 = vmatprep.subr.bf16.mxu0 0
        %841 = vmatpush1.bf16.msra.mxu0 %v781
        %842 = vmatprep.subr.bf16.mxu0 0
        %843 = vmatpush1.bf16.msra.mxu0 %v782
        %844 = vmatprep.subr.bf16.mxu0 0
        %845 = vmatpush1.bf16.msra.mxu0 %v783
        %846 = vmatprep.subr.bf16.mxu0 0
        %847 = vmatpush1.bf16.msra.mxu0 %v784
        %848 = vmatprep.subr.bf16.mxu0 0
        %849 = vmatpush1.bf16.msra.mxu0 %v785
        %850 = vmatprep.mubr.bf16.mxu0 %v663
        %851 = vmatmul.mubr.bf16.gmra.mrb[0].mxu0 %v662
        %v852 = vpop.f32.mrb[0].mxu0
        %v853 = vadd.f32 0.0, %v852
        %v854 = vpop.f32.mrb[0].mxu0
        %v855 = vpop.f32.mrb[0].mxu0
        %v856 = vadd.f32 0.0, %v855
        %v857 = vpop.f32.mrb[0].mxu0
        %858 = vmatprep.mubr.bf16.mxu0 %v666
        %859 = vmatmul.mubr.bf16.gmra.mrb[0].mxu0 %v665
        %v860 = vpop.f32.mrb[0].mxu0
        %v861 = vadd.f32 0.0, %v860
        %v862 = vpop.f32.mrb[0].mxu0
        %v863 = vpop.f32.mrb[0].mxu0
        %v864 = vadd.f32 0.0, %v863
        %v865 = vpop.f32.mrb[0].mxu0
        %866 = vdwg.mxu0
        %867 = vmatprep.subr.bf16.mxu0 0
        %868 = vmatpush1.bf16.msra.mxu0 %v786
        %869 = vmatprep.subr.bf16.mxu0 0
        %870 = vmatpush1.bf16.msra.mxu0 %v787
        %871 = vmatprep.subr.bf16.mxu0 0
        %872 = vmatpush1.bf16.msra.mxu0 %v788
        %873 = vmatprep.subr.bf16.mxu0 0
        %874 = vmatpush1.bf16.msra.mxu0 %v789
        %875 = vmatprep.subr.bf16.mxu0 0
        %876 = vmatpush1.bf16.msra.mxu0 %v790
        %877 = vmatprep.subr.bf16.mxu0 0
        %878 = vmatpush1.bf16.msra.mxu0 %v791
        %879 = vmatprep.subr.bf16.mxu0 0
        %880 = vmatpush1.bf16.msra.mxu0 %v792
        %881 = vmatprep.subr.bf16.mxu0 0
        %882 = vmatpush1.bf16.msra.mxu0 %v793
        %883 = vmatprep.subr.bf16.mxu0 0
        %884 = vmatpush1.bf16.msra.mxu0 0
        %885 = vmatprep.subr.bf16.mxu0 0
        %886 = vmatpush1.bf16.msra.mxu0 0
        %887 = vmatprep.subr.bf16.mxu0 0
        %888 = vmatpush1.bf16.msra.mxu0 0
        %889 = vmatprep.subr.bf16.mxu0 0
        %890 = vmatpush1.bf16.msra.mxu0 0
        %891 = vmatprep.subr.bf16.mxu0 0
        %892 = vmatpush1.bf16.msra.mxu0 0
        %893 = vmatprep.subr.bf16.mxu0 0
        %894 = vmatpush1.bf16.msra.mxu0 0
        %895 = vmatprep.subr.bf16.mxu0 0
        %896 = vmatpush1.bf16.msra.mxu0 0
        %897 = vmatprep.subr.bf16.mxu0 0
        %898 = vmatpush1.bf16.msra.mxu0 0
        %899 = vmatprep.mubr.bf16.mxu0 0
        %900 = vmatmul.mubr.bf16.gmra.mrb[0].mxu0 %v664
        %v901 = vpop.f32.mrb[0].mxu0
        %v902 = vadd.f32 %v853, %v901
        %v903 = vpop.f32.mrb[0].mxu0
        %v904 = vpop.f32.mrb[0].mxu0
        %v905 = vadd.f32 %v856, %v904
        %v906 = vpop.f32.mrb[0].mxu0
        %907 = vmatprep.mubr.bf16.mxu0 0
        %908 = vmatmul.mubr.bf16.gmra.mrb[0].mxu0 %v667
        %v909 = vpop.f32.mrb[0].mxu0
        %v910 = vadd.f32 %v861, %v909
        %v911 = vpop.f32.mrb[0].mxu0
        %v912 = vpop.f32.mrb[0].mxu0
        %v913 = vadd.f32 %v864, %v912
        %v914 = vpop.f32.mrb[0].mxu0
        %915 = vdwg.mxu0
        %v916 = vpack.c.b16 %v553, %v550
        %v917 = vpack.c.b16 %v554, %v551
        %v918 = vpack.c.b16 %v555, %v552
        %v919 = vpack.c.b16 %v559, %v556
        %v920 = vpack.c.b16 %v560, %v557
        %v921 = vpack.c.b16 %v561, %v558
        %v976 = vunpack.c.l.b16 %v562
        %v977 = vunpack.c.l.b16 %v563
        %v978 = vunpack.c.l.b16 %v564
        %v979 = vunpack.c.l.b16 %v565
        %v980 = vunpack.c.l.b16 %v566
        %v981 = vunpack.c.l.b16 %v567
        %v982 = vunpack.c.l.b16 %v568
        %v983 = vunpack.c.l.b16 %v569
        %v984 = vunpack.c.l.b16 %v570
        %v985 = vunpack.c.l.b16 %v571
        %v986 = vunpack.c.l.b16 %v572
        %v987 = vunpack.c.l.b16 %v573
        %v988 = vunpack.c.l.b16 %v574
        %v989 = vunpack.c.l.b16 %v575
        %v990 = vunpack.c.l.b16 %v576
        %v991 = vunpack.c.l.b16 %v577
        %v992 = vunpack.c.l.b16 %v578
        %v993 = vunpack.c.l.b16 %v579
        %v994 = vunpack.c.l.b16 %v580
        %v995 = vunpack.c.l.b16 %v581
        %v996 = vunpack.c.l.b16 %v582
        %v997 = vunpack.c.l.b16 %v583
        %v998 = vunpack.c.l.b16 %v584
        %v999 = vunpack.c.l.b16 %v585
        %v1000 = vunpack.c.l.b16 %v586
        %v1001 = vunpack.c.l.b16 %v587
        %v1002 = vunpack.c.l.b16 %v588
        %v1003 = vunpack.c.l.b16 %v589
        %v1004 = vunpack.c.l.b16 %v590
        %v1005 = vunpack.c.l.b16 %v591
        %v1006 = vunpack.c.l.b16 %v592
        %v1007 = vunpack.c.l.b16 %v593
        %v1008 = vunpack.c.l.b16 %v594
        %v1009 = vunpack.c.l.b16 %v595
        %v1010 = vunpack.c.l.b16 %v596
        %v1011 = vunpack.c.l.b16 %v597
        %v1012 = vunpack.c.l.b16 %v598
        %v1013 = vunpack.c.l.b16 %v599
        %v1014 = vunpack.c.l.b16 %v600
        %v1015 = vunpack.c.l.b16 %v601
        %v1016 = vunpack.c.l.b16 %v602
        %v1017 = vunpack.c.l.b16 %v603
        %v1018 = vunpack.c.l.b16 %v604
        %v1019 = vunpack.c.l.b16 %v605
        %v1020 = vunpack.c.l.b16 %v606
        %v1021 = vunpack.c.l.b16 %v607
        %v1022 = vunpack.c.l.b16 %v608
        %v1023 = vunpack.c.l.b16 %v609
        %v1024 = vpack.c.b16 %v977, %v976
        %v1025 = vpack.c.b16 %v979, %v978
        %v1026 = vpack.c.b16 %v981, %v980
        %v1027 = vpack.c.b16 %v983, %v982
        %v1028 = vpack.c.b16 %v985, %v984
        %v1029 = vpack.c.b16 %v987, %v986
        %v1030 = vpack.c.b16 %v989, %v988
        %v1031 = vpack.c.b16 %v991, %v990
        %v1032 = vpack.c.b16 %v993, %v992
        %v1033 = vpack.c.b16 %v995, %v994
        %v1034 = vpack.c.b16 %v997, %v996
        %v1035 = vpack.c.b16 %v999, %v998
        %v1036 = vpack.c.b16 %v1001, %v1000
        %v1037 = vpack.c.b16 %v1003, %v1002
        %v1038 = vpack.c.b16 %v1005, %v1004
        %v1039 = vpack.c.b16 %v1007, %v1006
        %v1040 = vpack.c.b16 %v1009, %v1008
        %v1041 = vpack.c.b16 %v1011, %v1010
        %v1042 = vpack.c.b16 %v1013, %v1012
        %v1043 = vpack.c.b16 %v1015, %v1014
        %v1044 = vpack.c.b16 %v1017, %v1016
        %v1045 = vpack.c.b16 %v1019, %v1018
        %v1046 = vpack.c.b16 %v1021, %v1020
        %v1047 = vpack.c.b16 %v1023, %v1022
        %1072 = vmatprep.subr.bf16.mxu0 0
        %1073 = vmatpush1.bf16.msra.mxu0 %v1024
        %1074 = vmatprep.subr.bf16.mxu0 0
        %1075 = vmatpush1.bf16.msra.mxu0 %v1025
        %1076 = vmatprep.subr.bf16.mxu0 0
        %1077 = vmatpush1.bf16.msra.mxu0 %v1026
        %1078 = vmatprep.subr.bf16.mxu0 0
        %1079 = vmatpush1.bf16.msra.mxu0 %v1027
        %1080 = vmatprep.subr.bf16.mxu0 0
        %1081 = vmatpush1.bf16.msra.mxu0 %v1028
        %1082 = vmatprep.subr.bf16.mxu0 0
        %1083 = vmatpush1.bf16.msra.mxu0 %v1029
        %1084 = vmatprep.subr.bf16.mxu0 0
        %1085 = vmatpush1.bf16.msra.mxu0 %v1030
        %1086 = vmatprep.subr.bf16.mxu0 0
        %1087 = vmatpush1.bf16.msra.mxu0 %v1031
        %1088 = vmatprep.subr.bf16.mxu0 0
        %1089 = vmatpush1.bf16.msra.mxu0 %v1032
        %1090 = vmatprep.subr.bf16.mxu0 0
        %1091 = vmatpush1.bf16.msra.mxu0 %v1033
        %1092 = vmatprep.subr.bf16.mxu0 0
        %1093 = vmatpush1.bf16.msra.mxu0 %v1034
        %1094 = vmatprep.subr.bf16.mxu0 0
        %1095 = vmatpush1.bf16.msra.mxu0 %v1035
        %1096 = vmatprep.subr.bf16.mxu0 0
        %1097 = vmatpush1.bf16.msra.mxu0 %v1036
        %1098 = vmatprep.subr.bf16.mxu0 0
        %1099 = vmatpush1.bf16.msra.mxu0 %v1037
        %1100 = vmatprep.subr.bf16.mxu0 0
        %1101 = vmatpush1.bf16.msra.mxu0 %v1038
        %1102 = vmatprep.subr.bf16.mxu0 0
        %1103 = vmatpush1.bf16.msra.mxu0 %v1039
        %1104 = vmatprep.mubr.bf16.mxu0 %v917
        %1105 = vmatmul.mubr.bf16.gmra.mrb[0].mxu0 %v916
        %v1106 = vpop.f32.mrb[0].mxu0
        %v1107 = vadd.f32 %v902, %v1106
        %v1108 = vpop.f32.mrb[0].mxu0
        %v1109 = vpop.f32.mrb[0].mxu0
        %v1110 = vadd.f32 %v905, %v1109
        %v1111 = vpop.f32.mrb[0].mxu0
        %1112 = vmatprep.mubr.bf16.mxu0 %v920
        %1113 = vmatmul.mubr.bf16.gmra.mrb[0].mxu0 %v919
        %v1114 = vpop.f32.mrb[0].mxu0
        %v1115 = vadd.f32 %v910, %v1114
        %v1116 = vpop.f32.mrb[0].mxu0
        %v1117 = vpop.f32.mrb[0].mxu0
        %v1118 = vadd.f32 %v913, %v1117
        %v1119 = vpop.f32.mrb[0].mxu0
        %1120 = vdwg.mxu0
        %1121 = vmatprep.subr.bf16.mxu0 0
        %1122 = vmatpush1.bf16.msra.mxu0 %v1040
        %1123 = vmatprep.subr.bf16.mxu0 0
        %1124 = vmatpush1.bf16.msra.mxu0 %v1041
        %1125 = vmatprep.subr.bf16.mxu0 0
        %1126 = vmatpush1.bf16.msra.mxu0 %v1042
        %1127 = vmatprep.subr.bf16.mxu0 0
        %1128 = vmatpush1.bf16.msra.mxu0 %v1043
        %1129 = vmatprep.subr.bf16.mxu0 0
        %1130 = vmatpush1.bf16.msra.mxu0 %v1044
        %1131 = vmatprep.subr.bf16.mxu0 0
        %1132 = vmatpush1.bf16.msra.mxu0 %v1045
        %1133 = vmatprep.subr.bf16.mxu0 0
        %1134 = vmatpush1.bf16.msra.mxu0 %v1046
        %1135 = vmatprep.subr.bf16.mxu0 0
        %1136 = vmatpush1.bf16.msra.mxu0 %v1047
        %1137 = vmatprep.subr.bf16.mxu0 0
        %1138 = vmatpush1.bf16.msra.mxu0 0
        %1139 = vmatprep.subr.bf16.mxu0 0
        %1140 = vmatpush1.bf16.msra.mxu0 0
        %1141 = vmatprep.subr.bf16.mxu0 0
        %1142 = vmatpush1.bf16.msra.mxu0 0
        %1143 = vmatprep.subr.bf16.mxu0 0
        %1144 = vmatpush1.bf16.msra.mxu0 0
        %1145 = vmatprep.subr.bf16.mxu0 0
        %1146 = vmatpush1.bf16.msra.mxu0 0
        %1147 = vmatprep.subr.bf16.mxu0 0
        %1148 = vmatpush1.bf16.msra.mxu0 0
        %1149 = vmatprep.subr.bf16.mxu0 0
        %1150 = vmatpush1.bf16.msra.mxu0 0
        %1151 = vmatprep.subr.bf16.mxu0 0
        %1152 = vmatpush1.bf16.msra.mxu0 0
        %1153 = vmatprep.mubr.bf16.mxu0 0
        %1154 = vmatmul.mubr.bf16.gmra.mrb[0].mxu0 %v918
        %v1155 = vpop.f32.mrb[0].mxu0
        %v1156 = vadd.f32 %v1107, %v1155
        %v1157 = vpop.f32.mrb[0].mxu0
        %v1158 = vpop.f32.mrb[0].mxu0
        %v1159 = vadd.f32 %v1110, %v1158
        %v1160 = vpop.f32.mrb[0].mxu0
        %1161 = vmatprep.mubr.bf16.mxu0 0
        %1162 = vmatmul.mubr.bf16.gmra.mrb[0].mxu0 %v921
        %v1163 = vpop.f32.mrb[0].mxu0
        %v1164 = vadd.f32 %v1115, %v1163
        %v1165 = vpop.f32.mrb[0].mxu0
        %v1166 = vpop.f32.mrb[0].mxu0
        %v1167 = vadd.f32 %v1118, %v1166
        %v1168 = vpop.f32.mrb[0].mxu0
        %1169 = vdwg.mxu0
        %v1170 = vunpack.c.l.b16 %v495
        %v1171 = vunpack.c.l.b16 %v537
        %v1172 = vunpack.c.l.b16 %v549
        %s1173 = scalar_lea.vmem %s3, 384
        %v1174 = vld [vmem:[%s1173] sm:$0xf]
        %v1175 = vld [vmem:[%s1173 + $0x4] sm:$0xf]
        %v1176 = vld [vmem:[%s1173 + $0x8] sm:$0xf]
        %v1177 = vld [vmem:[%s1173 + $0xc] sm:$0xf]
        %v1178 = vld [vmem:[%s1173 + $0x10] sm:$0xf]
        %v1179 = vld [vmem:[%s1173 + $0x14] sm:$0xf]
        %v1180 = vld [vmem:[%s1173 + $0x18] sm:$0xf]
        %v1181 = vld [vmem:[%s1173 + $0x1c] sm:$0xf]
        %v1182 = vld [vmem:[%s1173 + $0x20] sm:$0xf]
        %v1183 = vld [vmem:[%s1173 + $0x24] sm:$0xf]
        %v1184 = vld [vmem:[%s1173 + $0x28] sm:$0xf]
        %v1185 = vld [vmem:[%s1173 + $0x2c] sm:$0xf]
        %v1186 = vld [vmem:[%s1173 + $0x30] sm:$0xf]
        %v1187 = vld [vmem:[%s1173 + $0x34] sm:$0xf]
        %v1188 = vld [vmem:[%s1173 + $0x38] sm:$0xf]
        %v1189 = vld [vmem:[%s1173 + $0x3c] sm:$0xf]
        %v1190 = vld [vmem:[%s1173 + $0x40] sm:$0xf]
        %v1191 = vld [vmem:[%s1173 + $0x44] sm:$0xf]
        %v1192 = vld [vmem:[%s1173 + $0x48] sm:$0xf]
        %v1193 = vld [vmem:[%s1173 + $0x4c] sm:$0xf]
        %v1194 = vld [vmem:[%s1173 + $0x50] sm:$0xf]
        %v1195 = vld [vmem:[%s1173 + $0x54] sm:$0xf]
        %v1196 = vld [vmem:[%s1173 + $0x58] sm:$0xf]
        %v1197 = vld [vmem:[%s1173 + $0x5c] sm:$0xf]
        %v1198 = vld [vmem:[%s1173 + $0x60] sm:$0xf]
        %v1199 = vld [vmem:[%s1173 + $0x64] sm:$0xf]
        %v1200 = vld [vmem:[%s1173 + $0x68] sm:$0xf]
        %v1201 = vld [vmem:[%s1173 + $0x6c] sm:$0xf]
        %v1202 = vld [vmem:[%s1173 + $0x70] sm:$0xf]
        %v1203 = vld [vmem:[%s1173 + $0x74] sm:$0xf]
        %v1204 = vld [vmem:[%s1173 + $0x78] sm:$0xf]
        %v1205 = vld [vmem:[%s1173 + $0x7c] sm:$0xf]
        %v1206 = vld [vmem:[%s1173 + $0x80] sm:$0xf]
        %v1207 = vld [vmem:[%s1173 + $0x84] sm:$0xf]
        %v1208 = vld [vmem:[%s1173 + $0x88] sm:$0xf]
        %v1209 = vld [vmem:[%s1173 + $0x8c] sm:$0xf]
        %v1210 = vld [vmem:[%s1173 + $0x90] sm:$0xf]
        %v1211 = vld [vmem:[%s1173 + $0x94] sm:$0xf]
        %v1212 = vld [vmem:[%s1173 + $0x98] sm:$0xf]
        %v1213 = vld [vmem:[%s1173 + $0x9c] sm:$0xf]
        %v1214 = vld [vmem:[%s1173 + $0xa0] sm:$0xf]
        %v1215 = vld [vmem:[%s1173 + $0xa4] sm:$0xf]
        %v1216 = vld [vmem:[%s1173 + $0xa8] sm:$0xf]
        %v1217 = vld [vmem:[%s1173 + $0xac] sm:$0xf]
        %v1218 = vld [vmem:[%s1173 + $0xb0] sm:$0xf]
        %v1219 = vld [vmem:[%s1173 + $0xb4] sm:$0xf]
        %v1220 = vld [vmem:[%s1173 + $0xb8] sm:$0xf]
        %v1221 = vld [vmem:[%s1173 + $0xbc] sm:$0xf]
        %v1222 = vpack.c.b16 %v1170, %v610
        %v1223 = vpack.c.b16 %v1171, %v611
        %v1224 = vpack.c.b16 %v1172, %v612
        %v1276 = vunpack.c.l.b16 %v1174
        %v1277 = vunpack.c.l.b16 %v1175
        %v1278 = vunpack.c.l.b16 %v1176
        %v1279 = vunpack.c.l.b16 %v1177
        %v1280 = vunpack.c.l.b16 %v1178
        %v1281 = vunpack.c.l.b16 %v1179
        %v1282 = vunpack.c.l.b16 %v1180
        %v1283 = vunpack.c.l.b16 %v1181
        %v1284 = vunpack.c.l.b16 %v1182
        %v1285 = vunpack.c.l.b16 %v1183
        %v1286 = vunpack.c.l.b16 %v1184
        %v1287 = vunpack.c.l.b16 %v1185
        %v1288 = vunpack.c.l.b16 %v1186
        %v1289 = vunpack.c.l.b16 %v1187
        %v1290 = vunpack.c.l.b16 %v1188
        %v1291 = vunpack.c.l.b16 %v1189
        %v1292 = vunpack.c.l.b16 %v1190
        %v1293 = vunpack.c.l.b16 %v1191
        %v1294 = vunpack.c.l.b16 %v1192
        %v1295 = vunpack.c.l.b16 %v1193
        %v1296 = vunpack.c.l.b16 %v1194
        %v1297 = vunpack.c.l.b16 %v1195
        %v1298 = vunpack.c.l.b16 %v1196
        %v1299 = vunpack.c.l.b16 %v1197
        %v1300 = vunpack.c.l.b16 %v1198
        %v1301 = vunpack.c.l.b16 %v1199
        %v1302 = vunpack.c.l.b16 %v1200
        %v1303 = vunpack.c.l.b16 %v1201
        %v1304 = vunpack.c.l.b16 %v1202
        %v1305 = vunpack.c.l.b16 %v1203
        %v1306 = vunpack.c.l.b16 %v1204
        %v1307 = vunpack.c.l.b16 %v1205
        %v1308 = vunpack.c.l.b16 %v1206
        %v1309 = vunpack.c.l.b16 %v1207
        %v1310 = vunpack.c.l.b16 %v1208
        %v1311 = vunpack.c.l.b16 %v1209
        %v1312 = vunpack.c.l.b16 %v1210
        %v1313 = vunpack.c.l.b16 %v1211
        %v1314 = vunpack.c.l.b16 %v1212
        %v1315 = vunpack.c.l.b16 %v1213
        %v1316 = vunpack.c.l.b16 %v1214
        %v1317 = vunpack.c.l.b16 %v1215
        %v1318 = vunpack.c.l.b16 %v1216
        %v1319 = vunpack.c.l.b16 %v1217
        %v1320 = vunpack.c.l.b16 %v1218
        %v1321 = vunpack.c.l.b16 %v1219
        %v1322 = vunpack.c.l.b16 %v1220
        %v1323 = vunpack.c.l.b16 %v1221
        %v1324 = vpack.c.b16 %v1277, %v1276
        %v1325 = vpack.c.b16 %v1279, %v1278
        %v1326 = vpack.c.b16 %v1281, %v1280
        %v1327 = vpack.c.b16 %v1283, %v1282
        %v1328 = vpack.c.b16 %v1285, %v1284
        %v1329 = vpack.c.b16 %v1287, %v1286
        %v1330 = vpack.c.b16 %v1289, %v1288
        %v1331 = vpack.c.b16 %v1291, %v1290
        %v1332 = vpack.c.b16 %v1293, %v1292
        %v1333 = vpack.c.b16 %v1295, %v1294
        %v1334 = vpack.c.b16 %v1297, %v1296
        %v1335 = vpack.c.b16 %v1299, %v1298
        %v1336 = vpack.c.b16 %v1301, %v1300
        %v1337 = vpack.c.b16 %v1303, %v1302
        %v1338 = vpack.c.b16 %v1305, %v1304
        %v1339 = vpack.c.b16 %v1307, %v1306
        %v1340 = vpack.c.b16 %v1309, %v1308
        %v1341 = vpack.c.b16 %v1311, %v1310
        %v1342 = vpack.c.b16 %v1313, %v1312
        %v1343 = vpack.c.b16 %v1315, %v1314
        %v1344 = vpack.c.b16 %v1317, %v1316
        %v1345 = vpack.c.b16 %v1319, %v1318
        %v1346 = vpack.c.b16 %v1321, %v1320
        %v1347 = vpack.c.b16 %v1323, %v1322
        %1372 = vmatprep.subr.bf16.mxu0 0
        %1373 = vmatpush1.bf16.msra.mxu0 %v1324
        %1374 = vmatprep.subr.bf16.mxu0 0
        %1375 = vmatpush1.bf16.msra.mxu0 %v1325
        %1376 = vmatprep.subr.bf16.mxu0 0
        %1377 = vmatpush1.bf16.msra.mxu0 %v1326
        %1378 = vmatprep.subr.bf16.mxu0 0
        %1379 = vmatpush1.bf16.msra.mxu0 %v1327
        %1380 = vmatprep.subr.bf16.mxu0 0
        %1381 = vmatpush1.bf16.msra.mxu0 %v1328
        %1382 = vmatprep.subr.bf16.mxu0 0
        %1383 = vmatpush1.bf16.msra.mxu0 %v1329
        %1384 = vmatprep.subr.bf16.mxu0 0
        %1385 = vmatpush1.bf16.msra.mxu0 %v1330
        %1386 = vmatprep.subr.bf16.mxu0 0
        %1387 = vmatpush1.bf16.msra.mxu0 %v1331
        %1388 = vmatprep.subr.bf16.mxu0 0
        %1389 = vmatpush1.bf16.msra.mxu0 %v1332
        %1390 = vmatprep.subr.bf16.mxu0 0
        %1391 = vmatpush1.bf16.msra.mxu0 %v1333
        %1392 = vmatprep.subr.bf16.mxu0 0
        %1393 = vmatpush1.bf16.msra.mxu0 %v1334
        %1394 = vmatprep.subr.bf16.mxu0 0
        %1395 = vmatpush1.bf16.msra.mxu0 %v1335
        %1396 = vmatprep.subr.bf16.mxu0 0
        %1397 = vmatpush1.bf16.msra.mxu0 %v1336
        %1398 = vmatprep.subr.bf16.mxu0 0
        %1399 = vmatpush1.bf16.msra.mxu0 %v1337
        %1400 = vmatprep.subr.bf16.mxu0 0
        %1401 = vmatpush1.bf16.msra.mxu0 %v1338
        %1402 = vmatprep.subr.bf16.mxu0 0
        %1403 = vmatpush1.bf16.msra.mxu0 %v1339
        %1404 = vmatprep.mubr.bf16.mxu0 %v920
        %1405 = vmatmul.mubr.bf16.gmra.mrb[0].mxu0 %v919
        %v1406 = vpop.f32.mrb[0].mxu0
        %v1407 = vadd.f32 0.0, %v1406
        %v1408 = vpop.f32.mrb[0].mxu0
        %v1409 = vpop.f32.mrb[0].mxu0
        %v1410 = vadd.f32 0.0, %v1409
        %v1411 = vpop.f32.mrb[0].mxu0
        %1412 = vmatprep.mubr.bf16.mxu0 %v1223
        %1413 = vmatmul.mubr.bf16.gmra.mrb[0].mxu0 %v1222
        %v1414 = vpop.f32.mrb[0].mxu0
        %v1415 = vadd.f32 0.0, %v1414
        %v1416 = vpop.f32.mrb[0].mxu0
        %v1417 = vpop.f32.mrb[0].mxu0
        %v1418 = vadd.f32 0.0, %v1417
        %v1419 = vpop.f32.mrb[0].mxu0
        %1420 = vdwg.mxu0
        %1421 = vmatprep.subr.bf16.mxu0 0
        %1422 = vmatpush1.bf16.msra.mxu0 %v1340
        %1423 = vmatprep.subr.bf16.mxu0 0
        %1424 = vmatpush1.bf16.msra.mxu0 %v1341
        %1425 = vmatprep.subr.bf16.mxu0 0
        %1426 = vmatpush1.bf16.msra.mxu0 %v1342
        %1427 = vmatprep.subr.bf16.mxu0 0
        %1428 = vmatpush1.bf16.msra.mxu0 %v1343
        %1429 = vmatprep.subr.bf16.mxu0 0
        %1430 = vmatpush1.bf16.msra.mxu0 %v1344
        %1431 = vmatprep.subr.bf16.mxu0 0
        %1432 = vmatpush1.bf16.msra.mxu0 %v1345
        %1433 = vmatprep.subr.bf16.mxu0 0
        %1434 = vmatpush1.bf16.msra.mxu0 %v1346
        %1435 = vmatprep.subr.bf16.mxu0 0
        %1436 = vmatpush1.bf16.msra.mxu0 %v1347
        %1437 = vmatprep.subr.bf16.mxu0 0
        %1438 = vmatpush1.bf16.msra.mxu0 0
        %1439 = vmatprep.subr.bf16.mxu0 0
        %1440 = vmatpush1.bf16.msra.mxu0 0
        %1441 = vmatprep.subr.bf16.mxu0 0
        %1442 = vmatpush1.bf16.msra.mxu0 0
        %1443 = vmatprep.subr.bf16.mxu0 0
        %1444 = vmatpush1.bf16.msra.mxu0 0
        %1445 = vmatprep.subr.bf16.mxu0 0
        %1446 = vmatpush1.bf16.msra.mxu0 0
        %1447 = vmatprep.subr.bf16.mxu0 0
        %1448 = vmatpush1.bf16.msra.mxu0 0
        %1449 = vmatprep.subr.bf16.mxu0 0
        %1450 = vmatpush1.bf16.msra.mxu0 0
        %1451 = vmatprep.subr.bf16.mxu0 0
        %1452 = vmatpush1.bf16.msra.mxu0 0
        %1453 = vmatprep.mubr.bf16.mxu0 0
        %1454 = vmatmul.mubr.bf16.gmra.mrb[0].mxu0 %v921
        %v1455 = vpop.f32.mrb[0].mxu0
        %v1456 = vadd.f32 %v1407, %v1455
        %v1457 = vpop.f32.mrb[0].mxu0
        %v1458 = vpop.f32.mrb[0].mxu0
        %v1459 = vadd.f32 %v1410, %v1458
        %v1460 = vpop.f32.mrb[0].mxu0
        %1461 = vmatprep.mubr.bf16.mxu0 0
        %1462 = vmatmul.mubr.bf16.gmra.mrb[0].mxu0 %v1224
        %v1463 = vpop.f32.mrb[0].mxu0
        %v1464 = vadd.f32 %v1415, %v1463
        %v1465 = vpop.f32.mrb[0].mxu0
        %v1466 = vpop.f32.mrb[0].mxu0
        %v1467 = vadd.f32 %v1418, %v1466
        %v1468 = vpop.f32.mrb[0].mxu0
        %1469 = vdwg.mxu0
        %v1470 = vadd.f32 %v1156, %v1456
        %v1471 = vadd.f32 %v1159, %v1459
        %v1472 = vadd.f32 %v1164, %v1464
        %v1473 = vadd.f32 %v1167, %v1467
        %v1474 = vld [vmem:[%s4] sm:$0x1]
        %v1476 = vlaneseq
        %v1477 = vshrl.u32 %v1476, 7
        %v1478 = vsub.s32 0, %v1477
        %v1479 = vrot.slane %v1474, %v1478
        %v1481 = vadd.f32 %v1470, %v1479
        %v1482 = vadd.f32 %v1471, %v1479
        %v1483 = vadd.f32 %v1472, %v1479
        %v1484 = vadd.f32 %v1473, %v1479
        %v1485 = vmax.f32 %v1481, 0.0
        %v1486 = vmax.f32 %v1482, 0.0
        %v1487 = vmax.f32 %v1483, 0.0
        %v1488 = vmax.f32 %v1484, 0.0
        %1489 = vst [vmem:[%s328] sm:$0xff] %v1485
        %1490 = vst [vmem:[%s328 + $0x8] sm:$0xff] %v1486
        %1491 = vst [vmem:[%s328 + $0x10] sm:$0xff] %v1487
        %1492 = vst [vmem:[%s328 + $0x18] sm:$0xff] %v1488
        %s1493 = sand.u32 %s183, 1
        %s1494 = scalar_lea.sflag [#allocation4], %s1493
        %s1495 = sand.u32 %s183, 1
        %s1496 = smul.addr %s1495, 32
        %s1497 = scalar_lea.vmem [#allocation3], %s1496
        // Predicated region
        $region57: #{global_feature_extractor.5} parent=39 // pred_check
          %p1498 = pneg %p193
        $region58: #{global_feature_extractor.5} parent=39 // pred_check_branch
          %1500 = sbr.rel (%p1498) target = $region60
        $region59: #{global_feature_extractor.5} parent=39 // pred_region
          %s1501 = smul.u32 4, %s24
          %s1503 = ssub.s32 512, 512
          %1504 = vsyncadd %s1494, %s1503
          %s1505 = smul.addr %s23, 8
          %s1506 = sadd.s32 %s1501, %s1505
          %s1507 = smul.addr %s1506, 128
          %s1508 = scalar_lea.hbm %s5, %s1507
          %s1509 = sshll.u32 %s1497, 4
          %s1510 = int_to_ptr.vmem [resolvable:$true] %s1509
          %1515 = dma.vmem_to_hbm [thread:$0]  %s1510, 512, %s1508, %s1494, 128, 128, 8
        $region60: #{global_feature_extractor.5} parent=39 // pred_fallthru
          _
      $region40: #{global_feature_extractor.5} parent=5 // pred_fallthru
        _
      %p1516 = scmp.le.s32.totalorder 2, %s14
      // Predicated region
      $region61: #{global_feature_extractor.5} parent=5 // pred_check
        %p1517 = pneg %p1516
      $region62: #{global_feature_extractor.5} parent=5 // pred_check_branch
        %1519 = sbr.rel (%p1517) target = $region64
      $region63: #{global_feature_extractor.5} parent=5 // pred_region
        %s1520 = ssub.s32 %s14, 2
        // Predicated region
        $region65: #{global_feature_extractor.5} parent=63 // pred_check
          %p1521 = pneg %p199
        $region66: #{global_feature_extractor.5} parent=63 // pred_check_branch
          %1523 = sbr.rel (%p1521) target = $region68
        $region67: #{global_feature_extractor.5} parent=63 // pred_region
          %s1524 = sand.u32 %s184, 1
          %s1525 = scalar_lea.sflag [#allocation4], %s1524
          %s1526 = sand.u32 %s184, 1
          %s1527 = smul.addr %s1526, 32
          %s1528 = scalar_lea.vmem [#allocation3], %s1527
          %1529 = dma.done %s1525, 512
        $region68: #{global_feature_extractor.5} parent=63 // pred_fallthru
          _
      $region64: #{global_feature_extractor.5} parent=5 // pred_fallthru
        _
    $region6: #{global_feature_extractor.5} parent=1 // loop_footer
      %s18 = sadd.s32 1, %s14
    $region7: #{global_feature_extractor.5} parent=1 // loop_footer_branch
      %13 = sbr.rel target = $region3
    $region8: #{global_feature_extractor.5} parent=1 // loop_exit
      _
    %1530 = vsyncpa [#allocation4], 1
    %s1531 = scalar_lea.sflag [#allocation4], 1
    %1532 = vsyncpa %s1531, 1

// kernel: global_feature_extractor.3
$region0: #{global_feature_extractor.3}
  #allocation0 [shape = 'u32[]', space=smem, size = 0x4, offset = 0x4, fixed_abs, tag = 'smem constant byte address 0x4 - core index']
  #allocation1 [shape = 'u32[144,128]{1,0:T(1,128)}', space=vmem, size = 0x12000, scoped, tag = 'internal scratch']
  #allocation2 [shape = 'bf16[12,16,3]{2,1,0:T(16,128)(2,1)}', space=vmem, size = 0xc000, scoped, tag = 'scratch operand']
  #allocation3 [shape = 'bf16[10,16,64]{2,1,0:T(16,128)(2,1)}', space=vmem, size = 0xa000, scoped, tag = 'scratch operand']
  %s0 = inlined_call_operand.vmem [shape: bf16[2,16,16,3], index: 0, kind: input, shape index: {}, may-alias: {0,1,2}]
  %s1 = inlined_call_operand.vmem [shape: bf16[2,16,16,3], index: 1, kind: input, shape index: {}, may-alias: {0,1,2}]
  %s2 = inlined_call_operand.vmem [shape: bf16[2,16,16,3], index: 2, kind: input, shape index: {}, may-alias: {0,1,2}]
  %s3 = inlined_call_operand.vmem [shape: bf16[27,64], index: 3, kind: input, shape index: {}]
  %s4 = inlined_call_operand.vmem [shape: f32[1,64], index: 4, kind: input, shape index: {}]
  %s5 = inlined_call_operand.vmem [shape: bf16[192,192], index: 5, kind: input, shape index: {}]
  %s6 = inlined_call_operand.vmem [shape: f32[1,64], index: 6, kind: input, shape index: {}]
  %s7 = inlined_call_operand.vmem [shape: bf16[2,8,8,64], index: 7, kind: output, shape index: {}]
  %s8 = sld [smem:[#allocation0]]
  $region85: #{global_feature_extractor.3} parent=0
    _
  %s10 = ssub.s32 1, %s8
  %s11 = scalar_select 0, %s10, %s8
  loop: start=0, step=1, limit=6
  $region2: #{global_feature_extractor.3} parent=0 // loop_pre_header
    _
  $region3: #{global_feature_extractor.3} parent=0 // loop_header
    %s13 = sphi 0, %s17
    %p14 = scmp.ge.s32.totalorder %s13, 6
    %s20 = sphi 0, %s32
    %s21 = sphi 0, %s28
    %s22 = sphi 0, %s20
    %s23 = sphi 0, %s21
    %s24 = sphi 0, %s22
    %s25 = sphi 0, %s23
    %s37 = sphi 0, %s39
    %s40 = sphi 0, %s37
    %s41 = sphi 0, %s40
    %s57 = sphi 0, %s41
    %s73 = sphi 0, %s75
    %s76 = sphi 0, %s73
    %s77 = sphi 0, %s76
    %s93 = sphi 0, %s77
    %s109 = sphi 0, %s111
    %s112 = sphi 0, %s109
    %s113 = sphi 0, %s112
    %s129 = sphi 0, %s113
    %s133 = sphi 0, %s133
    %s135 = sphi 0, %s133
    %s136 = sphi 0, %s135
    %s150 = sphi 0, %s136
    %s154 = sphi 0, %s154
    %s156 = sphi 0, %s154
    %s157 = sphi 0, %s156
    %s171 = sphi 0, %s157
    %s175 = sphi 0, %s175
    %s177 = sphi 0, %s175
    %s178 = sphi 0, %s177
    %s192 = sphi 0, %s178
    %s196 = sphi 0, %s196
    %s198 = sphi 0, %s196
    %s199 = sphi 0, %s198
    %s213 = sphi 0, %s199
    %s221 = sphi 0, %s223
    %s224 = sphi 0, %s221
    %s225 = sphi 0, %s224
    %s241 = sphi 0, %s225
  $region4: #{global_feature_extractor.3} parent=0 // loop_header_branch
    %16 = sbr.rel (%p14) target = $region8
  $region5: #{global_feature_extractor.3} parent=0 // loop_body
    %s18 = ssub.s32 %s13, 1
    %s19 = ssub.s32 %s13, 2
    %s26 = sadd.s32 1, %s21
    %p27 = scmp.ge.s32.totalorder %s26, 2
    %s28 = scalar_select %p27, 0, %s26
    %s29 = sadd.s32 1, %s20
    %s30 = scalar_select %p27, %s29, %s20
    %p31 = scmp.ge.s32.totalorder %s30, 2
    %s32 = scalar_select %p31, 0, %s30
    %s33 = ssub.s32 %s20, %s32
    %s34 = ssub.s32 %s21, %s28
    %s35 = sor.u32 %s33, %s34
    %p36 = scmp.eq.s32.totalorder %s35, 0
    %s38 = sadd.s32 %s37, 1
    %s39 = scalar_select %p36, %s37, %s38
    %p42 = pneg %p36
    %p43 = scmp.eq.s32.totalorder %s13, 3
    %p44 = por %p42, %p43
    %p45 = scmp.ne.s32.totalorder %s37, %s40
    %p46 = scmp.eq.s32.totalorder %s13, 0
    %p47 = por %p45, %p46
    %p48 = scmp.ne.s32.totalorder %s37, %s40
    %p49 = scmp.eq.s32.totalorder %s18, 3
    %p50 = por %p48, %p49
    %p51 = scmp.ne.s32.totalorder %s40, %s41
    %p52 = scmp.eq.s32.totalorder %s18, 0
    %p53 = por %p51, %p52
    %p54 = scmp.ne.s32.totalorder %s40, %s41
    %p55 = scmp.eq.s32.totalorder %s19, 3
    %p56 = por %p54, %p55
    %p58 = scmp.ne.s32.totalorder %s41, %s57
    %p59 = scmp.eq.s32.totalorder %s19, 0
    %p60 = por %p58, %p59
    %s61 = smul.u32 %s21, 4
    %s62 = ssub.s32 %s61, 1
    %p63 = scmp.gt.s32.totalorder %s62, 0
    %s64 = scalar_select %p63, %s62, 0
    %s65 = smul.u32 %s28, 4
    %s66 = ssub.s32 %s65, 1
    %p67 = scmp.gt.s32.totalorder %s66, 0
    %s68 = scalar_select %p67, %s66, 0
    %s69 = ssub.s32 %s20, %s32
    %s70 = ssub.s32 %s64, %s68
    %s71 = sor.u32 %s69, %s70
    %p72 = scmp.eq.s32.totalorder %s71, 0
    %s74 = sadd.s32 %s73, 1
    %s75 = scalar_select %p72, %s73, %s74
    %p78 = pneg %p72
    %p79 = scmp.eq.s32.totalorder %s13, 3
    %p80 = por %p78, %p79
    %p81 = scmp.ne.s32.totalorder %s73, %s76
    %p82 = scmp.eq.s32.totalorder %s13, 0
    %p83 = por %p81, %p82
    %p84 = scmp.ne.s32.totalorder %s73, %s76
    %p85 = scmp.eq.s32.totalorder %s18, 3
    %p86 = por %p84, %p85
    %p87 = scmp.ne.s32.totalorder %s76, %s77
    %p88 = scmp.eq.s32.totalorder %s18, 0
    %p89 = por %p87, %p88
    %p90 = scmp.ne.s32.totalorder %s76, %s77
    %p91 = scmp.eq.s32.totalorder %s19, 3
    %p92 = por %p90, %p91
    %p94 = scmp.ne.s32.totalorder %s77, %s93
    %p95 = scmp.eq.s32.totalorder %s19, 0
    %p96 = por %p94, %p95
    %s97 = sadd.s32 %s21, 1
    %s98 = smul.u32 %s97, 4
    %p99 = scmp.lt.s32.totalorder %s98, 7
    %s100 = scalar_select %p99, %s98, 7
    %s101 = sadd.s32 %s28, 1
    %s102 = smul.u32 %s101, 4
    %p103 = scmp.lt.s32.totalorder %s102, 7
    %s104 = scalar_select %p103, %s102, 7
    %s105 = ssub.s32 %s20, %s32
    %s106 = ssub.s32 %s100, %s104
    %s107 = sor.u32 %s105, %s106
    %p108 = scmp.eq.s32.totalorder %s107, 0
    %s110 = sadd.s32 %s109, 1
    %s111 = scalar_select %p108, %s109, %s110
    %p114 = pneg %p108
    %p115 = scmp.eq.s32.totalorder %s13, 3
    %p116 = por %p114, %p115
    %p117 = scmp.ne.s32.totalorder %s109, %s112
    %p118 = scmp.eq.s32.totalorder %s13, 0
    %p119 = por %p117, %p118
    %p120 = scmp.ne.s32.totalorder %s109, %s112
    %p121 = scmp.eq.s32.totalorder %s18, 3
    %p122 = por %p120, %p121
    %p123 = scmp.ne.s32.totalorder %s112, %s113
    %p124 = scmp.eq.s32.totalorder %s18, 0
    %p125 = por %p123, %p124
    %p126 = scmp.ne.s32.totalorder %s112, %s113
    %p127 = scmp.eq.s32.totalorder %s19, 3
    %p128 = por %p126, %p127
    %p130 = scmp.ne.s32.totalorder %s113, %s129
    %p131 = scmp.eq.s32.totalorder %s19, 0
    %p132 = por %p130, %p131
    %s134 = sadd.s32 %s133, 1
    %p137 = scmp.eq.s32.totalorder %s13, 3
    %p138 = scmp.ne.s32.totalorder %s133, %s135
    %p139 = scmp.eq.s32.totalorder %s13, 0
    %p140 = por %p138, %p139
    %p141 = scmp.ne.s32.totalorder %s133, %s135
    %p142 = scmp.eq.s32.totalorder %s18, 3
    %p143 = por %p141, %p142
    %p144 = scmp.ne.s32.totalorder %s135, %s136
    %p145 = scmp.eq.s32.totalorder %s18, 0
    %p146 = por %p144, %p145
    %p147 = scmp.ne.s32.totalorder %s135, %s136
    %p148 = scmp.eq.s32.totalorder %s19, 3
    %p149 = por %p147, %p148
    %p151 = scmp.ne.s32.totalorder %s136, %s150
    %p152 = scmp.eq.s32.totalorder %s19, 0
    %p153 = por %p151, %p152
    %s155 = sadd.s32 %s154, 1
    %p158 = scmp.eq.s32.totalorder %s13, 3
    %p159 = scmp.ne.s32.totalorder %s154, %s156
    %p160 = scmp.eq.s32.totalorder %s13, 0
    %p161 = por %p159, %p160
    %p162 = scmp.ne.s32.totalorder %s154, %s156
    %p163 = scmp.eq.s32.totalorder %s18, 3
    %p164 = por %p162, %p163
    %p165 = scmp.ne.s32.totalorder %s156, %s157
    %p166 = scmp.eq.s32.totalorder %s18, 0
    %p167 = por %p165, %p166
    %p168 = scmp.ne.s32.totalorder %s156, %s157
    %p169 = scmp.eq.s32.totalorder %s19, 3
    %p170 = por %p168, %p169
    %p172 = scmp.ne.s32.totalorder %s157, %s171
    %p173 = scmp.eq.s32.totalorder %s19, 0
    %p174 = por %p172, %p173
    %s176 = sadd.s32 %s175, 1
    %p179 = scmp.eq.s32.totalorder %s13, 3
    %p180 = scmp.ne.s32.totalorder %s175, %s177
    %p181 = scmp.eq.s32.totalorder %s13, 0
    %p182 = por %p180, %p181
    %p183 = scmp.ne.s32.totalorder %s175, %s177
    %p184 = scmp.eq.s32.totalorder %s18, 3
    %p185 = por %p183, %p184
    %p186 = scmp.ne.s32.totalorder %s177, %s178
    %p187 = scmp.eq.s32.totalorder %s18, 0
    %p188 = por %p186, %p187
    %p189 = scmp.ne.s32.totalorder %s177, %s178
    %p190 = scmp.eq.s32.totalorder %s19, 3
    %p191 = por %p189, %p190
    %p193 = scmp.ne.s32.totalorder %s178, %s192
    %p194 = scmp.eq.s32.totalorder %s19, 0
    %p195 = por %p193, %p194
    %s197 = sadd.s32 %s196, 1
    %p200 = scmp.eq.s32.totalorder %s13, 3
    %p201 = scmp.ne.s32.totalorder %s196, %s198
    %p202 = scmp.eq.s32.totalorder %s13, 0
    %p203 = por %p201, %p202
    %p204 = scmp.ne.s32.totalorder %s196, %s198
    %p205 = scmp.eq.s32.totalorder %s18, 3
    %p206 = por %p204, %p205
    %p207 = scmp.ne.s32.totalorder %s198, %s199
    %p208 = scmp.eq.s32.totalorder %s18, 0
    %p209 = por %p207, %p208
    %p210 = scmp.ne.s32.totalorder %s198, %s199
    %p211 = scmp.eq.s32.totalorder %s19, 3
    %p212 = por %p210, %p211
    %p214 = scmp.ne.s32.totalorder %s199, %s213
    %p215 = scmp.eq.s32.totalorder %s19, 0
    %p216 = por %p214, %p215
    %s217 = ssub.s32 %s20, %s32
    %s218 = ssub.s32 %s21, %s28
    %s219 = sor.u32 %s217, %s218
    %p220 = scmp.eq.s32.totalorder %s219, 0
    %s222 = sadd.s32 %s221, 1
    %s223 = scalar_select %p220, %s221, %s222
    %p226 = pneg %p220
    %p227 = scmp.eq.s32.totalorder %s13, 3
    %p228 = por %p226, %p227
    %p229 = scmp.ne.s32.totalorder %s221, %s224
    %p230 = scmp.eq.s32.totalorder %s13, 0
    %p231 = por %p229, %p230
    %p232 = scmp.ne.s32.totalorder %s221, %s224
    %p233 = scmp.eq.s32.totalorder %s18, 3
    %p234 = por %p232, %p233
    %p235 = scmp.ne.s32.totalorder %s224, %s225
    %p236 = scmp.eq.s32.totalorder %s18, 0
    %p237 = por %p235, %p236
    %p238 = scmp.ne.s32.totalorder %s224, %s225
    %p239 = scmp.eq.s32.totalorder %s19, 3
    %p240 = por %p238, %p239
    %p242 = scmp.ne.s32.totalorder %s225, %s241
    %p243 = scmp.eq.s32.totalorder %s19, 0
    %p244 = por %p242, %p243
    %p245 = scmp.le.s32.totalorder 1, %s13
    %p246 = scmp.lt.s32.totalorder %s13, 5
    %p247 = pnand %p245, %p246
    %p248 = pneg %p247
    // Predicated region
    $region9: #{global_feature_extractor.3} parent=5 // pred_check
      _
    $region10: #{global_feature_extractor.3} parent=5 // pred_check_branch
      %250 = sbr.rel (%p247) target = $region12
    $region11: #{global_feature_extractor.3} parent=5 // pred_region
      %s251 = ssub.s32 %s13, 1
      // Predicated region
      $region13: #{global_feature_extractor.3} parent=11 // pred_check
        %p252 = pneg %p146
      $region14: #{global_feature_extractor.3} parent=11 // pred_check_branch
        %254 = sbr.rel (%p252) target = $region16
      $region15: #{global_feature_extractor.3} parent=11 // pred_region
        _
      $region16: #{global_feature_extractor.3} parent=11 // pred_fallthru
        _
      // Predicated region
      $region17: #{global_feature_extractor.3} parent=11 // pred_check
        %p255 = pneg %p167
      $region18: #{global_feature_extractor.3} parent=11 // pred_check_branch
        %257 = sbr.rel (%p255) target = $region20
      $region19: #{global_feature_extractor.3} parent=11 // pred_region
        _
      $region20: #{global_feature_extractor.3} parent=11 // pred_fallthru
        _
      // Predicated region
      $region21: #{global_feature_extractor.3} parent=11 // pred_check
        %p258 = pneg %p188
      $region22: #{global_feature_extractor.3} parent=11 // pred_check_branch
        %260 = sbr.rel (%p258) target = $region24
      $region23: #{global_feature_extractor.3} parent=11 // pred_region
        _
      $region24: #{global_feature_extractor.3} parent=11 // pred_fallthru
        _
      // Predicated region
      $region25: #{global_feature_extractor.3} parent=11 // pred_check
        %p261 = pneg %p209
      $region26: #{global_feature_extractor.3} parent=11 // pred_check_branch
        %263 = sbr.rel (%p261) target = $region28
      $region27: #{global_feature_extractor.3} parent=11 // pred_region
        _
      $region28: #{global_feature_extractor.3} parent=11 // pred_fallthru
        _
    $region12: #{global_feature_extractor.3} parent=5 // pred_fallthru
      _
    %p264 = scmp.lt.s32.totalorder %s13, 4
    // Predicated region
    $region29: #{global_feature_extractor.3} parent=5 // pred_check
      %p265 = pneg %p264
    $region30: #{global_feature_extractor.3} parent=5 // pred_check_branch
      %267 = sbr.rel (%p265) target = $region32
    $region31: #{global_feature_extractor.3} parent=5 // pred_region
      // Predicated region
      $region33: #{global_feature_extractor.3} parent=31 // pred_check
        %p268 = pneg %p47
      $region34: #{global_feature_extractor.3} parent=31 // pred_check_branch
        %270 = sbr.rel (%p268) target = $region36
      $region35: #{global_feature_extractor.3} parent=31 // pred_region
        %s271 = smul.u32 8, %s21
        %p272 = scmp.lt.s32.totalorder %s20, 1
        %s273 = scalar_select %p272, %s20, 1
        %p274 = scmp.lt.s32.totalorder %s271, 15
        %s275 = scalar_select %p274, %s271, 15
        %s276 = smul.addr %s275, 2
        %s277 = smul.addr %s273, 32
        %s278 = sadd.s32 %s276, %s277
        %s279 = smul.addr %s278, 4
        %s280 = scalar_lea.vmem %s0, %s279
        %s281 = smul.u32 8, %s21
      $region36: #{global_feature_extractor.3} parent=31 // pred_fallthru
        _
      // Predicated region
      $region37: #{global_feature_extractor.3} parent=31 // pred_check
        %p282 = pneg %p83
      $region38: #{global_feature_extractor.3} parent=31 // pred_check_branch
        %284 = sbr.rel (%p282) target = $region40
      $region39: #{global_feature_extractor.3} parent=31 // pred_region
        %s285 = smul.u32 %s21, 4
        %s286 = ssub.s32 %s285, 1
        %p287 = scmp.gt.s32.totalorder %s286, 0
        %s288 = scalar_select %p287, %s286, 0
        %s289 = smul.u32 2, %s288
        %p290 = scmp.lt.s32.totalorder %s20, 1
        %s291 = scalar_select %p290, %s20, 1
        %p292 = scmp.lt.s32.totalorder %s289, 15
        %s293 = scalar_select %p292, %s289, 15
        %s294 = smul.addr %s293, 2
        %s295 = smul.addr %s291, 32
        %s296 = sadd.s32 %s294, %s295
        %s297 = smul.addr %s296, 4
        %s298 = scalar_lea.vmem %s1, %s297
        %s299 = smul.u32 %s21, 4
        %s300 = ssub.s32 %s299, 1
        %p301 = scmp.gt.s32.totalorder %s300, 0
        %s302 = scalar_select %p301, %s300, 0
        %s303 = smul.u32 2, %s302
      $region40: #{global_feature_extractor.3} parent=31 // pred_fallthru
        _
      // Predicated region
      $region41: #{global_feature_extractor.3} parent=31 // pred_check
        %p304 = pneg %p119
      $region42: #{global_feature_extractor.3} parent=31 // pred_check_branch
        %306 = sbr.rel (%p304) target = $region44
      $region43: #{global_feature_extractor.3} parent=31 // pred_region
        %s307 = sadd.s32 %s21, 1
        %s308 = smul.u32 %s307, 4
        %p309 = scmp.lt.s32.totalorder %s308, 7
        %s310 = scalar_select %p309, %s308, 7
        %s311 = smul.u32 2, %s310
        %p312 = scmp.lt.s32.totalorder %s20, 1
        %s313 = scalar_select %p312, %s20, 1
        %p314 = scmp.lt.s32.totalorder %s311, 15
        %s315 = scalar_select %p314, %s311, 15
        %s316 = smul.addr %s315, 2
        %s317 = smul.addr %s313, 32
        %s318 = sadd.s32 %s316, %s317
        %s319 = smul.addr %s318, 4
        %s320 = scalar_lea.vmem %s2, %s319
        %s321 = sadd.s32 %s21, 1
        %s322 = smul.u32 %s321, 4
        %p323 = scmp.lt.s32.totalorder %s322, 7
        %s324 = scalar_select %p323, %s322, 7
        %s325 = smul.u32 2, %s324
      $region44: #{global_feature_extractor.3} parent=31 // pred_fallthru
        _
    $region32: #{global_feature_extractor.3} parent=5 // pred_fallthru
      _
    %p326 = scmp.le.s32.totalorder 1, %s13
    %p327 = scmp.lt.s32.totalorder %s13, 5
    %p328 = pnand %p326, %p327
    %p329 = pneg %p328
    // Predicated region
    $region45: #{global_feature_extractor.3} parent=5 // pred_check
      _
    $region46: #{global_feature_extractor.3} parent=5 // pred_check_branch
      %331 = sbr.rel (%p328) target = $region48
    $region47: #{global_feature_extractor.3} parent=5 // pred_region
      %s332 = ssub.s32 %s13, 1
      %s333 = smul.u32 8, %s23
      %p334 = scmp.lt.s32.totalorder %s22, 1
      %s335 = scalar_select %p334, %s22, 1
      %p336 = scmp.lt.s32.totalorder %s333, 15
      %s337 = scalar_select %p336, %s333, 15
      %s338 = smul.addr %s337, 2
      %s339 = smul.addr %s335, 32
      %s340 = sadd.s32 %s338, %s339
      %s341 = smul.addr %s340, 4
      %s342 = scalar_lea.vmem %s0, %s341
      %p343 = pneg %p53
      %p344 = pneg %p50
      %s345 = smul.u32 %s23, 4
      %s346 = ssub.s32 %s345, 1
      %p347 = scmp.gt.s32.totalorder %s346, 0
      %s348 = scalar_select %p347, %s346, 0
      %s349 = smul.u32 2, %s348
      %p350 = scmp.lt.s32.totalorder %s22, 1
      %s351 = scalar_select %p350, %s22, 1
      %p352 = scmp.lt.s32.totalorder %s349, 15
      %s353 = scalar_select %p352, %s349, 15
      %s354 = smul.addr %s353, 2
      %s355 = smul.addr %s351, 32
      %s356 = sadd.s32 %s354, %s355
      %s357 = smul.addr %s356, 4
      %s358 = scalar_lea.vmem %s1, %s357
      %p359 = pneg %p89
      %p360 = pneg %p86
      %s361 = sadd.s32 %s23, 1
      %s362 = smul.u32 %s361, 4
      %p363 = scmp.lt.s32.totalorder %s362, 7
      %s364 = scalar_select %p363, %s362, 7
      %s365 = smul.u32 2, %s364
      %p366 = scmp.lt.s32.totalorder %s22, 1
      %s367 = scalar_select %p366, %s22, 1
      %p368 = scmp.lt.s32.totalorder %s365, 15
      %s369 = scalar_select %p368, %s365, 15
      %s370 = smul.addr %s369, 2
      %s371 = smul.addr %s367, 32
      %s372 = sadd.s32 %s370, %s371
      %s373 = smul.addr %s372, 4
      %s374 = scalar_lea.vmem %s2, %s373
      %p375 = pneg %p125
      %p376 = pneg %p122
      %p377 = pneg %p146
      %p378 = pneg %p143
      %p379 = pneg %p167
      %p380 = pneg %p164
      %p381 = pneg %p188
      %p382 = pneg %p185
      %p383 = pneg %p209
      %p384 = pneg %p206
      %p385 = pneg %p237
      %p386 = pneg %p234
      %s387 = smul.u32 4, %s23
      %p388 = scmp.lt.s32.totalorder %s22, 1
      %s389 = scalar_select %p388, %s22, 1
      %p390 = scmp.lt.s32.totalorder %s387, 7
      %s391 = scalar_select %p390, %s387, 7
      %s392 = smul.addr %s389, 8
      %s393 = sadd.s32 %s391, %s392
      %s394 = smul.addr %s393, 4
      %s395 = scalar_lea.vmem %s7, %s394
      %s396 = smul.u32 8, %s23
      %p397 = scmp.lt.s32.totalorder %s22, 1
      %s398 = scalar_select %p397, %s22, 1
      %p399 = scmp.lt.s32.totalorder %s396, 15
      %s400 = scalar_select %p399, %s396, 15
      %s401 = smul.addr %s400, 2
      %s402 = smul.addr %s398, 32
      %s403 = sadd.s32 %s401, %s402
      %s404 = smul.addr %s403, 4
      %s405 = scalar_lea.vmem %s0, %s404
      %s406 = smul.u32 8, %s23
      %s407 = smul.u32 %s23, 4
      %s408 = ssub.s32 %s407, 1
      %p409 = scmp.gt.s32.totalorder %s408, 0
      %s410 = scalar_select %p409, %s408, 0
      %s411 = smul.u32 2, %s410
      %p412 = scmp.lt.s32.totalorder %s22, 1
      %s413 = scalar_select %p412, %s22, 1
      %p414 = scmp.lt.s32.totalorder %s411, 15
      %s415 = scalar_select %p414, %s411, 15
      %s416 = smul.addr %s415, 2
      %s417 = smul.addr %s413, 32
      %s418 = sadd.s32 %s416, %s417
      %s419 = smul.addr %s418, 4
      %s420 = scalar_lea.vmem %s1, %s419
      %s421 = smul.u32 %s23, 4
      %s422 = ssub.s32 %s421, 1
      %p423 = scmp.gt.s32.totalorder %s422, 0
      %s424 = scalar_select %p423, %s422, 0
      %s425 = smul.u32 2, %s424
      %s426 = sadd.s32 %s23, 1
      %s427 = smul.u32 %s426, 4
      %p428 = scmp.lt.s32.totalorder %s427, 7
      %s429 = scalar_select %p428, %s427, 7
      %s430 = smul.u32 2, %s429
      %p431 = scmp.lt.s32.totalorder %s22, 1
      %s432 = scalar_select %p431, %s22, 1
      %p433 = scmp.lt.s32.totalorder %s430, 15
      %s434 = scalar_select %p433, %s430, 15
      %s435 = smul.addr %s434, 2
      %s436 = smul.addr %s432, 32
      %s437 = sadd.s32 %s435, %s436
      %s438 = smul.addr %s437, 4
      %s439 = scalar_lea.vmem %s2, %s438
      %s440 = sadd.s32 %s23, 1
      %s441 = smul.u32 %s440, 4
      %p442 = scmp.lt.s32.totalorder %s441, 7
      %s443 = scalar_select %p442, %s441, 7
      %s444 = smul.u32 2, %s443
      %s445 = smul.u32 4, %s23
      %p446 = scmp.lt.s32.totalorder %s22, 1
      %s447 = scalar_select %p446, %s22, 1
      %p448 = scmp.lt.s32.totalorder %s445, 7
      %s449 = scalar_select %p448, %s445, 7
      %s450 = smul.addr %s447, 8
      %s451 = sadd.s32 %s449, %s450
      %s452 = smul.addr %s451, 4
      %s453 = scalar_lea.vmem %s7, %s452
      %s454 = smul.u32 4, %s23
      %v456 = vld [vmem:[%s405] sm:$0xf]
      %v457 = vld [vmem:[%s405 + $0x4] sm:$0xf]
      %v458 = vld [vmem:[%s405 + $0x8] sm:$0xf]
      %v459 = vld [vmem:[%s405 + $0xc] sm:$0xf]
      %v460 = vld [vmem:[%s405 + $0x10] sm:$0xf]
      %v461 = vld [vmem:[%s405 + $0x14] sm:$0xf]
      %v462 = vld [vmem:[%s405 + $0x18] sm:$0xf]
      %v463 = vld [vmem:[%s405 + $0x1c] sm:$0xf]
      %v464 = vld [vmem:[%s405 + $0x20] sm:$0xf]
      %v465 = vld [vmem:[%s405 + $0x24] sm:$0xf]
      %v466 = vld [vmem:[%s405 + $0x28] sm:$0xf]
      %v467 = vld [vmem:[%s405 + $0x2c] sm:$0xf]
      %v468 = vld [vmem:[%s405 + $0x30] sm:$0xf]
      %v469 = vld [vmem:[%s405 + $0x34] sm:$0xf]
      %v470 = vld [vmem:[%s405 + $0x38] sm:$0xf]
      %v471 = vld [vmem:[%s405 + $0x3c] sm:$0xf]
      %v488 = vunpack.c.l.b16 %v456
      %v489 = vunpack.c.l.b16 %v457
      %v490 = vunpack.c.l.b16 %v458
      %v491 = vunpack.c.l.b16 %v459
      %v492 = vunpack.c.l.b16 %v460
      %v493 = vunpack.c.l.b16 %v461
      %v494 = vunpack.c.l.b16 %v462
      %v495 = vunpack.c.l.b16 %v463
      %v496 = vunpack.c.l.b16 %v464
      %v497 = vunpack.c.l.b16 %v465
      %v498 = vunpack.c.l.b16 %v466
      %v499 = vunpack.c.l.b16 %v467
      %v500 = vunpack.c.l.b16 %v468
      %v501 = vunpack.c.l.b16 %v469
      %v502 = vunpack.c.l.b16 %v470
      %v503 = vunpack.c.l.b16 %v471
      %v504 = vpack.c.b16 %v489, %v488
      %v505 = vpack.c.b16 %v491, %v490
      %v506 = vpack.c.b16 %v493, %v492
      %v507 = vpack.c.b16 %v495, %v494
      %v508 = vpack.c.b16 %v497, %v496
      %v509 = vpack.c.b16 %v499, %v498
      %v510 = vpack.c.b16 %v501, %v500
      %v511 = vpack.c.b16 %v503, %v502
      %s520 = scalar_lea.vmem [#allocation2], 16
      %vm521 = vcmask 23552
      %522 = vst.msk [vmem:[%s520] sm:$0xff] %vm521, %v504
      %523 = vst.msk [vmem:[%s520 + $0x8] sm:$0xff] %vm521, %v505
      %524 = vst.msk [vmem:[%s520 + $0x10] sm:$0xff] %vm521, %v506
      %525 = vst.msk [vmem:[%s520 + $0x18] sm:$0xff] %vm521, %v507
      %526 = vst.msk [vmem:[%s520 + $0x20] sm:$0xff] %vm521, %v508
      %527 = vst.msk [vmem:[%s520 + $0x28] sm:$0xff] %vm521, %v509
      %528 = vst.msk [vmem:[%s520 + $0x30] sm:$0xff] %vm521, %v510
      %529 = vst.msk [vmem:[%s520 + $0x38] sm:$0xff] %vm521, %v511
      %p530 = scmp.eq.s32.totalorder %s23, 0
      // Predicated region
      $region49: #{global_feature_extractor.3} parent=47 // pred_check
        %p531 = pneg %p530
      $region50: #{global_feature_extractor.3} parent=47 // pred_check_branch
        %533 = sbr.rel (%p531) target = $region52
      $region51: #{global_feature_extractor.3} parent=47 // pred_region
        %534 = vst.msk [vmem:[#allocation2] sm:$0xff] %vm521, 0
        %535 = vst.msk [vmem:[#allocation2 + $0x8] sm:$0xff] %vm521, 0
      $region52: #{global_feature_extractor.3} parent=47 // pred_fallthru
        _
      %p536 = scmp.gt.s32.totalorder %s23, 0
      // Predicated region
      $region53: #{global_feature_extractor.3} parent=47 // pred_check
        %p537 = pneg %p536
      $region54: #{global_feature_extractor.3} parent=47 // pred_check_branch
        %539 = sbr.rel (%p537) target = $region56
      $region55: #{global_feature_extractor.3} parent=47 // pred_region
        %v540 = vld [vmem:[%s420] sm:$0xf]
        %v541 = vld [vmem:[%s420 + $0x4] sm:$0xf]
        %v542 = vld [vmem:[%s420 + $0x8] sm:$0xf]
        %v543 = vld [vmem:[%s420 + $0xc] sm:$0xf]
        %v548 = vunpack.c.l.b16 %v540
        %v549 = vunpack.c.l.b16 %v541
        %v550 = vunpack.c.l.b16 %v542
        %v551 = vunpack.c.l.b16 %v543
        %v552 = vpack.c.b16 %v549, %v548
        %v553 = vpack.c.b16 %v551, %v550
        %556 = vst.msk [vmem:[#allocation2] sm:$0xff] %vm521, %v552
        %557 = vst.msk [vmem:[#allocation2 + $0x8] sm:$0xff] %vm521, %v553
      $region56: #{global_feature_extractor.3} parent=47 // pred_fallthru
        _
      %p558 = scmp.eq.s32.totalorder %s23, 1
      // Predicated region
      $region57: #{global_feature_extractor.3} parent=47 // pred_check
        %p559 = pneg %p558
      $region58: #{global_feature_extractor.3} parent=47 // pred_check_branch
        %561 = sbr.rel (%p559) target = $region60
      $region59: #{global_feature_extractor.3} parent=47 // pred_region
        %s562 = scalar_lea.vmem [#allocation2], 80
        %563 = vst.msk [vmem:[%s562] sm:$0xff] %vm521, 0
        %564 = vst.msk [vmem:[%s562 + $0x8] sm:$0xff] %vm521, 0
      $region60: #{global_feature_extractor.3} parent=47 // pred_fallthru
        _
      %p565 = scmp.lt.s32.totalorder %s23, 1
      // Predicated region
      $region61: #{global_feature_extractor.3} parent=47 // pred_check
        %p566 = pneg %p565
      $region62: #{global_feature_extractor.3} parent=47 // pred_check_branch
        %568 = sbr.rel (%p566) target = $region64
      $region63: #{global_feature_extractor.3} parent=47 // pred_region
        %v569 = vld [vmem:[%s439] sm:$0xf]
        %v570 = vld [vmem:[%s439 + $0x4] sm:$0xf]
        %v571 = vld [vmem:[%s439 + $0x8] sm:$0xf]
        %v572 = vld [vmem:[%s439 + $0xc] sm:$0xf]
        %v577 = vunpack.c.l.b16 %v569
        %v578 = vunpack.c.l.b16 %v570
        %v579 = vunpack.c.l.b16 %v571
        %v580 = vunpack.c.l.b16 %v572
        %v581 = vpack.c.b16 %v578, %v577
        %v582 = vpack.c.b16 %v580, %v579
        %s585 = scalar_lea.vmem [#allocation2], 80
        %586 = vst.msk [vmem:[%s585] sm:$0xff] %vm521, %v581
        %587 = vst.msk [vmem:[%s585 + $0x8] sm:$0xff] %vm521, %v582
      $region64: #{global_feature_extractor.3} parent=47 // pred_fallthru
        _
      %v588 = vld [vmem:[#allocation2] sm:$0xff]
      %v589 = vld [vmem:[#allocation2 + $0x8] sm:$0xff]
      %v590 = vld [vmem:[#allocation2 + $0x10] sm:$0xff]
      %v591 = vld [vmem:[#allocation2 + $0x18] sm:$0xff]
      %v592 = vld [vmem:[#allocation2 + $0x20] sm:$0xff]
      %v593 = vld [vmem:[#allocation2 + $0x28] sm:$0xff]
      %v594 = vld [vmem:[#allocation2 + $0x30] sm:$0xff]
      %v595 = vld [vmem:[#allocation2 + $0x38] sm:$0xff]
      %v596 = vld [vmem:[#allocation2 + $0x40] sm:$0xff]
      %v597 = vld [vmem:[#allocation2 + $0x48] sm:$0xff]
      %v598 = vld [vmem:[#allocation2 + $0x50] sm:$0xff]
      %v599 = vld [vmem:[#allocation2 + $0x58] sm:$0xff]
      %v601 = vshrl.u32 %v588, 16
      %v603 = vrot.slane %v601, 7
      %v604 = vshll.u32 %v588, 16
      %v606 = vor.u32 %v603, %v604
      %v608 = vshrl.u32 %v589, 16
      %v610 = vrot.slane %v608, 7
      %v611 = vshll.u32 %v589, 16
      %v613 = vor.u32 %v610, %v611
      %v615 = vshrl.u32 %v590, 16
      %v617 = vrot.slane %v615, 7
      %v618 = vshll.u32 %v590, 16
      %v620 = vor.u32 %v617, %v618
      %v622 = vshrl.u32 %v591, 16
      %v624 = vrot.slane %v622, 7
      %v625 = vshll.u32 %v591, 16
      %v627 = vor.u32 %v624, %v625
      %v629 = vshrl.u32 %v592, 16
      %v631 = vrot.slane %v629, 7
      %v632 = vshll.u32 %v592, 16
      %v634 = vor.u32 %v631, %v632
      %v636 = vshrl.u32 %v593, 16
      %v638 = vrot.slane %v636, 7
      %v639 = vshll.u32 %v593, 16
      %v641 = vor.u32 %v638, %v639
      %v643 = vshrl.u32 %v594, 16
      %v645 = vrot.slane %v643, 7
      %v646 = vshll.u32 %v594, 16
      %v648 = vor.u32 %v645, %v646
      %v650 = vshrl.u32 %v595, 16
      %v652 = vrot.slane %v650, 7
      %v653 = vshll.u32 %v595, 16
      %v655 = vor.u32 %v652, %v653
      %v657 = vshrl.u32 %v596, 16
      %v659 = vrot.slane %v657, 7
      %v660 = vshll.u32 %v596, 16
      %v662 = vor.u32 %v659, %v660
      %v664 = vshrl.u32 %v597, 16
      %v666 = vrot.slane %v664, 7
      %v667 = vshll.u32 %v597, 16
      %v669 = vor.u32 %v666, %v667
      %v671 = vshrl.u32 %v598, 16
      %v673 = vrot.slane %v671, 7
      %v674 = vshll.u32 %v598, 16
      %v676 = vor.u32 %v673, %v674
      %v678 = vshrl.u32 %v599, 16
      %v680 = vrot.slane %v678, 7
      %v681 = vshll.u32 %v599, 16
      %v683 = vor.u32 %v680, %v681
      %vm708 = vcmask 1040384
      %vm709 = vsmask.f32 256
      %vm710 = vmand %vm708, %vm709
      %v711 = vsel %vm710, 0, %v606
      %v712 = vsel %vm710, 0, %v613
      %v713 = vsel %vm710, 0, %v620
      %v714 = vsel %vm710, 0, %v627
      %v715 = vsel %vm710, 0, %v634
      %v716 = vsel %vm710, 0, %v641
      %v717 = vsel %vm710, 0, %v648
      %v718 = vsel %vm710, 0, %v655
      %v719 = vsel %vm710, 0, %v662
      %v720 = vsel %vm710, 0, %v669
      %v721 = vsel %vm710, 0, %v676
      %v722 = vsel %vm710, 0, %v683
      %v723 = vsel %vm710, %v603, 0
      %v724 = vsel %vm710, %v610, 0
      %v725 = vsel %vm710, %v617, 0
      %v726 = vsel %vm710, %v624, 0
      %v727 = vsel %vm710, %v631, 0
      %v728 = vsel %vm710, %v638, 0
      %v729 = vsel %vm710, %v645, 0
      %v730 = vsel %vm710, %v652, 0
      %v731 = vsel %vm710, %v659, 0
      %v732 = vsel %vm710, %v666, 0
      %v733 = vsel %vm710, %v673, 0
      %v734 = vsel %vm710, %v680, 0
      %vm735 = vsmask.f32 7424
      %v737 = vshrl.u32 %v711, 16
      %v739 = vshll.u32 %v711, 16
      %v741 = vrot.slane %v739, 1
      %v742 = vor.u32 %v737, %v741
      %v744 = vshll.u32 %v723, 16
      %v746 = vrot.slane %v744, 1
      %v747 = vsel %vm735, %v742, %v746
      %v749 = vshrl.u32 %v712, 16
      %v751 = vshll.u32 %v712, 16
      %v753 = vrot.slane %v751, 1
      %v754 = vor.u32 %v749, %v753
      %v756 = vshll.u32 %v724, 16
      %v758 = vrot.slane %v756, 1
      %v759 = vsel %vm735, %v754, %v758
      %v761 = vshrl.u32 %v713, 16
      %v763 = vshll.u32 %v713, 16
      %v765 = vrot.slane %v763, 1
      %v766 = vor.u32 %v761, %v765
      %v768 = vshll.u32 %v725, 16
      %v770 = vrot.slane %v768, 1
      %v771 = vsel %vm735, %v766, %v770
      %v773 = vshrl.u32 %v714, 16
      %v775 = vshll.u32 %v714, 16
      %v777 = vrot.slane %v775, 1
      %v778 = vor.u32 %v773, %v777
      %v780 = vshll.u32 %v726, 16
      %v782 = vrot.slane %v780, 1
      %v783 = vsel %vm735, %v778, %v782
      %v785 = vshrl.u32 %v715, 16
      %v787 = vshll.u32 %v715, 16
      %v789 = vrot.slane %v787, 1
      %v790 = vor.u32 %v785, %v789
      %v792 = vshll.u32 %v727, 16
      %v794 = vrot.slane %v792, 1
      %v795 = vsel %vm735, %v790, %v794
      %v797 = vshrl.u32 %v716, 16
      %v799 = vshll.u32 %v716, 16
      %v801 = vrot.slane %v799, 1
      %v802 = vor.u32 %v797, %v801
      %v804 = vshll.u32 %v728, 16
      %v806 = vrot.slane %v804, 1
      %v807 = vsel %vm735, %v802, %v806
      %v809 = vshrl.u32 %v717, 16
      %v811 = vshll.u32 %v717, 16
      %v813 = vrot.slane %v811, 1
      %v814 = vor.u32 %v809, %v813
      %v816 = vshll.u32 %v729, 16
      %v818 = vrot.slane %v816, 1
      %v819 = vsel %vm735, %v814, %v818
      %v821 = vshrl.u32 %v718, 16
      %v823 = vshll.u32 %v718, 16
      %v825 = vrot.slane %v823, 1
      %v826 = vor.u32 %v821, %v825
      %v828 = vshll.u32 %v730, 16
      %v830 = vrot.slane %v828, 1
      %v831 = vsel %vm735, %v826, %v830
      %v833 = vshrl.u32 %v719, 16
      %v835 = vshll.u32 %v719, 16
      %v837 = vrot.slane %v835, 1
      %v838 = vor.u32 %v833, %v837
      %v840 = vshll.u32 %v731, 16
      %v842 = vrot.slane %v840, 1
      %v843 = vsel %vm735, %v838, %v842
      %v845 = vshrl.u32 %v720, 16
      %v847 = vshll.u32 %v720, 16
      %v849 = vrot.slane %v847, 1
      %v850 = vor.u32 %v845, %v849
      %v852 = vshll.u32 %v732, 16
      %v854 = vrot.slane %v852, 1
      %v855 = vsel %vm735, %v850, %v854
      %856 = vrot.lane.b32.xlu0 %v747, 3
      %v857 = vpop.permute.xlu0 %856
      %858 = vrot.lane.b32.xlu0 %v759, 3
      %v859 = vpop.permute.xlu0 %858
      %860 = vrot.lane.b32.xlu0 %v771, 3
      %v861 = vpop.permute.xlu0 %860
      %862 = vrot.lane.b32.xlu0 %v783, 3
      %v863 = vpop.permute.xlu0 %862
      %864 = vrot.lane.b32.xlu0 %v795, 3
      %v865 = vpop.permute.xlu0 %864
      %866 = vrot.lane.b32.xlu0 %v807, 3
      %v867 = vpop.permute.xlu0 %866
      %868 = vrot.lane.b32.xlu0 %v819, 3
      %v869 = vpop.permute.xlu0 %868
      %870 = vrot.lane.b32.xlu0 %v831, 3
      %v871 = vpop.permute.xlu0 %870
      %872 = vrot.lane.b32.xlu0 %v843, 3
      %v873 = vpop.permute.xlu0 %872
      %874 = vrot.lane.b32.xlu0 %v855, 3
      %v875 = vpop.permute.xlu0 %874
      %vm896 = vcmask 1046528
      %v897 = vrot.slane %v711, 1
      %v898 = vrot.slane %v723, 1
      %v899 = vsel %vm896, %v897, %v898
      %v900 = vrot.slane %v712, 1
      %v901 = vrot.slane %v724, 1
      %v902 = vsel %vm896, %v900, %v901
      %v903 = vrot.slane %v713, 1
      %v904 = vrot.slane %v725, 1
      %v905 = vsel %vm896, %v903, %v904
      %v906 = vrot.slane %v714, 1
      %v907 = vrot.slane %v726, 1
      %v908 = vsel %vm896, %v906, %v907
      %v909 = vrot.slane %v715, 1
      %v910 = vrot.slane %v727, 1
      %v911 = vsel %vm896, %v909, %v910
      %v912 = vrot.slane %v716, 1
      %v913 = vrot.slane %v728, 1
      %v914 = vsel %vm896, %v912, %v913
      %v915 = vrot.slane %v717, 1
      %v916 = vrot.slane %v729, 1
      %v917 = vsel %vm896, %v915, %v916
      %v918 = vrot.slane %v718, 1
      %v919 = vrot.slane %v730, 1
      %v920 = vsel %vm896, %v918, %v919
      %v921 = vrot.slane %v719, 1
      %v922 = vrot.slane %v731, 1
      %v923 = vsel %vm896, %v921, %v922
      %v924 = vrot.slane %v720, 1
      %v925 = vrot.slane %v732, 1
      %v926 = vsel %vm896, %v924, %v925
      %927 = vrot.lane.b32.xlu0 %v899, 6
      %v928 = vpop.permute.xlu0 %927
      %929 = vrot.lane.b32.xlu0 %v902, 6
      %v930 = vpop.permute.xlu0 %929
      %931 = vrot.lane.b32.xlu0 %v905, 6
      %v932 = vpop.permute.xlu0 %931
      %933 = vrot.lane.b32.xlu0 %v908, 6
      %v934 = vpop.permute.xlu0 %933
      %935 = vrot.lane.b32.xlu0 %v911, 6
      %v936 = vpop.permute.xlu0 %935
      %937 = vrot.lane.b32.xlu0 %v914, 6
      %v938 = vpop.permute.xlu0 %937
      %939 = vrot.lane.b32.xlu0 %v917, 6
      %v940 = vpop.permute.xlu0 %939
      %941 = vrot.lane.b32.xlu0 %v920, 6
      %v942 = vpop.permute.xlu0 %941
      %943 = vrot.lane.b32.xlu0 %v923, 6
      %v944 = vpop.permute.xlu0 %943
      %945 = vrot.lane.b32.xlu0 %v926, 6
      %v946 = vpop.permute.xlu0 %945
      %948 = vrot.lane.b32.xlu0 %v712, 9
      %v949 = vpop.permute.xlu0 %948
      %950 = vrot.lane.b32.xlu0 %v713, 9
      %v951 = vpop.permute.xlu0 %950
      %952 = vrot.lane.b32.xlu0 %v714, 9
      %v953 = vpop.permute.xlu0 %952
      %954 = vrot.lane.b32.xlu0 %v715, 9
      %v955 = vpop.permute.xlu0 %954
      %956 = vrot.lane.b32.xlu0 %v716, 9
      %v957 = vpop.permute.xlu0 %956
      %958 = vrot.lane.b32.xlu0 %v717, 9
      %v959 = vpop.permute.xlu0 %958
      %960 = vrot.lane.b32.xlu0 %v718, 9
      %v961 = vpop.permute.xlu0 %960
      %962 = vrot.lane.b32.xlu0 %v719, 9
      %v963 = vpop.permute.xlu0 %962
      %964 = vrot.lane.b32.xlu0 %v720, 9
      %v965 = vpop.permute.xlu0 %964
      %966 = vrot.lane.b32.xlu0 %v721, 9
      %v967 = vpop.permute.xlu0 %966
      %v969 = vshrl.u32 %v721, 16
      %v971 = vshll.u32 %v721, 16
      %v973 = vrot.slane %v971, 1
      %v974 = vor.u32 %v969, %v973
      %v976 = vshll.u32 %v733, 16
      %v978 = vrot.slane %v976, 1
      %v979 = vsel %vm735, %v974, %v978
      %980 = vrot.lane.b32.xlu0 %v759, 12
      %v981 = vpop.permute.xlu0 %980
      %982 = vrot.lane.b32.xlu0 %v771, 12
      %v983 = vpop.permute.xlu0 %982
      %984 = vrot.lane.b32.xlu0 %v783, 12
      %v985 = vpop.permute.xlu0 %984
      %986 = vrot.lane.b32.xlu0 %v795, 12
      %v987 = vpop.permute.xlu0 %986
      %988 = vrot.lane.b32.xlu0 %v807, 12
      %v989 = vpop.permute.xlu0 %988
      %990 = vrot.lane.b32.xlu0 %v819, 12
      %v991 = vpop.permute.xlu0 %990
      %992 = vrot.lane.b32.xlu0 %v831, 12
      %v993 = vpop.permute.xlu0 %992
      %994 = vrot.lane.b32.xlu0 %v843, 12
      %v995 = vpop.permute.xlu0 %994
      %996 = vrot.lane.b32.xlu0 %v855, 12
      %v997 = vpop.permute.xlu0 %996
      %998 = vrot.lane.b32.xlu0 %v979, 12
      %v999 = vpop.permute.xlu0 %998
      %v1001 = vrot.slane %v721, 1
      %v1002 = vrot.slane %v733, 1
      %v1003 = vsel %vm896, %v1001, %v1002
      %1004 = vrot.lane.b32.xlu0 %v902, 15
      %v1005 = vpop.permute.xlu0 %1004
      %1006 = vrot.lane.b32.xlu0 %v905, 15
      %v1007 = vpop.permute.xlu0 %1006
      %1008 = vrot.lane.b32.xlu0 %v908, 15
      %v1009 = vpop.permute.xlu0 %1008
      %1010 = vrot.lane.b32.xlu0 %v911, 15
      %v1011 = vpop.permute.xlu0 %1010
      %1012 = vrot.lane.b32.xlu0 %v914, 15
      %v1013 = vpop.permute.xlu0 %1012
      %1014 = vrot.lane.b32.xlu0 %v917, 15
      %v1015 = vpop.permute.xlu0 %1014
      %1016 = vrot.lane.b32.xlu0 %v920, 15
      %v1017 = vpop.permute.xlu0 %1016
      %1018 = vrot.lane.b32.xlu0 %v923, 15
      %v1019 = vpop.permute.xlu0 %1018
      %1020 = vrot.lane.b32.xlu0 %v926, 15
      %v1021 = vpop.permute.xlu0 %1020
      %1022 = vrot.lane.b32.xlu0 %v1003, 15
      %v1023 = vpop.permute.xlu0 %1022
      %1025 = vrot.lane.b32.xlu0 %v713, 18
      %v1026 = vpop.permute.xlu0 %1025
      %1027 = vrot.lane.b32.xlu0 %v714, 18
      %v1028 = vpop.permute.xlu0 %1027
      %1029 = vrot.lane.b32.xlu0 %v715, 18
      %v1030 = vpop.permute.xlu0 %1029
      %1031 = vrot.lane.b32.xlu0 %v716, 18
      %v1032 = vpop.permute.xlu0 %1031
      %1033 = vrot.lane.b32.xlu0 %v717, 18
      %v1034 = vpop.permute.xlu0 %1033
      %1035 = vrot.lane.b32.xlu0 %v718, 18
      %v1036 = vpop.permute.xlu0 %1035
      %1037 = vrot.lane.b32.xlu0 %v719, 18
      %v1038 = vpop.permute.xlu0 %1037
      %1039 = vrot.lane.b32.xlu0 %v720, 18
      %v1040 = vpop.permute.xlu0 %1039
      %1041 = vrot.lane.b32.xlu0 %v721, 18
      %v1042 = vpop.permute.xlu0 %1041
      %1043 = vrot.lane.b32.xlu0 %v722, 18
      %v1044 = vpop.permute.xlu0 %1043
      %v1046 = vshrl.u32 %v722, 16
      %v1048 = vshll.u32 %v722, 16
      %v1050 = vrot.slane %v1048, 1
      %v1051 = vor.u32 %v1046, %v1050
      %v1053 = vshll.u32 %v734, 16
      %v1055 = vrot.slane %v1053, 1
      %v1056 = vsel %vm735, %v1051, %v1055
      %1057 = vrot.lane.b32.xlu0 %v771, 21
      %v1058 = vpop.permute.xlu0 %1057
      %1059 = vrot.lane.b32.xlu0 %v783, 21
      %v1060 = vpop.permute.xlu0 %1059
      %1061 = vrot.lane.b32.xlu0 %v795, 21
      %v1062 = vpop.permute.xlu0 %1061
      %1063 = vrot.lane.b32.xlu0 %v807, 21
      %v1064 = vpop.permute.xlu0 %1063
      %1065 = vrot.lane.b32.xlu0 %v819, 21
      %v1066 = vpop.permute.xlu0 %1065
      %1067 = vrot.lane.b32.xlu0 %v831, 21
      %v1068 = vpop.permute.xlu0 %1067
      %1069 = vrot.lane.b32.xlu0 %v843, 21
      %v1070 = vpop.permute.xlu0 %1069
      %1071 = vrot.lane.b32.xlu0 %v855, 21
      %v1072 = vpop.permute.xlu0 %1071
      %1073 = vrot.lane.b32.xlu0 %v979, 21
      %v1074 = vpop.permute.xlu0 %1073
      %1075 = vrot.lane.b32.xlu0 %v1056, 21
      %v1076 = vpop.permute.xlu0 %1075
      %v1078 = vrot.slane %v722, 1
      %v1079 = vrot.slane %v734, 1
      %v1080 = vsel %vm896, %v1078, %v1079
      %1081 = vrot.lane.b32.xlu0 %v905, 24
      %v1082 = vpop.permute.xlu0 %1081
      %1083 = vrot.lane.b32.xlu0 %v908, 24
      %v1084 = vpop.permute.xlu0 %1083
      %1085 = vrot.lane.b32.xlu0 %v911, 24
      %v1086 = vpop.permute.xlu0 %1085
      %1087 = vrot.lane.b32.xlu0 %v914, 24
      %v1088 = vpop.permute.xlu0 %1087
      %1089 = vrot.lane.b32.xlu0 %v917, 24
      %v1090 = vpop.permute.xlu0 %1089
      %1091 = vrot.lane.b32.xlu0 %v920, 24
      %v1092 = vpop.permute.xlu0 %1091
      %1093 = vrot.lane.b32.xlu0 %v923, 24
      %v1094 = vpop.permute.xlu0 %1093
      %1095 = vrot.lane.b32.xlu0 %v926, 24
      %v1096 = vpop.permute.xlu0 %1095
      %1097 = vrot.lane.b32.xlu0 %v1003, 24
      %v1098 = vpop.permute.xlu0 %1097
      %1099 = vrot.lane.b32.xlu0 %v1080, 24
      %v1100 = vpop.permute.xlu0 %1099
      %v1102 = vsel %vm521, %v711, %v857
      %v1104 = vsel %vm521, %v712, %v859
      %v1106 = vsel %vm521, %v713, %v861
      %v1108 = vsel %vm521, %v714, %v863
      %v1110 = vsel %vm521, %v715, %v865
      %v1112 = vsel %vm521, %v716, %v867
      %v1114 = vsel %vm521, %v717, %v869
      %v1116 = vsel %vm521, %v718, %v871
      %v1118 = vsel %vm521, %v719, %v873
      %v1120 = vsel %vm521, %v720, %v875
      %vm1121 = vcmask 48128
      %v1123 = vsel %vm1121, %v1102, %v928
      %v1125 = vsel %vm1121, %v1104, %v930
      %v1127 = vsel %vm1121, %v1106, %v932
      %v1129 = vsel %vm1121, %v1108, %v934
      %v1131 = vsel %vm1121, %v1110, %v936
      %v1133 = vsel %vm1121, %v1112, %v938
      %v1135 = vsel %vm1121, %v1114, %v940
      %v1137 = vsel %vm1121, %v1116, %v942
      %v1139 = vsel %vm1121, %v1118, %v944
      %v1141 = vsel %vm1121, %v1120, %v946
      %vm1142 = vcmask 72704
      %v1144 = vsel %vm1142, %v1123, %v949
      %v1146 = vsel %vm1142, %v1125, %v951
      %v1148 = vsel %vm1142, %v1127, %v953
      %v1150 = vsel %vm1142, %v1129, %v955
      %v1152 = vsel %vm1142, %v1131, %v957
      %v1154 = vsel %vm1142, %v1133, %v959
      %v1156 = vsel %vm1142, %v1135, %v961
      %v1158 = vsel %vm1142, %v1137, %v963
      %v1160 = vsel %vm1142, %v1139, %v965
      %v1162 = vsel %vm1142, %v1141, %v967
      %vm1163 = vcmask 97280
      %v1165 = vsel %vm1163, %v1144, %v981
      %v1167 = vsel %vm1163, %v1146, %v983
      %v1169 = vsel %vm1163, %v1148, %v985
      %v1171 = vsel %vm1163, %v1150, %v987
      %v1173 = vsel %vm1163, %v1152, %v989
      %v1175 = vsel %vm1163, %v1154, %v991
      %v1177 = vsel %vm1163, %v1156, %v993
      %v1179 = vsel %vm1163, %v1158, %v995
      %v1181 = vsel %vm1163, %v1160, %v997
      %v1183 = vsel %vm1163, %v1162, %v999
      %vm1184 = vcmask 121856
      %v1186 = vsel %vm1184, %v1165, %v1005
      %v1188 = vsel %vm1184, %v1167, %v1007
      %v1190 = vsel %vm1184, %v1169, %v1009
      %v1192 = vsel %vm1184, %v1171, %v1011
      %v1194 = vsel %vm1184, %v1173, %v1013
      %v1196 = vsel %vm1184, %v1175, %v1015
      %v1198 = vsel %vm1184, %v1177, %v1017
      %v1200 = vsel %vm1184, %v1179, %v1019
      %v1202 = vsel %vm1184, %v1181, %v1021
      %v1204 = vsel %vm1184, %v1183, %v1023
      %vm1205 = vcmask 146432
      %v1207 = vsel %vm1205, %v1186, %v1026
      %v1209 = vsel %vm1205, %v1188, %v1028
      %v1211 = vsel %vm1205, %v1190, %v1030
      %v1213 = vsel %vm1205, %v1192, %v1032
      %v1215 = vsel %vm1205, %v1194, %v1034
      %v1217 = vsel %vm1205, %v1196, %v1036
      %v1219 = vsel %vm1205, %v1198, %v1038
      %v1221 = vsel %vm1205, %v1200, %v1040
      %v1223 = vsel %vm1205, %v1202, %v1042
      %v1225 = vsel %vm1205, %v1204, %v1044
      %vm1226 = vcmask 171008
      %v1228 = vsel %vm1226, %v1207, %v1058
      %v1230 = vsel %vm1226, %v1209, %v1060
      %v1232 = vsel %vm1226, %v1211, %v1062
      %v1234 = vsel %vm1226, %v1213, %v1064
      %v1236 = vsel %vm1226, %v1215, %v1066
      %v1238 = vsel %vm1226, %v1217, %v1068
      %v1240 = vsel %vm1226, %v1219, %v1070
      %v1242 = vsel %vm1226, %v1221, %v1072
      %v1244 = vsel %vm1226, %v1223, %v1074
      %v1246 = vsel %vm1226, %v1225, %v1076
      %vm1247 = vcmask 195584
      %v1249 = vsel %vm1247, %v1228, %v1082
      %v1251 = vsel %vm1247, %v1230, %v1084
      %v1253 = vsel %vm1247, %v1232, %v1086
      %v1255 = vsel %vm1247, %v1234, %v1088
      %v1257 = vsel %vm1247, %v1236, %v1090
      %v1259 = vsel %vm1247, %v1238, %v1092
      %v1261 = vsel %vm1247, %v1240, %v1094
      %v1263 = vsel %vm1247, %v1242, %v1096
      %v1265 = vsel %vm1247, %v1244, %v1098
      %v1267 = vsel %vm1247, %v1246, %v1100
      %v1268 = vld [vmem:[%s3] sm:$0xf]
      %v1269 = vld [vmem:[%s3 + $0x4] sm:$0xf]
      %v1270 = vld [vmem:[%s3 + $0x8] sm:$0xf]
      %v1271 = vld [vmem:[%s3 + $0xc] sm:$0x3]
      %v1272 = vld [vmem:[%s4] sm:$0x1]
      %v1274 = vlaneseq
      %v1275 = vshrl.u32 %v1274, 7
      %v1276 = vsub.s32 0, %v1275
      %v1277 = vrot.slane %v1272, %v1276
      %v1283 = vunpack.c.l.b16 %v1268
      %v1284 = vunpack.c.l.b16 %v1269
      %v1285 = vunpack.c.l.b16 %v1270
      %v1286 = vunpack.c.l.b16 %v1271
      %v1287 = vpack.c.b16 %v1284, %v1283
      %v1288 = vpack.c.b16 %v1286, %v1285
      %vm1290 = vcmask 220160
      %v1291 = vsel %vm1290, %v1249, 0
      %v1293 = vsel %vm1290, %v1251, 0
      %v1295 = vsel %vm1290, %v1253, 0
      %v1297 = vsel %vm1290, %v1255, 0
      %v1299 = vsel %vm1290, %v1257, 0
      %v1301 = vsel %vm1290, %v1259, 0
      %v1303 = vsel %vm1290, %v1261, 0
      %v1305 = vsel %vm1290, %v1263, 0
      %v1307 = vsel %vm1290, %v1265, 0
      %v1309 = vsel %vm1290, %v1267, 0
      %vm1311 = vcmask 1044480
      %vm1312 = vcmask 1045504
      %v1313 = vsel %vm1311, 4294967295, 65535
      %v1314 = vsel %vm1312, %v1313, 0
      %v1316 = vand.u32 %v1288, %v1314
      %1318 = vmatprep.subr.bf16.mxu0 0
      %1319 = vmatpush1.bf16.msra.mxu0 %v1287
      %1320 = vmatprep.subr.bf16.mxu0 0
      %1321 = vmatpush1.bf16.msra.mxu0 %v1316
      %1322 = vmatprep.subr.bf16.mxu0 0
      %1323 = vmatpush1.bf16.msra.mxu0 0
      %1324 = vmatprep.subr.bf16.mxu0 0
      %1325 = vmatpush1.bf16.msra.mxu0 0
      %1326 = vmatprep.subr.bf16.mxu0 0
      %1327 = vmatpush1.bf16.msra.mxu0 0
      %1328 = vmatprep.subr.bf16.mxu0 0
      %1329 = vmatpush1.bf16.msra.mxu0 0
      %1330 = vmatprep.subr.bf16.mxu0 0
      %1331 = vmatpush1.bf16.msra.mxu0 0
      %1332 = vmatprep.subr.bf16.mxu0 0
      %1333 = vmatpush1.bf16.msra.mxu0 0
      %1334 = vmatprep.subr.bf16.mxu0 0
      %1335 = vmatpush1.bf16.msra.mxu0 0
      %1336 = vmatprep.subr.bf16.mxu0 0
      %1337 = vmatpush1.bf16.msra.mxu0 0
      %1338 = vmatprep.subr.bf16.mxu0 0
      %1339 = vmatpush1.bf16.msra.mxu0 0
      %1340 = vmatprep.subr.bf16.mxu0 0
      %1341 = vmatpush1.bf16.msra.mxu0 0
      %1342 = vmatprep.subr.bf16.mxu0 0
      %1343 = vmatpush1.bf16.msra.mxu0 0
      %1344 = vmatprep.subr.bf16.mxu0 0
      %1345 = vmatpush1.bf16.msra.mxu0 0
      %1346 = vmatprep.subr.bf16.mxu0 0
      %1347 = vmatpush1.bf16.msra.mxu0 0
      %1348 = vmatprep.subr.bf16.mxu0 0
      %1349 = vmatpush1.bf16.msra.mxu0 0
      %1350 = vmatprep.mubr.bf16.mxu0 0
      %1351 = vmatmul.mubr.bf16.gmra.mrb[0].mxu0 %v1291
      %v1352 = vpop.f32.mrb[0].mxu0
      %v1353 = vadd.f32 %v1277, %v1352
      %v1354 = vpop.f32.mrb[0].mxu0
      %v1355 = vpop.f32.mrb[0].mxu0
      %v1356 = vadd.f32 %v1277, %v1355
      %v1357 = vpop.f32.mrb[0].mxu0
      %1358 = vmatprep.mubr.bf16.mxu0 0
      %1359 = vmatmul.mubr.bf16.gmra.mrb[0].mxu0 %v1293
      %v1360 = vpop.f32.mrb[0].mxu0
      %v1361 = vadd.f32 %v1277, %v1360
      %v1362 = vpop.f32.mrb[0].mxu0
      %v1363 = vpop.f32.mrb[0].mxu0
      %v1364 = vadd.f32 %v1277, %v1363
      %v1365 = vpop.f32.mrb[0].mxu0
      %1366 = vmatprep.mubr.bf16.mxu0 0
      %1367 = vmatmul.mubr.bf16.gmra.mrb[0].mxu0 %v1295
      %v1368 = vpop.f32.mrb[0].mxu0
      %v1369 = vadd.f32 %v1277, %v1368
      %v1370 = vpop.f32.mrb[0].mxu0
      %v1371 = vpop.f32.mrb[0].mxu0
      %v1372 = vadd.f32 %v1277, %v1371
      %v1373 = vpop.f32.mrb[0].mxu0
      %1374 = vmatprep.mubr.bf16.mxu0 0
      %1375 = vmatmul.mubr.bf16.gmra.mrb[0].mxu0 %v1297
      %v1376 = vpop.f32.mrb[0].mxu0
      %v1377 = vadd.f32 %v1277, %v1376
      %v1378 = vpop.f32.mrb[0].mxu0
      %v1379 = vpop.f32.mrb[0].mxu0
      %v1380 = vadd.f32 %v1277, %v1379
      %v1381 = vpop.f32.mrb[0].mxu0
      %1382 = vmatprep.mubr.bf16.mxu0 0
      %1383 = vmatmul.mubr.bf16.gmra.mrb[0].mxu0 %v1299
      %v1384 = vpop.f32.mrb[0].mxu0
      %v1385 = vadd.f32 %v1277, %v1384
      %v1386 = vpop.f32.mrb[0].mxu0
      %v1387 = vpop.f32.mrb[0].mxu0
      %v1388 = vadd.f32 %v1277, %v1387
      %v1389 = vpop.f32.mrb[0].mxu0
      %1390 = vmatprep.mubr.bf16.mxu0 0
      %1391 = vmatmul.mubr.bf16.gmra.mrb[0].mxu0 %v1301
      %v1392 = vpop.f32.mrb[0].mxu0
      %v1393 = vadd.f32 %v1277, %v1392
      %v1394 = vpop.f32.mrb[0].mxu0
      %v1395 = vpop.f32.mrb[0].mxu0
      %v1396 = vadd.f32 %v1277, %v1395
      %v1397 = vpop.f32.mrb[0].mxu0
      %1398 = vmatprep.mubr.bf16.mxu0 0
      %1399 = vmatmul.mubr.bf16.gmra.mrb[0].mxu0 %v1303
      %v1400 = vpop.f32.mrb[0].mxu0
      %v1401 = vadd.f32 %v1277, %v1400
      %v1402 = vpop.f32.mrb[0].mxu0
      %v1403 = vpop.f32.mrb[0].mxu0
      %v1404 = vadd.f32 %v1277, %v1403
      %v1405 = vpop.f32.mrb[0].mxu0
      %1406 = vmatprep.mubr.bf16.mxu0 0
      %1407 = vmatmul.mubr.bf16.gmra.mrb[0].mxu0 %v1305
      %v1408 = vpop.f32.mrb[0].mxu0
      %v1409 = vadd.f32 %v1277, %v1408
      %v1410 = vpop.f32.mrb[0].mxu0
      %v1411 = vpop.f32.mrb[0].mxu0
      %v1412 = vadd.f32 %v1277, %v1411
      %v1413 = vpop.f32.mrb[0].mxu0
      %1414 = vmatprep.mubr.bf16.mxu0 0
      %1415 = vmatmul.mubr.bf16.gmra.mrb[0].mxu0 %v1307
      %v1416 = vpop.f32.mrb[0].mxu0
      %v1417 = vadd.f32 %v1277, %v1416
      %v1418 = vpop.f32.mrb[0].mxu0
      %v1419 = vpop.f32.mrb[0].mxu0
      %v1420 = vadd.f32 %v1277, %v1419
      %v1421 = vpop.f32.mrb[0].mxu0
      %1422 = vmatprep.mubr.bf16.mxu0 0
      %1423 = vmatmul.mubr.bf16.gmra.mrb[0].mxu0 %v1309
      %v1424 = vpop.f32.mrb[0].mxu0
      %v1425 = vadd.f32 %v1277, %v1424
      %v1426 = vpop.f32.mrb[0].mxu0
      %v1427 = vpop.f32.mrb[0].mxu0
      %v1428 = vadd.f32 %v1277, %v1427
      %v1429 = vpop.f32.mrb[0].mxu0
      %1430 = vdwg.mxu0
      %v1431 = vmax.f32 %v1353, 0.0
      %v1432 = vmax.f32 %v1356, 0.0
      %v1433 = vmax.f32 %v1361, 0.0
      %v1434 = vmax.f32 %v1364, 0.0
      %v1435 = vmax.f32 %v1369, 0.0
      %v1436 = vmax.f32 %v1372, 0.0
      %v1437 = vmax.f32 %v1377, 0.0
      %v1438 = vmax.f32 %v1380, 0.0
      %v1439 = vmax.f32 %v1385, 0.0
      %v1440 = vmax.f32 %v1388, 0.0
      %v1441 = vmax.f32 %v1393, 0.0
      %v1442 = vmax.f32 %v1396, 0.0
      %v1443 = vmax.f32 %v1401, 0.0
      %v1444 = vmax.f32 %v1404, 0.0
      %v1445 = vmax.f32 %v1409, 0.0
      %v1446 = vmax.f32 %v1412, 0.0
      %v1447 = vmax.f32 %v1417, 0.0
      %v1448 = vmax.f32 %v1420, 0.0
      %v1449 = vmax.f32 %v1425, 0.0
      %v1450 = vmax.f32 %v1428, 0.0
      %v1451 = vpack.c.bf16 %v1432, %v1431
      %v1452 = vpack.c.bf16 %v1434, %v1433
      %v1453 = vpack.c.bf16 %v1436, %v1435
      %v1454 = vpack.c.bf16 %v1438, %v1437
      %v1455 = vpack.c.bf16 %v1440, %v1439
      %v1456 = vpack.c.bf16 %v1442, %v1441
      %v1457 = vpack.c.bf16 %v1444, %v1443
      %v1458 = vpack.c.bf16 %v1446, %v1445
      %v1459 = vpack.c.bf16 %v1448, %v1447
      %v1460 = vpack.c.bf16 %v1450, %v1449
      %vm1461 = vcmask 523264
      %1462 = vst.msk [vmem:[#allocation3] sm:$0xff] %vm1461, %v1451
      %1463 = vst.msk [vmem:[#allocation3 + $0x8] sm:$0xff] %vm1461, %v1452
      %1464 = vst.msk [vmem:[#allocation3 + $0x10] sm:$0xff] %vm1461, %v1453
      %1465 = vst.msk [vmem:[#allocation3 + $0x18] sm:$0xff] %vm1461, %v1454
      %1466 = vst.msk [vmem:[#allocation3 + $0x20] sm:$0xff] %vm1461, %v1455
      %1467 = vst.msk [vmem:[#allocation3 + $0x28] sm:$0xff] %vm1461, %v1456
      %1468 = vst.msk [vmem:[#allocation3 + $0x30] sm:$0xff] %vm1461, %v1457
      %1469 = vst.msk [vmem:[#allocation3 + $0x38] sm:$0xff] %vm1461, %v1458
      %1470 = vst.msk [vmem:[#allocation3 + $0x40] sm:$0xff] %vm1461, %v1459
      %1471 = vst.msk [vmem:[#allocation3 + $0x48] sm:$0xff] %vm1461, %v1460
      // Predicated region
      $region65: #{global_feature_extractor.3} parent=47 // pred_check
        %p1472 = pneg %p530
      $region66: #{global_feature_extractor.3} parent=47 // pred_check_branch
        %1474 = sbr.rel (%p1472) target = $region68
      $region67: #{global_feature_extractor.3} parent=47 // pred_region
        %1475 = vst.msk [vmem:[#allocation3] sm:$0xff] %vm1461, 0
      $region68: #{global_feature_extractor.3} parent=47 // pred_fallthru
        _
      // Predicated region
      $region69: #{global_feature_extractor.3} parent=47 // pred_check
        %p1476 = pneg %p558
      $region70: #{global_feature_extractor.3} parent=47 // pred_check_branch
        %1478 = sbr.rel (%p1476) target = $region72
      $region71: #{global_feature_extractor.3} parent=47 // pred_region
        %s1479 = scalar_lea.vmem [#allocation3], 72
        %1480 = vst.msk [vmem:[%s1479] sm:$0xff] %vm1461, 0
      $region72: #{global_feature_extractor.3} parent=47 // pred_fallthru
        _
      %v1481 = vld [vmem:[#allocation3] sm:$0xff]
      %v1482 = vld [vmem:[#allocation3 + $0x8] sm:$0xff]
      %v1483 = vld [vmem:[#allocation3 + $0x10] sm:$0xff]
      %v1484 = vld [vmem:[#allocation3 + $0x18] sm:$0xff]
      %v1485 = vld [vmem:[#allocation3 + $0x20] sm:$0xff]
      %v1486 = vld [vmem:[#allocation3 + $0x28] sm:$0xff]
      %v1487 = vld [vmem:[#allocation3 + $0x30] sm:$0xff]
      %v1488 = vld [vmem:[#allocation3 + $0x38] sm:$0xff]
      %v1489 = vld [vmem:[#allocation3 + $0x40] sm:$0xff]
      %v1490 = vld [vmem:[#allocation3 + $0x48] sm:$0xff]
      %v1492 = vshrl.u32 %v1481, 16
      %v1494 = vrot.slane %v1492, 7
      %v1495 = vshll.u32 %v1481, 16
      %v1497 = vor.u32 %v1494, %v1495
      %v1499 = vshrl.u32 %v1482, 16
      %v1501 = vrot.slane %v1499, 7
      %v1502 = vshll.u32 %v1482, 16
      %v1504 = vor.u32 %v1501, %v1502
      %v1506 = vshrl.u32 %v1483, 16
      %v1508 = vrot.slane %v1506, 7
      %v1509 = vshll.u32 %v1483, 16
      %v1511 = vor.u32 %v1508, %v1509
      %v1513 = vshrl.u32 %v1484, 16
      %v1515 = vrot.slane %v1513, 7
      %v1516 = vshll.u32 %v1484, 16
      %v1518 = vor.u32 %v1515, %v1516
      %v1520 = vshrl.u32 %v1485, 16
      %v1522 = vrot.slane %v1520, 7
      %v1523 = vshll.u32 %v1485, 16
      %v1525 = vor.u32 %v1522, %v1523
      %v1527 = vshrl.u32 %v1486, 16
      %v1529 = vrot.slane %v1527, 7
      %v1530 = vshll.u32 %v1486, 16
      %v1532 = vor.u32 %v1529, %v1530
      %v1534 = vshrl.u32 %v1487, 16
      %v1536 = vrot.slane %v1534, 7
      %v1537 = vshll.u32 %v1487, 16
      %v1539 = vor.u32 %v1536, %v1537
      %v1541 = vshrl.u32 %v1488, 16
      %v1543 = vrot.slane %v1541, 7
      %v1544 = vshll.u32 %v1488, 16
      %v1546 = vor.u32 %v1543, %v1544
      %v1548 = vshrl.u32 %v1489, 16
      %v1550 = vrot.slane %v1548, 7
      %v1551 = vshll.u32 %v1489, 16
      %v1553 = vor.u32 %v1550, %v1551
      %v1555 = vshrl.u32 %v1490, 16
      %v1557 = vrot.slane %v1555, 7
      %v1558 = vshll.u32 %v1490, 16
      %v1560 = vor.u32 %v1557, %v1558
      %v1581 = vsel %vm710, 0, %v1497
      %v1582 = vsel %vm710, 0, %v1504
      %v1583 = vsel %vm710, 0, %v1511
      %v1584 = vsel %vm710, 0, %v1518
      %v1585 = vsel %vm710, 0, %v1525
      %v1586 = vsel %vm710, 0, %v1532
      %v1587 = vsel %vm710, 0, %v1539
      %v1588 = vsel %vm710, 0, %v1546
      %v1589 = vsel %vm710, 0, %v1553
      %v1590 = vsel %vm710, 0, %v1560
      %v1591 = vsel %vm710, %v1494, 0
      %v1592 = vsel %vm710, %v1501, 0
      %v1593 = vsel %vm710, %v1508, 0
      %v1594 = vsel %vm710, %v1515, 0
      %v1595 = vsel %vm710, %v1522, 0
      %v1596 = vsel %vm710, %v1529, 0
      %v1597 = vsel %vm710, %v1536, 0
      %v1598 = vsel %vm710, %v1543, 0
      %v1599 = vsel %vm710, %v1550, 0
      %v1600 = vsel %vm710, %v1557, 0
      %v1602 = vshrl.u32 %v1581, 16
      %v1604 = vshll.u32 %v1581, 16
      %v1606 = vrot.slane %v1604, 1
      %v1607 = vor.u32 %v1602, %v1606
      %v1609 = vshll.u32 %v1591, 16
      %v1611 = vrot.slane %v1609, 1
      %v1612 = vsel %vm735, %v1607, %v1611
      %v1614 = vshrl.u32 %v1582, 16
      %v1616 = vshll.u32 %v1582, 16
      %v1618 = vrot.slane %v1616, 1
      %v1619 = vor.u32 %v1614, %v1618
      %v1621 = vshll.u32 %v1592, 16
      %v1623 = vrot.slane %v1621, 1
      %v1624 = vsel %vm735, %v1619, %v1623
      %v1626 = vshrl.u32 %v1583, 16
      %v1628 = vshll.u32 %v1583, 16
      %v1630 = vrot.slane %v1628, 1
      %v1631 = vor.u32 %v1626, %v1630
      %v1633 = vshll.u32 %v1593, 16
      %v1635 = vrot.slane %v1633, 1
      %v1636 = vsel %vm735, %v1631, %v1635
      %v1638 = vshrl.u32 %v1584, 16
      %v1640 = vshll.u32 %v1584, 16
      %v1642 = vrot.slane %v1640, 1
      %v1643 = vor.u32 %v1638, %v1642
      %v1645 = vshll.u32 %v1594, 16
      %v1647 = vrot.slane %v1645, 1
      %v1648 = vsel %vm735, %v1643, %v1647
      %v1650 = vshrl.u32 %v1585, 16
      %v1652 = vshll.u32 %v1585, 16
      %v1654 = vrot.slane %v1652, 1
      %v1655 = vor.u32 %v1650, %v1654
      %v1657 = vshll.u32 %v1595, 16
      %v1659 = vrot.slane %v1657, 1
      %v1660 = vsel %vm735, %v1655, %v1659
      %v1662 = vshrl.u32 %v1586, 16
      %v1664 = vshll.u32 %v1586, 16
      %v1666 = vrot.slane %v1664, 1
      %v1667 = vor.u32 %v1662, %v1666
      %v1669 = vshll.u32 %v1596, 16
      %v1671 = vrot.slane %v1669, 1
      %v1672 = vsel %vm735, %v1667, %v1671
      %v1674 = vshrl.u32 %v1587, 16
      %v1676 = vshll.u32 %v1587, 16
      %v1678 = vrot.slane %v1676, 1
      %v1679 = vor.u32 %v1674, %v1678
      %v1681 = vshll.u32 %v1597, 16
      %v1683 = vrot.slane %v1681, 1
      %v1684 = vsel %vm735, %v1679, %v1683
      %v1686 = vshrl.u32 %v1588, 16
      %v1688 = vshll.u32 %v1588, 16
      %v1690 = vrot.slane %v1688, 1
      %v1691 = vor.u32 %v1686, %v1690
      %v1693 = vshll.u32 %v1598, 16
      %v1695 = vrot.slane %v1693, 1
      %v1696 = vsel %vm735, %v1691, %v1695
      %v1698 = vshrl.u32 %v1589, 16
      %v1700 = vshll.u32 %v1589, 16
      %v1702 = vrot.slane %v1700, 1
      %v1703 = vor.u32 %v1698, %v1702
      %v1705 = vshll.u32 %v1599, 16
      %v1707 = vrot.slane %v1705, 1
      %v1708 = vsel %vm735, %v1703, %v1707
      %v1710 = vshrl.u32 %v1590, 16
      %v1712 = vshll.u32 %v1590, 16
      %v1714 = vrot.slane %v1712, 1
      %v1715 = vor.u32 %v1710, %v1714
      %v1717 = vshll.u32 %v1600, 16
      %v1719 = vrot.slane %v1717, 1
      %v1720 = vsel %vm735, %v1715, %v1719
      %1721 = vrot.lane.b32.xlu0 %v1612, 64
      %v1722 = vpop.permute.xlu0 %1721
      %1723 = vrot.lane.b32.xlu0 %v1624, 64
      %v1724 = vpop.permute.xlu0 %1723
      %1725 = vrot.lane.b32.xlu0 %v1636, 64
      %v1726 = vpop.permute.xlu0 %1725
      %1727 = vrot.lane.b32.xlu0 %v1648, 64
      %v1728 = vpop.permute.xlu0 %1727
      %1729 = vrot.lane.b32.xlu0 %v1660, 64
      %v1730 = vpop.permute.xlu0 %1729
      %1731 = vrot.lane.b32.xlu0 %v1672, 64
      %v1732 = vpop.permute.xlu0 %1731
      %1733 = vrot.lane.b32.xlu0 %v1684, 64
      %v1734 = vpop.permute.xlu0 %1733
      %1735 = vrot.lane.b32.xlu0 %v1696, 64
      %v1736 = vpop.permute.xlu0 %1735
      %1737 = vrot.lane.b32.xlu0 %v1708, 64
      %v1738 = vpop.permute.xlu0 %1737
      %1739 = vrot.lane.b32.xlu0 %v1720, 64
      %v1740 = vpop.permute.xlu0 %1739
      %v1761 = vrot.slane %v1581, 1
      %v1762 = vrot.slane %v1591, 1
      %v1763 = vsel %vm896, %v1761, %v1762
      %v1764 = vrot.slane %v1582, 1
      %v1765 = vrot.slane %v1592, 1
      %v1766 = vsel %vm896, %v1764, %v1765
      %v1767 = vrot.slane %v1583, 1
      %v1768 = vrot.slane %v1593, 1
      %v1769 = vsel %vm896, %v1767, %v1768
      %v1770 = vrot.slane %v1584, 1
      %v1771 = vrot.slane %v1594, 1
      %v1772 = vsel %vm896, %v1770, %v1771
      %v1773 = vrot.slane %v1585, 1
      %v1774 = vrot.slane %v1595, 1
      %v1775 = vsel %vm896, %v1773, %v1774
      %v1776 = vrot.slane %v1586, 1
      %v1777 = vrot.slane %v1596, 1
      %v1778 = vsel %vm896, %v1776, %v1777
      %v1779 = vrot.slane %v1587, 1
      %v1780 = vrot.slane %v1597, 1
      %v1781 = vsel %vm896, %v1779, %v1780
      %v1782 = vrot.slane %v1588, 1
      %v1783 = vrot.slane %v1598, 1
      %v1784 = vsel %vm896, %v1782, %v1783
      %v1785 = vrot.slane %v1589, 1
      %v1786 = vrot.slane %v1599, 1
      %v1787 = vsel %vm896, %v1785, %v1786
      %v1788 = vrot.slane %v1590, 1
      %v1789 = vrot.slane %v1600, 1
      %v1790 = vsel %vm896, %v1788, %v1789
      %v1792 = vsel %vm1461, %v1581, %v1722
      %v1795 = vsel %vm1461, %v1582, %v1724
      %v1798 = vsel %vm1461, %v1583, %v1726
      %v1801 = vsel %vm1461, %v1584, %v1728
      %v1804 = vsel %vm1461, %v1585, %v1730
      %v1807 = vsel %vm1461, %v1586, %v1732
      %v1810 = vsel %vm1461, %v1587, %v1734
      %v1813 = vsel %vm1461, %v1588, %v1736
      %v1816 = vsel %vm1461, %v1589, %v1738
      %v1819 = vsel %vm1461, %v1590, %v1740
      %v1821 = vld [vmem:[%s5] sm:$0xff]
      %v1822 = vld [vmem:[%s5 + $0x8] sm:$0xff]
      %v1823 = vld [vmem:[%s5 + $0x10] sm:$0xff]
      %v1824 = vld [vmem:[%s5 + $0x18] sm:$0xff]
      %v1825 = vld [vmem:[%s5 + $0x20] sm:$0xff]
      %v1826 = vld [vmem:[%s5 + $0x28] sm:$0xff]
      %v1827 = vld [vmem:[%s5 + $0x30] sm:$0xff]
      %v1828 = vld [vmem:[%s5 + $0x38] sm:$0xff]
      %v1829 = vld [vmem:[%s5 + $0x40] sm:$0xff]
      %v1830 = vld [vmem:[%s5 + $0x48] sm:$0xff]
      %v1831 = vld [vmem:[%s5 + $0x50] sm:$0xff]
      %v1832 = vld [vmem:[%s5 + $0x58] sm:$0xff]
      %v1833 = vld [vmem:[%s5 + $0x60] sm:$0xff]
      %v1834 = vld [vmem:[%s5 + $0x68] sm:$0xff]
      %v1835 = vld [vmem:[%s5 + $0x70] sm:$0xff]
      %v1836 = vld [vmem:[%s5 + $0x78] sm:$0xff]
      %v1837 = vld [vmem:[%s5 + $0x80] sm:$0xff]
      %v1838 = vld [vmem:[%s5 + $0x88] sm:$0xff]
      %v1839 = vld [vmem:[%s5 + $0x90] sm:$0xff]
      %v1840 = vld [vmem:[%s5 + $0x98] sm:$0xff]
      %v1841 = vld [vmem:[%s5 + $0xa0] sm:$0xff]
      %v1842 = vld [vmem:[%s5 + $0xa8] sm:$0xff]
      %v1843 = vld [vmem:[%s5 + $0xb0] sm:$0xff]
      %v1844 = vld [vmem:[%s5 + $0xb8] sm:$0xff]
      %v1869 = vunpack.c.l.b16 %v1821
      %v1870 = vunpack.c.h.b16 %v1821
      %v1871 = vunpack.c.l.b16 %v1822
      %v1872 = vunpack.c.h.b16 %v1822
      %v1873 = vunpack.c.l.b16 %v1823
      %v1874 = vunpack.c.h.b16 %v1823
      %v1875 = vunpack.c.l.b16 %v1824
      %v1876 = vunpack.c.h.b16 %v1824
      %v1877 = vunpack.c.l.b16 %v1825
      %v1878 = vunpack.c.h.b16 %v1825
      %v1879 = vunpack.c.l.b16 %v1826
      %v1880 = vunpack.c.h.b16 %v1826
      %v1881 = vunpack.c.l.b16 %v1827
      %v1882 = vunpack.c.h.b16 %v1827
      %v1883 = vunpack.c.l.b16 %v1828
      %v1884 = vunpack.c.h.b16 %v1828
      %v1885 = vunpack.c.l.b16 %v1829
      %v1886 = vunpack.c.h.b16 %v1829
      %v1887 = vunpack.c.l.b16 %v1830
      %v1888 = vunpack.c.h.b16 %v1830
      %v1889 = vunpack.c.l.b16 %v1831
      %v1890 = vunpack.c.h.b16 %v1831
      %v1891 = vunpack.c.l.b16 %v1832
      %v1892 = vunpack.c.h.b16 %v1832
      %v1893 = vunpack.c.l.b16 %v1833
      %v1894 = vunpack.c.h.b16 %v1833
      %v1895 = vunpack.c.l.b16 %v1834
      %v1896 = vunpack.c.h.b16 %v1834
      %v1897 = vunpack.c.l.b16 %v1835
      %v1898 = vunpack.c.h.b16 %v1835
      %v1899 = vunpack.c.l.b16 %v1836
      %v1900 = vunpack.c.h.b16 %v1836
      %v1901 = vunpack.c.l.b16 %v1837
      %v1902 = vunpack.c.h.b16 %v1837
      %v1903 = vunpack.c.l.b16 %v1838
      %v1904 = vunpack.c.h.b16 %v1838
      %v1905 = vunpack.c.l.b16 %v1839
      %v1906 = vunpack.c.h.b16 %v1839
      %v1907 = vunpack.c.l.b16 %v1840
      %v1908 = vunpack.c.h.b16 %v1840
      %v1909 = vunpack.c.l.b16 %v1841
      %v1910 = vunpack.c.h.b16 %v1841
      %v1911 = vunpack.c.l.b16 %v1842
      %v1912 = vunpack.c.h.b16 %v1842
      %v1913 = vunpack.c.l.b16 %v1843
      %v1914 = vunpack.c.h.b16 %v1843
      %v1915 = vunpack.c.l.b16 %v1844
      %v1916 = vunpack.c.h.b16 %v1844
      %v1917 = vpack.c.b16 %v1871, %v1869
      %v1918 = vpack.c.b16 %v1872, %v1870
      %v1919 = vpack.c.b16 %v1875, %v1873
      %v1920 = vpack.c.b16 %v1876, %v1874
      %v1921 = vpack.c.b16 %v1879, %v1877
      %v1922 = vpack.c.b16 %v1880, %v1878
      %v1923 = vpack.c.b16 %v1883, %v1881
      %v1924 = vpack.c.b16 %v1884, %v1882
      %v1925 = vpack.c.b16 %v1887, %v1885
      %v1926 = vpack.c.b16 %v1888, %v1886
      %v1927 = vpack.c.b16 %v1891, %v1889
      %v1928 = vpack.c.b16 %v1892, %v1890
      %v1929 = vpack.c.b16 %v1895, %v1893
      %v1930 = vpack.c.b16 %v1896, %v1894
      %v1931 = vpack.c.b16 %v1899, %v1897
      %v1932 = vpack.c.b16 %v1900, %v1898
      %v1933 = vpack.c.b16 %v1903, %v1901
      %v1934 = vpack.c.b16 %v1904, %v1902
      %v1935 = vpack.c.b16 %v1907, %v1905
      %v1936 = vpack.c.b16 %v1908, %v1906
      %v1937 = vpack.c.b16 %v1911, %v1909
      %v1938 = vpack.c.b16 %v1912, %v1910
      %v1939 = vpack.c.b16 %v1915, %v1913
      %v1940 = vpack.c.b16 %v1916, %v1914
      %v1966 = vsel %vm1461, %v1763, 0
      %v1969 = vsel %vm1461, %v1766, 0
      %v1972 = vsel %vm1461, %v1769, 0
      %v1975 = vsel %vm1461, %v1772, 0
      %v1978 = vsel %vm1461, %v1775, 0
      %v1981 = vsel %vm1461, %v1778, 0
      %v1984 = vsel %vm1461, %v1781, 0
      %v1987 = vsel %vm1461, %v1784, 0
      %v1990 = vsel %vm1461, %v1787, 0
      %v1993 = vsel %vm1461, %v1790, 0
      %1995 = vmatprep.subr.bf16.mxu0 %v1918
      %1996 = vmatpush1.bf16.msra.mxu0 %v1917
      %1997 = vmatprep.subr.bf16.mxu0 %v1920
      %1998 = vmatpush1.bf16.msra.mxu0 %v1919
      %1999 = vmatprep.subr.bf16.mxu0 %v1922
      %2000 = vmatpush1.bf16.msra.mxu0 %v1921
      %2001 = vmatprep.subr.bf16.mxu0 %v1924
      %2002 = vmatpush1.bf16.msra.mxu0 %v1923
      %2003 = vmatprep.subr.bf16.mxu0 %v1926
      %2004 = vmatpush1.bf16.msra.mxu0 %v1925
      %2005 = vmatprep.subr.bf16.mxu0 %v1928
      %2006 = vmatpush1.bf16.msra.mxu0 %v1927
      %2007 = vmatprep.subr.bf16.mxu0 %v1930
      %2008 = vmatpush1.bf16.msra.mxu0 %v1929
      %2009 = vmatprep.subr.bf16.mxu0 %v1932
      %2010 = vmatpush1.bf16.msra.mxu0 %v1931
      %2011 = vmatprep.subr.bf16.mxu0 %v1934
      %2012 = vmatpush1.bf16.msra.mxu0 %v1933
      %2013 = vmatprep.subr.bf16.mxu0 %v1936
      %2014 = vmatpush1.bf16.msra.mxu0 %v1935
      %2015 = vmatprep.subr.bf16.mxu0 %v1938
      %2016 = vmatpush1.bf16.msra.mxu0 %v1937
      %2017 = vmatprep.subr.bf16.mxu0 %v1940
      %2018 = vmatpush1.bf16.msra.mxu0 %v1939
      %2019 = vmatprep.subr.bf16.mxu0 0
      %2020 = vmatpush1.bf16.msra.mxu0 0
      %2021 = vmatprep.subr.bf16.mxu0 0
      %2022 = vmatpush1.bf16.msra.mxu0 0
      %2023 = vmatprep.subr.bf16.mxu0 0
      %2024 = vmatpush1.bf16.msra.mxu0 0
      %2025 = vmatprep.subr.bf16.mxu0 0
      %2026 = vmatpush1.bf16.msra.mxu0 0
      %2027 = vmatprep.mubr.bf16.mxu0 %v1966
      %2028 = vmatmul.mubr.bf16.gmra.mrb[0].mxu0 %v1792
      %v2029 = vpop.f32.mrb[0].mxu0
      %v2030 = vadd.f32 0.0, %v2029
      %v2031 = vpop.f32.mrb[0].mxu0
      %v2032 = vpop.f32.mrb[0].mxu0
      %v2033 = vadd.f32 0.0, %v2032
      %v2034 = vpop.f32.mrb[0].mxu0
      %2035 = vmatprep.mubr.bf16.mxu0 %v1969
      %2036 = vmatmul.mubr.bf16.gmra.mrb[0].mxu0 %v1795
      %v2037 = vpop.f32.mrb[0].mxu0
      %v2038 = vadd.f32 0.0, %v2037
      %v2039 = vpop.f32.mrb[0].mxu0
      %v2040 = vpop.f32.mrb[0].mxu0
      %v2041 = vadd.f32 0.0, %v2040
      %v2042 = vpop.f32.mrb[0].mxu0
      %2043 = vmatprep.mubr.bf16.mxu0 %v1972
      %2044 = vmatmul.mubr.bf16.gmra.mrb[0].mxu0 %v1798
      %v2045 = vpop.f32.mrb[0].mxu0
      %v2046 = vadd.f32 0.0, %v2045
      %v2047 = vpop.f32.mrb[0].mxu0
      %v2048 = vadd.f32 0.0, %v2047
      %v2049 = vpop.f32.mrb[0].mxu0
      %v2050 = vadd.f32 0.0, %v2049
      %v2051 = vpop.f32.mrb[0].mxu0
      %v2052 = vadd.f32 0.0, %v2051
      %2053 = vmatprep.mubr.bf16.mxu0 %v1975
      %2054 = vmatmul.mubr.bf16.gmra.mrb[0].mxu0 %v1801
      %v2055 = vpop.f32.mrb[0].mxu0
      %v2056 = vadd.f32 0.0, %v2055
      %v2057 = vpop.f32.mrb[0].mxu0
      %v2058 = vadd.f32 0.0, %v2057
      %v2059 = vpop.f32.mrb[0].mxu0
      %v2060 = vadd.f32 0.0, %v2059
      %v2061 = vpop.f32.mrb[0].mxu0
      %v2062 = vadd.f32 0.0, %v2061
      %2063 = vmatprep.mubr.bf16.mxu0 %v1978
      %2064 = vmatmul.mubr.bf16.gmra.mrb[0].mxu0 %v1804
      %v2065 = vpop.f32.mrb[0].mxu0
      %v2066 = vadd.f32 0.0, %v2065
      %v2067 = vpop.f32.mrb[0].mxu0
      %v2068 = vadd.f32 0.0, %v2067
      %v2069 = vpop.f32.mrb[0].mxu0
      %v2070 = vadd.f32 0.0, %v2069
      %v2071 = vpop.f32.mrb[0].mxu0
      %v2072 = vadd.f32 0.0, %v2071
      %2073 = vmatprep.mubr.bf16.mxu0 %v1981
      %2074 = vmatmul.mubr.bf16.gmra.mrb[0].mxu0 %v1807
      %v2075 = vpop.f32.mrb[0].mxu0
      %v2076 = vadd.f32 0.0, %v2075
      %v2077 = vpop.f32.mrb[0].mxu0
      %v2078 = vadd.f32 0.0, %v2077
      %v2079 = vpop.f32.mrb[0].mxu0
      %v2080 = vadd.f32 0.0, %v2079
      %v2081 = vpop.f32.mrb[0].mxu0
      %v2082 = vadd.f32 0.0, %v2081
      %2083 = vmatprep.mubr.bf16.mxu0 %v1984
      %2084 = vmatmul.mubr.bf16.gmra.mrb[0].mxu0 %v1810
      %v2085 = vpop.f32.mrb[0].mxu0
      %v2086 = vadd.f32 0.0, %v2085
      %v2087 = vpop.f32.mrb[0].mxu0
      %v2088 = vadd.f32 0.0, %v2087
      %v2089 = vpop.f32.mrb[0].mxu0
      %v2090 = vadd.f32 0.0, %v2089
      %v2091 = vpop.f32.mrb[0].mxu0
      %v2092 = vadd.f32 0.0, %v2091
      %2093 = vmatprep.mubr.bf16.mxu0 %v1987
      %2094 = vmatmul.mubr.bf16.gmra.mrb[0].mxu0 %v1813
      %v2095 = vpop.f32.mrb[0].mxu0
      %v2096 = vadd.f32 0.0, %v2095
      %v2097 = vpop.f32.mrb[0].mxu0
      %v2098 = vadd.f32 0.0, %v2097
      %v2099 = vpop.f32.mrb[0].mxu0
      %v2100 = vadd.f32 0.0, %v2099
      %v2101 = vpop.f32.mrb[0].mxu0
      %v2102 = vadd.f32 0.0, %v2101
      %2103 = vmatprep.mubr.bf16.mxu0 %v1990
      %2104 = vmatmul.mubr.bf16.gmra.mrb[0].mxu0 %v1816
      %v2105 = vpop.f32.mrb[0].mxu0
      %v2106 = vadd.f32 0.0, %v2105
      %v2107 = vpop.f32.mrb[0].mxu0
      %v2108 = vadd.f32 0.0, %v2107
      %v2109 = vpop.f32.mrb[0].mxu0
      %v2110 = vadd.f32 0.0, %v2109
      %v2111 = vpop.f32.mrb[0].mxu0
      %v2112 = vadd.f32 0.0, %v2111
      %2113 = vmatprep.mubr.bf16.mxu0 %v1993
      %2114 = vmatmul.mubr.bf16.gmra.mrb[0].mxu0 %v1819
      %v2115 = vpop.f32.mrb[0].mxu0
      %v2116 = vpop.f32.mrb[0].mxu0
      %v2117 = vadd.f32 0.0, %v2116
      %v2118 = vpop.f32.mrb[0].mxu0
      %v2119 = vpop.f32.mrb[0].mxu0
      %v2120 = vadd.f32 0.0, %v2119
      %2121 = vdwg.mxu0
      %2138 = vrot.lane.b32.xlu0 %v2038, 64
      %v2139 = vpop.permute.xlu0 %2138
      %2140 = vrot.lane.b32.xlu0 %v2041, 64
      %v2141 = vpop.permute.xlu0 %2140
      %2142 = vrot.lane.b32.xlu0 %v2046, 64
      %v2143 = vpop.permute.xlu0 %2142
      %2144 = vrot.lane.b32.xlu0 %v2050, 64
      %v2145 = vpop.permute.xlu0 %2144
      %2146 = vrot.lane.b32.xlu0 %v2056, 64
      %v2147 = vpop.permute.xlu0 %2146
      %2148 = vrot.lane.b32.xlu0 %v2060, 64
      %v2149 = vpop.permute.xlu0 %2148
      %2150 = vrot.lane.b32.xlu0 %v2066, 64
      %v2151 = vpop.permute.xlu0 %2150
      %2152 = vrot.lane.b32.xlu0 %v2070, 64
      %v2153 = vpop.permute.xlu0 %2152
      %2154 = vrot.lane.b32.xlu0 %v2076, 64
      %v2155 = vpop.permute.xlu0 %2154
      %2156 = vrot.lane.b32.xlu0 %v2080, 64
      %v2157 = vpop.permute.xlu0 %2156
      %2158 = vrot.lane.b32.xlu0 %v2086, 64
      %v2159 = vpop.permute.xlu0 %2158
      %2160 = vrot.lane.b32.xlu0 %v2090, 64
      %v2161 = vpop.permute.xlu0 %2160
      %2162 = vrot.lane.b32.xlu0 %v2096, 64
      %v2163 = vpop.permute.xlu0 %2162
      %2164 = vrot.lane.b32.xlu0 %v2100, 64
      %v2165 = vpop.permute.xlu0 %2164
      %2166 = vrot.lane.b32.xlu0 %v2106, 64
      %v2167 = vpop.permute.xlu0 %2166
      %2168 = vrot.lane.b32.xlu0 %v2110, 64
      %v2169 = vpop.permute.xlu0 %2168
      %v2186 = vadd.f32 %v2030, %v2139
      %v2187 = vadd.f32 %v2033, %v2141
      %v2188 = vadd.f32 %v2038, %v2143
      %v2189 = vadd.f32 %v2041, %v2145
      %v2190 = vadd.f32 %v2046, %v2147
      %v2191 = vadd.f32 %v2050, %v2149
      %v2192 = vadd.f32 %v2056, %v2151
      %v2193 = vadd.f32 %v2060, %v2153
      %v2194 = vadd.f32 %v2066, %v2155
      %v2195 = vadd.f32 %v2070, %v2157
      %v2196 = vadd.f32 %v2076, %v2159
      %v2197 = vadd.f32 %v2080, %v2161
      %v2198 = vadd.f32 %v2086, %v2163
      %v2199 = vadd.f32 %v2090, %v2165
      %v2200 = vadd.f32 %v2096, %v2167
      %v2201 = vadd.f32 %v2100, %v2169
      %v2202 = vadd.f32 %v2186, %v2048
      %v2203 = vadd.f32 %v2187, %v2052
      %v2204 = vadd.f32 %v2188, %v2058
      %v2205 = vadd.f32 %v2189, %v2062
      %v2206 = vadd.f32 %v2190, %v2068
      %v2207 = vadd.f32 %v2191, %v2072
      %v2208 = vadd.f32 %v2192, %v2078
      %v2209 = vadd.f32 %v2193, %v2082
      %v2210 = vadd.f32 %v2194, %v2088
      %v2211 = vadd.f32 %v2195, %v2092
      %v2212 = vadd.f32 %v2196, %v2098
      %v2213 = vadd.f32 %v2197, %v2102
      %v2214 = vadd.f32 %v2198, %v2108
      %v2215 = vadd.f32 %v2199, %v2112
      %v2216 = vadd.f32 %v2200, %v2117
      %v2217 = vadd.f32 %v2201, %v2120
      %v2218 = vld [vmem:[%s6] sm:$0x1]
      %v2220 = vlaneseq
      %v2221 = vshrl.u32 %v2220, 7
      %v2222 = vsub.s32 0, %v2221
      %v2223 = vrot.slane %v2218, %v2222
      %v2225 = vadd.f32 %v2202, %v2223
      %v2226 = vadd.f32 %v2203, %v2223
      %v2227 = vadd.f32 %v2204, %v2223
      %v2228 = vadd.f32 %v2205, %v2223
      %v2229 = vadd.f32 %v2206, %v2223
      %v2230 = vadd.f32 %v2207, %v2223
      %v2231 = vadd.f32 %v2208, %v2223
      %v2232 = vadd.f32 %v2209, %v2223
      %v2233 = vadd.f32 %v2210, %v2223
      %v2234 = vadd.f32 %v2211, %v2223
      %v2235 = vadd.f32 %v2212, %v2223
      %v2236 = vadd.f32 %v2213, %v2223
      %v2237 = vadd.f32 %v2214, %v2223
      %v2238 = vadd.f32 %v2215, %v2223
      %v2239 = vadd.f32 %v2216, %v2223
      %v2240 = vadd.f32 %v2217, %v2223
      %v2241 = vmax.f32 %v2225, 0.0
      %v2242 = vmax.f32 %v2226, 0.0
      %v2243 = vmax.f32 %v2227, 0.0
      %v2244 = vmax.f32 %v2228, 0.0
      %v2245 = vmax.f32 %v2229, 0.0
      %v2246 = vmax.f32 %v2230, 0.0
      %v2247 = vmax.f32 %v2231, 0.0
      %v2248 = vmax.f32 %v2232, 0.0
      %v2249 = vmax.f32 %v2233, 0.0
      %v2250 = vmax.f32 %v2234, 0.0
      %v2251 = vmax.f32 %v2235, 0.0
      %v2252 = vmax.f32 %v2236, 0.0
      %v2253 = vmax.f32 %v2237, 0.0
      %v2254 = vmax.f32 %v2238, 0.0
      %v2255 = vmax.f32 %v2239, 0.0
      %v2256 = vmax.f32 %v2240, 0.0
      %v2257 = vmax.f32 %v2241, %v2243
      %v2258 = vmax.f32 %v2242, %v2244
      %v2259 = vmax.f32 %v2245, %v2247
      %v2260 = vmax.f32 %v2246, %v2248
      %v2261 = vmax.f32 %v2249, %v2251
      %v2262 = vmax.f32 %v2250, %v2252
      %v2263 = vmax.f32 %v2253, %v2255
      %v2264 = vmax.f32 %v2254, %v2256
      %v2273 = vcombine.high %v2257, %v2257
      %v2275 = vunpack.c.l.s4 1983009808
      %v2276 = vunpack.c.0.s8 %v2275
      %v2277 = vlaneseq
      %v2278 = vshrl.u32 %v2277, 7
      %v2279 = vsub.s32 %v2276, %v2278
      %v2280 = vrot.slane %v2257, %v2279
      %v2282 = vunpack.c.l.s4 1983009808
      %v2283 = vunpack.c.0.s8 %v2282
      %v2284 = vlaneseq
      %v2285 = vshrl.u32 %v2284, 7
      %v2286 = vsub.s32 %v2283, %v2285
      %v2287 = vrot.slane %v2273, %v2286
      %v2288 = vcombine.high %v2280, %v2280
      %v2289 = vcombine.high %v2287, %v2287
      %v2290 = vcombine.high %v2258, %v2258
      %v2292 = vunpack.c.l.s4 1983009808
      %v2293 = vunpack.c.0.s8 %v2292
      %v2294 = vlaneseq
      %v2295 = vshrl.u32 %v2294, 7
      %v2296 = vsub.s32 %v2293, %v2295
      %v2297 = vrot.slane %v2258, %v2296
      %v2299 = vunpack.c.l.s4 1983009808
      %v2300 = vunpack.c.0.s8 %v2299
      %v2301 = vlaneseq
      %v2302 = vshrl.u32 %v2301, 7
      %v2303 = vsub.s32 %v2300, %v2302
      %v2304 = vrot.slane %v2290, %v2303
      %v2305 = vcombine.high %v2297, %v2297
      %v2306 = vcombine.high %v2304, %v2304
      %v2307 = vcombine.high %v2259, %v2259
      %v2309 = vunpack.c.l.s4 1983009808
      %v2310 = vunpack.c.0.s8 %v2309
      %v2311 = vlaneseq
      %v2312 = vshrl.u32 %v2311, 7
      %v2313 = vsub.s32 %v2310, %v2312
      %v2314 = vrot.slane %v2259, %v2313
      %v2316 = vunpack.c.l.s4 1983009808
      %v2317 = vunpack.c.0.s8 %v2316
      %v2318 = vlaneseq
      %v2319 = vshrl.u32 %v2318, 7
      %v2320 = vsub.s32 %v2317, %v2319
      %v2321 = vrot.slane %v2307, %v2320
      %v2322 = vcombine.high %v2314, %v2314
      %v2323 = vcombine.high %v2321, %v2321
      %v2324 = vcombine.high %v2260, %v2260
      %v2326 = vunpack.c.l.s4 1983009808
      %v2327 = vunpack.c.0.s8 %v2326
      %v2328 = vlaneseq
      %v2329 = vshrl.u32 %v2328, 7
      %v2330 = vsub.s32 %v2327, %v2329
      %v2331 = vrot.slane %v2260, %v2330
      %v2333 = vunpack.c.l.s4 1983009808
      %v2334 = vunpack.c.0.s8 %v2333
      %v2335 = vlaneseq
      %v2336 = vshrl.u32 %v2335, 7
      %v2337 = vsub.s32 %v2334, %v2336
      %v2338 = vrot.slane %v2324, %v2337
      %v2339 = vcombine.high %v2331, %v2331
      %v2340 = vcombine.high %v2338, %v2338
      %v2341 = vcombine.high %v2261, %v2261
      %v2343 = vunpack.c.l.s4 1983009808
      %v2344 = vunpack.c.0.s8 %v2343
      %v2345 = vlaneseq
      %v2346 = vshrl.u32 %v2345, 7
      %v2347 = vsub.s32 %v2344, %v2346
      %v2348 = vrot.slane %v2261, %v2347
      %v2350 = vunpack.c.l.s4 1983009808
      %v2351 = vunpack.c.0.s8 %v2350
      %v2352 = vlaneseq
      %v2353 = vshrl.u32 %v2352, 7
      %v2354 = vsub.s32 %v2351, %v2353
      %v2355 = vrot.slane %v2341, %v2354
      %v2356 = vcombine.high %v2348, %v2348
      %v2357 = vcombine.high %v2355, %v2355
      %v2358 = vcombine.high %v2262, %v2262
      %v2360 = vunpack.c.l.s4 1983009808
      %v2361 = vunpack.c.0.s8 %v2360
      %v2362 = vlaneseq
      %v2363 = vshrl.u32 %v2362, 7
      %v2364 = vsub.s32 %v2361, %v2363
      %v2365 = vrot.slane %v2262, %v2364
      %v2367 = vunpack.c.l.s4 1983009808
      %v2368 = vunpack.c.0.s8 %v2367
      %v2369 = vlaneseq
      %v2370 = vshrl.u32 %v2369, 7
      %v2371 = vsub.s32 %v2368, %v2370
      %v2372 = vrot.slane %v2358, %v2371
      %v2373 = vcombine.high %v2365, %v2365
      %v2374 = vcombine.high %v2372, %v2372
      %v2375 = vcombine.high %v2263, %v2263
      %v2377 = vunpack.c.l.s4 1983009808
      %v2378 = vunpack.c.0.s8 %v2377
      %v2379 = vlaneseq
      %v2380 = vshrl.u32 %v2379, 7
      %v2381 = vsub.s32 %v2378, %v2380
      %v2382 = vrot.slane %v2263, %v2381
      %v2384 = vunpack.c.l.s4 1983009808
      %v2385 = vunpack.c.0.s8 %v2384
      %v2386 = vlaneseq
      %v2387 = vshrl.u32 %v2386, 7
      %v2388 = vsub.s32 %v2385, %v2387
      %v2389 = vrot.slane %v2375, %v2388
      %v2390 = vcombine.high %v2382, %v2382
      %v2391 = vcombine.high %v2389, %v2389
      %v2392 = vcombine.high %v2264, %v2264
      %v2394 = vunpack.c.l.s4 1983009808
      %v2395 = vunpack.c.0.s8 %v2394
      %v2396 = vlaneseq
      %v2397 = vshrl.u32 %v2396, 7
      %v2398 = vsub.s32 %v2395, %v2397
      %v2399 = vrot.slane %v2264, %v2398
      %v2401 = vunpack.c.l.s4 1983009808
      %v2402 = vunpack.c.0.s8 %v2401
      %v2403 = vlaneseq
      %v2404 = vshrl.u32 %v2403, 7
      %v2405 = vsub.s32 %v2402, %v2404
      %v2406 = vrot.slane %v2392, %v2405
      %v2407 = vcombine.high %v2399, %v2399
      %v2408 = vcombine.high %v2406, %v2406
      %v2441 = vrot.slane %v2280, 7
      %v2442 = vrot.slane %v2441, 2
      %v2443 = vrot.slane %v2288, 7
      %v2444 = vrot.slane %v2443, 2
      %v2445 = vrot.slane %v2287, 7
      %v2446 = vrot.slane %v2445, 2
      %v2447 = vrot.slane %v2289, 7
      %v2448 = vrot.slane %v2447, 2
      %v2449 = vrot.slane %v2297, 7
      %v2450 = vrot.slane %v2449, 2
      %v2451 = vrot.slane %v2305, 7
      %v2452 = vrot.slane %v2451, 2
      %v2453 = vrot.slane %v2304, 7
      %v2454 = vrot.slane %v2453, 2
      %v2455 = vrot.slane %v2306, 7
      %v2456 = vrot.slane %v2455, 2
      %v2457 = vrot.slane %v2314, 7
      %v2458 = vrot.slane %v2457, 2
      %v2459 = vrot.slane %v2322, 7
      %v2460 = vrot.slane %v2459, 2
      %v2461 = vrot.slane %v2321, 7
      %v2462 = vrot.slane %v2461, 2
      %v2463 = vrot.slane %v2323, 7
      %v2464 = vrot.slane %v2463, 2
      %v2465 = vrot.slane %v2331, 7
      %v2466 = vrot.slane %v2465, 2
      %v2467 = vrot.slane %v2339, 7
      %v2468 = vrot.slane %v2467, 2
      %v2469 = vrot.slane %v2338, 7
      %v2470 = vrot.slane %v2469, 2
      %v2471 = vrot.slane %v2340, 7
      %v2472 = vrot.slane %v2471, 2
      %v2473 = vrot.slane %v2348, 7
      %v2474 = vrot.slane %v2473, 2
      %v2475 = vrot.slane %v2356, 7
      %v2476 = vrot.slane %v2475, 2
      %v2477 = vrot.slane %v2355, 7
      %v2478 = vrot.slane %v2477, 2
      %v2479 = vrot.slane %v2357, 7
      %v2480 = vrot.slane %v2479, 2
      %v2481 = vrot.slane %v2365, 7
      %v2482 = vrot.slane %v2481, 2
      %v2483 = vrot.slane %v2373, 7
      %v2484 = vrot.slane %v2483, 2
      %v2485 = vrot.slane %v2372, 7
      %v2486 = vrot.slane %v2485, 2
      %v2487 = vrot.slane %v2374, 7
      %v2488 = vrot.slane %v2487, 2
      %v2489 = vrot.slane %v2382, 7
      %v2490 = vrot.slane %v2489, 2
      %v2491 = vrot.slane %v2390, 7
      %v2492 = vrot.slane %v2491, 2
      %v2493 = vrot.slane %v2389, 7
      %v2494 = vrot.slane %v2493, 2
      %v2495 = vrot.slane %v2391, 7
      %v2496 = vrot.slane %v2495, 2
      %v2497 = vrot.slane %v2399, 7
      %v2498 = vrot.slane %v2497, 2
      %v2499 = vrot.slane %v2407, 7
      %v2500 = vrot.slane %v2499, 2
      %v2501 = vrot.slane %v2406, 7
      %v2502 = vrot.slane %v2501, 2
      %v2503 = vrot.slane %v2408, 7
      %v2504 = vrot.slane %v2503, 2
      %v2537 = vmax.f32 %v2280, %v2442
      %v2538 = vmax.f32 %v2288, %v2444
      %v2539 = vmax.f32 %v2287, %v2446
      %v2540 = vmax.f32 %v2289, %v2448
      %v2541 = vmax.f32 %v2297, %v2450
      %v2542 = vmax.f32 %v2305, %v2452
      %v2543 = vmax.f32 %v2304, %v2454
      %v2544 = vmax.f32 %v2306, %v2456
      %v2545 = vmax.f32 %v2314, %v2458
      %v2546 = vmax.f32 %v2322, %v2460
      %v2547 = vmax.f32 %v2321, %v2462
      %v2548 = vmax.f32 %v2323, %v2464
      %v2549 = vmax.f32 %v2331, %v2466
      %v2550 = vmax.f32 %v2339, %v2468
      %v2551 = vmax.f32 %v2338, %v2470
      %v2552 = vmax.f32 %v2340, %v2472
      %v2553 = vmax.f32 %v2348, %v2474
      %v2554 = vmax.f32 %v2356, %v2476
      %v2555 = vmax.f32 %v2355, %v2478
      %v2556 = vmax.f32 %v2357, %v2480
      %v2557 = vmax.f32 %v2365, %v2482
      %v2558 = vmax.f32 %v2373, %v2484
      %v2559 = vmax.f32 %v2372, %v2486
      %v2560 = vmax.f32 %v2374, %v2488
      %v2561 = vmax.f32 %v2382, %v2490
      %v2562 = vmax.f32 %v2390, %v2492
      %v2563 = vmax.f32 %v2389, %v2494
      %v2564 = vmax.f32 %v2391, %v2496
      %v2565 = vmax.f32 %v2399, %v2498
      %v2566 = vmax.f32 %v2407, %v2500
      %v2567 = vmax.f32 %v2406, %v2502
      %v2568 = vmax.f32 %v2408, %v2504
      %v2569 = vpack.c.bf16 %v2537, %v2537
      %v2570 = vpack.c.bf16 %v2538, %v2538
      %v2571 = vpack.c.bf16 %v2539, %v2539
      %v2572 = vpack.c.bf16 %v2540, %v2540
      %v2573 = vpack.c.bf16 %v2541, %v2541
      %v2574 = vpack.c.bf16 %v2542, %v2542
      %v2575 = vpack.c.bf16 %v2543, %v2543
      %v2576 = vpack.c.bf16 %v2544, %v2544
      %v2577 = vpack.c.bf16 %v2545, %v2545
      %v2578 = vpack.c.bf16 %v2546, %v2546
      %v2579 = vpack.c.bf16 %v2547, %v2547
      %v2580 = vpack.c.bf16 %v2548, %v2548
      %v2581 = vpack.c.bf16 %v2549, %v2549
      %v2582 = vpack.c.bf16 %v2550, %v2550
      %v2583 = vpack.c.bf16 %v2551, %v2551
      %v2584 = vpack.c.bf16 %v2552, %v2552
      %v2585 = vpack.c.bf16 %v2553, %v2553
      %v2586 = vpack.c.bf16 %v2554, %v2554
      %v2587 = vpack.c.bf16 %v2555, %v2555
      %v2588 = vpack.c.bf16 %v2556, %v2556
      %v2589 = vpack.c.bf16 %v2557, %v2557
      %v2590 = vpack.c.bf16 %v2558, %v2558
      %v2591 = vpack.c.bf16 %v2559, %v2559
      %v2592 = vpack.c.bf16 %v2560, %v2560
      %v2593 = vpack.c.bf16 %v2561, %v2561
      %v2594 = vpack.c.bf16 %v2562, %v2562
      %v2595 = vpack.c.bf16 %v2563, %v2563
      %v2596 = vpack.c.bf16 %v2564, %v2564
      %v2597 = vpack.c.bf16 %v2565, %v2565
      %v2598 = vpack.c.bf16 %v2566, %v2566
      %v2599 = vpack.c.bf16 %v2567, %v2567
      %v2600 = vpack.c.bf16 %v2568, %v2568
      %v2633 = vunpack.c.l.b16 %v2569
      %v2634 = vunpack.c.l.b16 %v2570
      %v2635 = vunpack.c.l.b16 %v2571
      %v2636 = vunpack.c.l.b16 %v2572
      %v2637 = vunpack.c.l.b16 %v2573
      %v2638 = vunpack.c.l.b16 %v2574
      %v2639 = vunpack.c.l.b16 %v2575
      %v2640 = vunpack.c.l.b16 %v2576
      %v2641 = vunpack.c.l.b16 %v2577
      %v2642 = vunpack.c.l.b16 %v2578
      %v2643 = vunpack.c.l.b16 %v2579
      %v2644 = vunpack.c.l.b16 %v2580
      %v2645 = vunpack.c.l.b16 %v2581
      %v2646 = vunpack.c.l.b16 %v2582
      %v2647 = vunpack.c.l.b16 %v2583
      %v2648 = vunpack.c.l.b16 %v2584
      %v2649 = vunpack.c.l.b16 %v2585
      %v2650 = vunpack.c.l.b16 %v2586
      %v2651 = vunpack.c.l.b16 %v2587
      %v2652 = vunpack.c.l.b16 %v2588
      %v2653 = vunpack.c.l.b16 %v2589
      %v2654 = vunpack.c.l.b16 %v2590
      %v2655 = vunpack.c.l.b16 %v2591
      %v2656 = vunpack.c.l.b16 %v2592
      %v2657 = vunpack.c.l.b16 %v2593
      %v2658 = vunpack.c.l.b16 %v2594
      %v2659 = vunpack.c.l.b16 %v2595
      %v2660 = vunpack.c.l.b16 %v2596
      %v2661 = vunpack.c.l.b16 %v2597
      %v2662 = vunpack.c.l.b16 %v2598
      %v2663 = vunpack.c.l.b16 %v2599
      %v2664 = vunpack.c.l.b16 %v2600
      %v2665 = vpack.c.b16 %v2633, %v2633
      %v2666 = vpack.c.b16 %v2634, %v2634
      %v2667 = vpack.c.b16 %v2635, %v2635
      %v2668 = vpack.c.b16 %v2636, %v2636
      %v2669 = vpack.c.b16 %v2637, %v2637
      %v2670 = vpack.c.b16 %v2638, %v2638
      %v2671 = vpack.c.b16 %v2639, %v2639
      %v2672 = vpack.c.b16 %v2640, %v2640
      %v2673 = vpack.c.b16 %v2641, %v2641
      %v2674 = vpack.c.b16 %v2642, %v2642
      %v2675 = vpack.c.b16 %v2643, %v2643
      %v2676 = vpack.c.b16 %v2644, %v2644
      %v2677 = vpack.c.b16 %v2645, %v2645
      %v2678 = vpack.c.b16 %v2646, %v2646
      %v2679 = vpack.c.b16 %v2647, %v2647
      %v2680 = vpack.c.b16 %v2648, %v2648
      %v2681 = vpack.c.b16 %v2649, %v2649
      %v2682 = vpack.c.b16 %v2650, %v2650
      %v2683 = vpack.c.b16 %v2651, %v2651
      %v2684 = vpack.c.b16 %v2652, %v2652
      %v2685 = vpack.c.b16 %v2653, %v2653
      %v2686 = vpack.c.b16 %v2654, %v2654
      %v2687 = vpack.c.b16 %v2655, %v2655
      %v2688 = vpack.c.b16 %v2656, %v2656
      %v2689 = vpack.c.b16 %v2657, %v2657
      %v2690 = vpack.c.b16 %v2658, %v2658
      %v2691 = vpack.c.b16 %v2659, %v2659
      %v2692 = vpack.c.b16 %v2660, %v2660
      %v2693 = vpack.c.b16 %v2661, %v2661
      %v2694 = vpack.c.b16 %v2662, %v2662
      %v2695 = vpack.c.b16 %v2663, %v2663
      %v2696 = vpack.c.b16 %v2664, %v2664
      %v2697 = vunpack.c.l.b16 %v2665
      %v2698 = vunpack.c.l.b16 %v2666
      %v2699 = vunpack.c.l.b16 %v2667
      %v2700 = vunpack.c.l.b16 %v2668
      %v2701 = vunpack.c.l.b16 %v2669
      %v2702 = vunpack.c.l.b16 %v2670
      %v2703 = vunpack.c.l.b16 %v2671
      %v2704 = vunpack.c.l.b16 %v2672
      %v2705 = vunpack.c.l.b16 %v2673
      %v2706 = vunpack.c.l.b16 %v2674
      %v2707 = vunpack.c.l.b16 %v2675
      %v2708 = vunpack.c.l.b16 %v2676
      %v2709 = vunpack.c.l.b16 %v2677
      %v2710 = vunpack.c.l.b16 %v2678
      %v2711 = vunpack.c.l.b16 %v2679
      %v2712 = vunpack.c.l.b16 %v2680
      %v2713 = vunpack.c.l.b16 %v2681
      %v2714 = vunpack.c.l.b16 %v2682
      %v2715 = vunpack.c.l.b16 %v2683
      %v2716 = vunpack.c.l.b16 %v2684
      %v2717 = vunpack.c.l.b16 %v2685
      %v2718 = vunpack.c.l.b16 %v2686
      %v2719 = vunpack.c.l.b16 %v2687
      %v2720 = vunpack.c.l.b16 %v2688
      %v2721 = vunpack.c.l.b16 %v2689
      %v2722 = vunpack.c.l.b16 %v2690
      %v2723 = vunpack.c.l.b16 %v2691
      %v2724 = vunpack.c.l.b16 %v2692
      %v2725 = vunpack.c.l.b16 %v2693
      %v2726 = vunpack.c.l.b16 %v2694
      %v2727 = vunpack.c.l.b16 %v2695
      %v2728 = vunpack.c.l.b16 %v2696
      %v2729 = vrot.slane %v2698, 7
      %vm2730 = vcmask 1041409
      %v2731 = vsel %vm2730, %v2729, %v2697
      %v2732 = vrot.slane %v2699, 6
      %vm2733 = vcmask 1042434
      %v2734 = vsel %vm2733, %v2732, %v2731
      %v2735 = vrot.slane %v2700, 5
      %vm2736 = vcmask 1043459
      %v2737 = vsel %vm2736, %v2735, %v2734
      %v2738 = vrot.slane %v2701, 4
      %vm2739 = vcmask 1044484
      %v2740 = vsel %vm2739, %v2738, %v2737
      %v2741 = vrot.slane %v2702, 3
      %vm2742 = vcmask 1045509
      %v2743 = vsel %vm2742, %v2741, %v2740
      %v2744 = vrot.slane %v2703, 2
      %vm2745 = vcmask 1046534
      %v2746 = vsel %vm2745, %v2744, %v2743
      %v2747 = vrot.slane %v2704, 1
      %vm2748 = vcmask 1047559
      %v2749 = vsel %vm2748, %v2747, %v2746
      %v2750 = vrot.slane %v2706, 7
      %v2751 = vsel %vm2730, %v2750, %v2705
      %v2752 = vrot.slane %v2707, 6
      %v2753 = vsel %vm2733, %v2752, %v2751
      %v2754 = vrot.slane %v2708, 5
      %v2755 = vsel %vm2736, %v2754, %v2753
      %v2756 = vrot.slane %v2709, 4
      %v2757 = vsel %vm2739, %v2756, %v2755
      %v2758 = vrot.slane %v2710, 3
      %v2759 = vsel %vm2742, %v2758, %v2757
      %v2760 = vrot.slane %v2711, 2
      %v2761 = vsel %vm2745, %v2760, %v2759
      %v2762 = vrot.slane %v2712, 1
      %v2763 = vsel %vm2748, %v2762, %v2761
      %v2764 = vrot.slane %v2714, 7
      %v2765 = vsel %vm2730, %v2764, %v2713
      %v2766 = vrot.slane %v2715, 6
      %v2767 = vsel %vm2733, %v2766, %v2765
      %v2768 = vrot.slane %v2716, 5
      %v2769 = vsel %vm2736, %v2768, %v2767
      %v2770 = vrot.slane %v2717, 4
      %v2771 = vsel %vm2739, %v2770, %v2769
      %v2772 = vrot.slane %v2718, 3
      %v2773 = vsel %vm2742, %v2772, %v2771
      %v2774 = vrot.slane %v2719, 2
      %v2775 = vsel %vm2745, %v2774, %v2773
      %v2776 = vrot.slane %v2720, 1
      %v2777 = vsel %vm2748, %v2776, %v2775
      %v2778 = vrot.slane %v2722, 7
      %v2779 = vsel %vm2730, %v2778, %v2721
      %v2780 = vrot.slane %v2723, 6
      %v2781 = vsel %vm2733, %v2780, %v2779
      %v2782 = vrot.slane %v2724, 5
      %v2783 = vsel %vm2736, %v2782, %v2781
      %v2784 = vrot.slane %v2725, 4
      %v2785 = vsel %vm2739, %v2784, %v2783
      %v2786 = vrot.slane %v2726, 3
      %v2787 = vsel %vm2742, %v2786, %v2785
      %v2788 = vrot.slane %v2727, 2
      %v2789 = vsel %vm2745, %v2788, %v2787
      %v2790 = vrot.slane %v2728, 1
      %v2791 = vsel %vm2748, %v2790, %v2789
      %v2792 = vpack.c.b16 %v2749, %v2749
      %v2793 = vpack.c.b16 %v2763, %v2763
      %v2794 = vpack.c.b16 %v2777, %v2777
      %v2795 = vpack.c.b16 %v2791, %v2791
      %vm2800 = vcmask 519168
      %2801 = vst.msk [vmem:[%s453] sm:$0xf] %vm2800, %v2792
      %2802 = vst.msk [vmem:[%s453 + $0x4] sm:$0xf] %vm2800, %v2793
      %2803 = vst.msk [vmem:[%s453 + $0x8] sm:$0xf] %vm2800, %v2794
      %2804 = vst.msk [vmem:[%s453 + $0xc] sm:$0xf] %vm2800, %v2795
      %s2805 = smul.u32 4, %s23
      %p2806 = scmp.lt.s32.totalorder %s22, 1
      %s2807 = scalar_select %p2806, %s22, 1
      %p2808 = scmp.lt.s32.totalorder %s2805, 7
      %s2809 = scalar_select %p2808, %s2805, 7
      %s2810 = smul.addr %s2807, 8
      %s2811 = sadd.s32 %s2809, %s2810
      %s2812 = smul.addr %s2811, 4
      %s2813 = scalar_lea.vmem %s7, %s2812
      // Predicated region
      $region73: #{global_feature_extractor.3} parent=47 // pred_check
        %p2814 = pneg %p234
      $region74: #{global_feature_extractor.3} parent=47 // pred_check_branch
        %2816 = sbr.rel (%p2814) target = $region76
      $region75: #{global_feature_extractor.3} parent=47 // pred_region
        %s2817 = smul.u32 4, %s23
      $region76: #{global_feature_extractor.3} parent=47 // pred_fallthru
        _
    $region48: #{global_feature_extractor.3} parent=5 // pred_fallthru
      _
    %p2818 = scmp.le.s32.totalorder 2, %s13
    // Predicated region
    $region77: #{global_feature_extractor.3} parent=5 // pred_check
      %p2819 = pneg %p2818
    $region78: #{global_feature_extractor.3} parent=5 // pred_check_branch
      %2821 = sbr.rel (%p2819) target = $region80
    $region79: #{global_feature_extractor.3} parent=5 // pred_region
      %s2822 = ssub.s32 %s13, 2
      // Predicated region
      $region81: #{global_feature_extractor.3} parent=79 // pred_check
        %p2823 = pneg %p240
      $region82: #{global_feature_extractor.3} parent=79 // pred_check_branch
        %2825 = sbr.rel (%p2823) target = $region84
      $region83: #{global_feature_extractor.3} parent=79 // pred_region
        %s2826 = smul.u32 4, %s25
        %p2827 = scmp.lt.s32.totalorder %s24, 1
        %s2828 = scalar_select %p2827, %s24, 1
        %p2829 = scmp.lt.s32.totalorder %s2826, 7
        %s2830 = scalar_select %p2829, %s2826, 7
        %s2831 = smul.addr %s2828, 8
        %s2832 = sadd.s32 %s2830, %s2831
        %s2833 = smul.addr %s2832, 4
        %s2834 = scalar_lea.vmem %s7, %s2833
      $region84: #{global_feature_extractor.3} parent=79 // pred_fallthru
        _
    $region80: #{global_feature_extractor.3} parent=5 // pred_fallthru
      _
  $region6: #{global_feature_extractor.3} parent=0 // loop_footer
    %s17 = sadd.s32 1, %s13
  $region7: #{global_feature_extractor.3} parent=0 // loop_footer_branch
    %12 = sbr.rel target = $region3
  $region8: #{global_feature_extractor.3} parent=0 // loop_exit
    _

</llo_original>
